<compile_context>
chip_gen: v6e
topology: v6e:2x2x1
jax: 0.10.0
libtpu: 0.0.40
codegen_flags: <defaults>
</compile_context>

<pallas_src>
import math

import jax
import jax.numpy as jnp
from jax import lax
from jax.experimental import pallas as pl
from jax.experimental.pallas import tpu as pltpu

_LANE = 128


def _round_up(x, m):
    return -(-x // m) * m


def _step_vmem_bytes(H, W, nb, lc):
    """(8,128)-padded f32 VMEM footprint of one grid step: double-buffered
    input + output blocks plus the single-buffered conv1->conv2 scratch."""
    def slab(rows, sub, lanes):
        return rows * _round_up(sub, 8) * _round_up(lanes, _LANE) * 4
    return 4 * slab(H, W, nb) + slab(H, W, lc)


def _make_kernel(H, W, nb, lc):
    assert nb % lc == 0
    assert W >= 2 and H >= 1
    n_chunks = nb // lc

    def kernel(x_ref, w1_ref, w2_ref, o_ref, y_ref):
        # x_ref : (H, W, nb)  input block, batch on the 128-lane axis
        # w*_ref: (3, 3)      conv weights in SMEM
        # o_ref : (H, W, nb)  output block (lane-dense stores for large N)
        # y_ref : (H, W, lc)  VMEM scratch holding conv1's output per chunk

        # Hoist the 18 weight scalars out of all loops (SMEM -> sregs).
        w1s = [[w1_ref[i, j] for j in range(3)] for i in range(3)]
        w2s = [[w2_ref[i, j] for j in range(3)] for i in range(3)]

        def shifted_taps(row):
            # row: (W, lc).  Column-tap views with zero padding:
            #   taps[dj][j, :] == row[j + dj - 1, :]   (zero outside [0, W)).
            # Two sublane shifts per input row; no lane-axis relayouts.
            zrow = jnp.zeros((1, row.shape[1]), jnp.float32)
            left = jnp.concatenate([zrow, row[:W - 1, :]], axis=0)   # j-1 tap
            right = jnp.concatenate([row[1:, :], zrow], axis=0)      # j+1 tap
            return (left, row, right)

        def conv3x3(w, load_row, emit_row):
            # Rolling 3-row cache: each source row is loaded and column-shifted
            # exactly once; the three H taps are pure outer-dim addressing.
            def taps(r):
                if r < 0 or r >= H:
                    return None          # zero-padding row: skip its taps
                return shifted_taps(load_row(r))

            cache = {-1: None, 0: taps(0)}
            for i in range(H):           # statically unrolled (H is small)
                cache[i + 1] = taps(i + 1)
                acc = None
                for di in range(3):
                    s = cache[i - 1 + di]
                    if s is None:
                        continue
                    for dj in range(3):
                        t = w[di][dj] * s[dj]
                        acc = t if acc is None else acc + t   # first-tap init
                emit_row(i, acc)
                del cache[i - 1]         # bound the live range

        # Process the batch block in 128-lane chunks so the per-row working
        # set stays well under the 64-vreg budget regardless of nb.
        for c in range(n_chunks):
            lanes = slice(c * lc, (c + 1) * lc)

            def load_x(r, lanes=lanes):
                return x_ref[r, :, lanes]

            def store_y(i, v):
                y_ref[i, :, :] = v

            def load_y(r):
                return y_ref[r, :, :]

            def store_o(i, v, lanes=lanes):
                o_ref[i, :, lanes] = v

            conv3x3(w1s, load_x, store_y)   # conv1: x -> y (VMEM scratch)
            conv3x3(w2s, load_y, store_o)   # conv2: y -> out

    return kernel


def basenet_forward(x_nchw, w1, w2, *, vmem_budget_bytes=12 << 20):
    """x_nchw: (N, 1, H, W) float32; w1, w2: (3, 3) float32.

    Returns (N, 1, H, W) float32 matching PyTorch BaseNet.forward.
    """
    N, C, H, W = x_nchw.shape
    assert C == 1

    # Lane-dense layout: batch on the lane axis.  No spatial padding copy in
    # HBM -- padding is handled in-kernel.
    x = jnp.transpose(x_nchw[:, 0].astype(jnp.float32), (1, 2, 0))   # (H, W, N)

    # Batch block size: multiples of 128 lanes for large N, capped by the
    # padded per-step VMEM footprint, <= 4 lane chunks per step, and >= 2 grid
    # steps when N > 128 so both megacore TensorCores get work.
    max_nb = 512
    if N <= _LANE:
        nb = N
    else:
        n_up = _round_up(N, _LANE)
        nb = _LANE
        while (nb + _LANE <= max_nb
               and (nb + _LANE) * 2 <= n_up
               and _step_vmem_bytes(H, W, nb + _LANE, _LANE) <= vmem_budget_bytes):
            nb += _LANE
    lc = min(nb, _LANE)
    g = -(-N // nb)
    Np = g * nb
    if Np != N:
        x = jnp.pad(x, ((0, 0), (0, 0), (0, Np - N)))   # batch tail only

    step_bytes = _step_vmem_bytes(H, W, nb, lc)
    vmem_limit = int(min(32 << 20, max(16 << 20, 2 * step_bytes + (4 << 20))))

    flops = 2 * 9 * 2 * Np * H * W
    bytes_accessed = 2 * 4 * Np * H * W + 2 * 9 * 4

    out = pl.pallas_call(
        _make_kernel(H, W, nb, lc),
        out_shape=jax.ShapeDtypeStruct((H, W, Np), jnp.float32),
        grid=(g,),
        in_specs=[
            pl.BlockSpec((H, W, nb), lambda b: (0, 0, b)),
            pl.BlockSpec(memory_space=pltpu.SMEM),
            pl.BlockSpec(memory_space=pltpu.SMEM),
        ],
        out_specs=pl.BlockSpec((H, W, nb), lambda b: (0, 0, b)),
        scratch_shapes=[pltpu.VMEM((H, W, lc), jnp.float32)],
        compiler_params=pltpu.CompilerParams(
            dimension_semantics=("parallel",),
            vmem_limit_bytes=vmem_limit),
        cost_estimate=pl.CostEstimate(
            flops=flops, transcendentals=0, bytes_accessed=bytes_accessed),
    )(x, w1.astype(jnp.float32), w2.astype(jnp.float32))

    return jnp.transpose(out[:, :, :N], (2, 0, 1))[:, None, :, :]


def _reference_forward(x_nchw, w1, w2):
    """Pure-JAX reference using lax conv (NCHW / OIHW), for verification."""
    dn = lax.conv_dimension_numbers(x_nchw.shape, (1, 1, 3, 3),
                                    ("NCHW", "OIHW", "NCHW"))
    y = lax.conv_general_dilated(x_nchw, w1[None, None], (1, 1),
                                 ((1, 1), (1, 1)), dimension_numbers=dn)
    z = lax.conv_general_dilated(y, w2[None, None], (1, 1),
                                 ((1, 1), (1, 1)), dimension_numbers=dn)
    return z


if __name__ == "__main__":
    key = jax.random.PRNGKey(0)
    k_x, k_w1, k_w2, k_x2 = jax.random.split(key, 4)

    N, C, H, W = 2, 1, 16, 16
    x = jax.random.normal(k_x, (N, C, H, W), dtype=jnp.float32)

    # kaiming_uniform_ on a (1,1,3,3) conv weight: fan_in = 9, gain = sqrt(2),
    # bound = gain * sqrt(3 / fan_in)
    bound = math.sqrt(2.0) * math.sqrt(3.0 / 9.0)
    w1 = jax.random.uniform(k_w1, (3, 3), jnp.float32, -bound, bound)
    w2 = jax.random.uniform(k_w2, (3, 3), jnp.float32, -bound, bound)

    forward = jax.jit(basenet_forward)

    out = jax.block_until_ready(forward(x, w1, w2))
    ref = _reference_forward(x, w1, w2)
    assert out.shape == (N, 1, H, W)
    assert jnp.allclose(out, ref, atol=1e-4, rtol=1e-4)

    # Larger batch: exercises the lane-dense (batch-on-lanes) regime, the
    # multi-step grid, and the batch-tail padding path.
    N2 = 300
    x2 = jax.random.normal(k_x2, (N2, C, H, W), dtype=jnp.float32)
    out2 = jax.block_until_ready(forward(x2, w1, w2))
    ref2 = _reference_forward(x2, w1, w2)
    assert out2.shape == (N2, 1, H, W)
    assert jnp.allclose(out2, ref2, atol=1e-4, rtol=1e-4)

    print("KERNEL_OK")
</pallas_src>

<mosaic_0001>
module attributes {stable_mosaic.version = 11 : i64} {
  func.func @kernel(%arg0: i32, %arg1: memref<16x16x2xf32, #tpu.memory_space<vmem>>, %arg2: memref<3x3xf32, #tpu.memory_space<smem>>, %arg3: memref<3x3xf32, #tpu.memory_space<smem>>, %arg4: memref<16x16x2xf32, #tpu.memory_space<vmem>>, %arg5: memref<16x16x2xf32, #tpu.memory_space<vmem>>) attributes {dimension_semantics = [#tpu.dimension_semantics<parallel>], iteration_bounds = array<i64: 1>, scalar_prefetch = 0 : i64, scratch_operands = 1 : i64, tpu.core_type = #tpu.core_type<tc>, window_params = [{transform_indices = @transform_0, window_bounds = array<i64: 16, 16, 2>}, {transform_indices = @transform_1, window_bounds = array<i64: 3, 3>}, {transform_indices = @transform_2, window_bounds = array<i64: 3, 3>}, {transform_indices = @transform_3, window_bounds = array<i64: 16, 16, 2>}]} {
    %c0 = arith.constant 0 : index
    %c0_0 = arith.constant 0 : index
    %0 = memref.load %arg2[%c0, %c0_0] : memref<3x3xf32, #tpu.memory_space<smem>>
    %c0_1 = arith.constant 0 : index
    %c1 = arith.constant 1 : index
    %1 = memref.load %arg2[%c0_1, %c1] : memref<3x3xf32, #tpu.memory_space<smem>>
    %c0_2 = arith.constant 0 : index
    %c2 = arith.constant 2 : index
    %2 = memref.load %arg2[%c0_2, %c2] : memref<3x3xf32, #tpu.memory_space<smem>>
    %c1_3 = arith.constant 1 : index
    %c0_4 = arith.constant 0 : index
    %3 = memref.load %arg2[%c1_3, %c0_4] : memref<3x3xf32, #tpu.memory_space<smem>>
    %c1_5 = arith.constant 1 : index
    %c1_6 = arith.constant 1 : index
    %4 = memref.load %arg2[%c1_5, %c1_6] : memref<3x3xf32, #tpu.memory_space<smem>>
    %c1_7 = arith.constant 1 : index
    %c2_8 = arith.constant 2 : index
    %5 = memref.load %arg2[%c1_7, %c2_8] : memref<3x3xf32, #tpu.memory_space<smem>>
    %c2_9 = arith.constant 2 : index
    %c0_10 = arith.constant 0 : index
    %6 = memref.load %arg2[%c2_9, %c0_10] : memref<3x3xf32, #tpu.memory_space<smem>>
    %c2_11 = arith.constant 2 : index
    %c1_12 = arith.constant 1 : index
    %7 = memref.load %arg2[%c2_11, %c1_12] : memref<3x3xf32, #tpu.memory_space<smem>>
    %c2_13 = arith.constant 2 : index
    %c2_14 = arith.constant 2 : index
    %8 = memref.load %arg2[%c2_13, %c2_14] : memref<3x3xf32, #tpu.memory_space<smem>>
    %c0_15 = arith.constant 0 : index
    %c0_16 = arith.constant 0 : index
    %9 = memref.load %arg3[%c0_15, %c0_16] : memref<3x3xf32, #tpu.memory_space<smem>>
    %c0_17 = arith.constant 0 : index
    %c1_18 = arith.constant 1 : index
    %10 = memref.load %arg3[%c0_17, %c1_18] : memref<3x3xf32, #tpu.memory_space<smem>>
    %c0_19 = arith.constant 0 : index
    %c2_20 = arith.constant 2 : index
    %11 = memref.load %arg3[%c0_19, %c2_20] : memref<3x3xf32, #tpu.memory_space<smem>>
    %c1_21 = arith.constant 1 : index
    %c0_22 = arith.constant 0 : index
    %12 = memref.load %arg3[%c1_21, %c0_22] : memref<3x3xf32, #tpu.memory_space<smem>>
    %c1_23 = arith.constant 1 : index
    %c1_24 = arith.constant 1 : index
    %13 = memref.load %arg3[%c1_23, %c1_24] : memref<3x3xf32, #tpu.memory_space<smem>>
    %c1_25 = arith.constant 1 : index
    %c2_26 = arith.constant 2 : index
    %14 = memref.load %arg3[%c1_25, %c2_26] : memref<3x3xf32, #tpu.memory_space<smem>>
    %c2_27 = arith.constant 2 : index
    %c0_28 = arith.constant 0 : index
    %15 = memref.load %arg3[%c2_27, %c0_28] : memref<3x3xf32, #tpu.memory_space<smem>>
    %c2_29 = arith.constant 2 : index
    %c1_30 = arith.constant 1 : index
    %16 = memref.load %arg3[%c2_29, %c1_30] : memref<3x3xf32, #tpu.memory_space<smem>>
    %c2_31 = arith.constant 2 : index
    %c2_32 = arith.constant 2 : index
    %17 = memref.load %arg3[%c2_31, %c2_32] : memref<3x3xf32, #tpu.memory_space<smem>>
    %c0_33 = arith.constant 0 : index
    %c0_34 = arith.constant 0 : index
    %c0_35 = arith.constant 0 : index
    %18 = vector.load %arg1[%c0_33, %c0_34, %c0_35] : memref<16x16x2xf32, #tpu.memory_space<vmem>>, vector<1x16x2xf32>
    %19 = vector.shape_cast %18 : vector<1x16x2xf32> to vector<16x2xf32>
    %cst = arith.constant 0.000000e+00 : f32
    %20 = vector.broadcast %cst : f32 to vector<1x2xf32>
    %21 = vector.extract_strided_slice %19 {offsets = [0, 0], sizes = [15, 2], strides = [1, 1]} : vector<16x2xf32> to vector<15x2xf32>
    %22 = tpu.concatenate %20, %21 in 0 : vector<1x2xf32>, vector<15x2xf32> -> vector<16x2xf32>
    %23 = vector.extract_strided_slice %19 {offsets = [1, 0], sizes = [15, 2], strides = [1, 1]} : vector<16x2xf32> to vector<15x2xf32>
    %24 = tpu.concatenate %23, %20 in 0 : vector<15x2xf32>, vector<1x2xf32> -> vector<16x2xf32>
    %c1_36 = arith.constant 1 : index
    %c0_37 = arith.constant 0 : index
    %c0_38 = arith.constant 0 : index
    %25 = vector.load %arg1[%c1_36, %c0_37, %c0_38] : memref<16x16x2xf32, #tpu.memory_space<vmem>>, vector<1x16x2xf32>
    %26 = vector.shape_cast %25 : vector<1x16x2xf32> to vector<16x2xf32>
    %cst_39 = arith.constant 0.000000e+00 : f32
    %27 = vector.broadcast %cst_39 : f32 to vector<1x2xf32>
    %28 = vector.extract_strided_slice %26 {offsets = [0, 0], sizes = [15, 2], strides = [1, 1]} : vector<16x2xf32> to vector<15x2xf32>
    %29 = tpu.concatenate %27, %28 in 0 : vector<1x2xf32>, vector<15x2xf32> -> vector<16x2xf32>
    %30 = vector.extract_strided_slice %26 {offsets = [1, 0], sizes = [15, 2], strides = [1, 1]} : vector<16x2xf32> to vector<15x2xf32>
    %31 = tpu.concatenate %30, %27 in 0 : vector<15x2xf32>, vector<1x2xf32> -> vector<16x2xf32>
    %32 = vector.broadcast %3 : f32 to vector<16x2xf32>
    %33 = arith.mulf %32, %22 : vector<16x2xf32>
    %34 = vector.broadcast %4 : f32 to vector<16x2xf32>
    %35 = arith.mulf %34, %19 : vector<16x2xf32>
    %36 = arith.addf %33, %35 : vector<16x2xf32>
    %37 = vector.broadcast %5 : f32 to vector<16x2xf32>
    %38 = arith.mulf %37, %24 : vector<16x2xf32>
    %39 = arith.addf %36, %38 : vector<16x2xf32>
    %40 = vector.broadcast %6 : f32 to vector<16x2xf32>
    %41 = arith.mulf %40, %29 : vector<16x2xf32>
    %42 = arith.addf %39, %41 : vector<16x2xf32>
    %43 = vector.broadcast %7 : f32 to vector<16x2xf32>
    %44 = arith.mulf %43, %26 : vector<16x2xf32>
    %45 = arith.addf %42, %44 : vector<16x2xf32>
    %46 = vector.broadcast %8 : f32 to vector<16x2xf32>
    %47 = arith.mulf %46, %31 : vector<16x2xf32>
    %48 = arith.addf %45, %47 : vector<16x2xf32>
    %c0_40 = arith.constant 0 : index
    %c0_41 = arith.constant 0 : index
    %c0_42 = arith.constant 0 : index
    %49 = vector.load %arg5[%c0_40, %c0_41, %c0_42] : memref<16x16x2xf32, #tpu.memory_space<vmem>>, vector<1x16x2xf32>
    %50 = vector.shape_cast %49 : vector<1x16x2xf32> to vector<16x2xf32>
    %51 = vector.shape_cast %48 : vector<16x2xf32> to vector<1x16x2xf32>
    tpu.vector_store %arg5[%c0_40, %c0_41, %c0_42], %51 {strides = array<i32>} : memref<16x16x2xf32, #tpu.memory_space<vmem>>, vector<1x16x2xf32>,
    %c2_43 = arith.constant 2 : index
    %c0_44 = arith.constant 0 : index
    %c0_45 = arith.constant 0 : index
    %52 = vector.load %arg1[%c2_43, %c0_44, %c0_45] : memref<16x16x2xf32, #tpu.memory_space<vmem>>, vector<1x16x2xf32>
    %53 = vector.shape_cast %52 : vector<1x16x2xf32> to vector<16x2xf32>
    %cst_46 = arith.constant 0.000000e+00 : f32
    %54 = vector.broadcast %cst_46 : f32 to vector<1x2xf32>
    %55 = vector.extract_strided_slice %53 {offsets = [0, 0], sizes = [15, 2], strides = [1, 1]} : vector<16x2xf32> to vector<15x2xf32>
    %56 = tpu.concatenate %54, %55 in 0 : vector<1x2xf32>, vector<15x2xf32> -> vector<16x2xf32>
    %57 = vector.extract_strided_slice %53 {offsets = [1, 0], sizes = [15, 2], strides = [1, 1]} : vector<16x2xf32> to vector<15x2xf32>
    %58 = tpu.concatenate %57, %54 in 0 : vector<15x2xf32>, vector<1x2xf32> -> vector<16x2xf32>
    %59 = vector.broadcast %0 : f32 to vector<16x2xf32>
    %60 = arith.mulf %59, %22 : vector<16x2xf32>
    %61 = vector.broadcast %1 : f32 to vector<16x2xf32>
    %62 = arith.mulf %61, %19 : vector<16x2xf32>
    %63 = arith.addf %60, %62 : vector<16x2xf32>
    %64 = vector.broadcast %2 : f32 to vector<16x2xf32>
    %65 = arith.mulf %64, %24 : vector<16x2xf32>
    %66 = arith.addf %63, %65 : vector<16x2xf32>
    %67 = vector.broadcast %3 : f32 to vector<16x2xf32>
    %68 = arith.mulf %67, %29 : vector<16x2xf32>
    %69 = arith.addf %66, %68 : vector<16x2xf32>
    %70 = vector.broadcast %4 : f32 to vector<16x2xf32>
    %71 = arith.mulf %70, %26 : vector<16x2xf32>
    %72 = arith.addf %69, %71 : vector<16x2xf32>
    %73 = vector.broadcast %5 : f32 to vector<16x2xf32>
    %74 = arith.mulf %73, %31 : vector<16x2xf32>
    %75 = arith.addf %72, %74 : vector<16x2xf32>
    %76 = vector.broadcast %6 : f32 to vector<16x2xf32>
    %77 = arith.mulf %76, %56 : vector<16x2xf32>
    %78 = arith.addf %75, %77 : vector<16x2xf32>
    %79 = vector.broadcast %7 : f32 to vector<16x2xf32>
    %80 = arith.mulf %79, %53 : vector<16x2xf32>
    %81 = arith.addf %78, %80 : vector<16x2xf32>
    %82 = vector.broadcast %8 : f32 to vector<16x2xf32>
    %83 = arith.mulf %82, %58 : vector<16x2xf32>
    %84 = arith.addf %81, %83 : vector<16x2xf32>
    %c1_47 = arith.constant 1 : index
    %c0_48 = arith.constant 0 : index
    %c0_49 = arith.constant 0 : index
    %85 = vector.load %arg5[%c1_47, %c0_48, %c0_49] : memref<16x16x2xf32, #tpu.memory_space<vmem>>, vector<1x16x2xf32>
    %86 = vector.shape_cast %85 : vector<1x16x2xf32> to vector<16x2xf32>
    %87 = vector.shape_cast %84 : vector<16x2xf32> to vector<1x16x2xf32>
    tpu.vector_store %arg5[%c1_47, %c0_48, %c0_49], %87 {strides = array<i32>} : memref<16x16x2xf32, #tpu.memory_space<vmem>>, vector<1x16x2xf32>,
    %c3 = arith.constant 3 : index
    %c0_50 = arith.constant 0 : index
    %c0_51 = arith.constant 0 : index
    %88 = vector.load %arg1[%c3, %c0_50, %c0_51] : memref<16x16x2xf32, #tpu.memory_space<vmem>>, vector<1x16x2xf32>
    %89 = vector.shape_cast %88 : vector<1x16x2xf32> to vector<16x2xf32>
    %cst_52 = arith.constant 0.000000e+00 : f32
    %90 = vector.broadcast %cst_52 : f32 to vector<1x2xf32>
    %91 = vector.extract_strided_slice %89 {offsets = [0, 0], sizes = [15, 2], strides = [1, 1]} : vector<16x2xf32> to vector<15x2xf32>
    %92 = tpu.concatenate %90, %91 in 0 : vector<1x2xf32>, vector<15x2xf32> -> vector<16x2xf32>
    %93 = vector.extract_strided_slice %89 {offsets = [1, 0], sizes = [15, 2], strides = [1, 1]} : vector<16x2xf32> to vector<15x2xf32>
    %94 = tpu.concatenate %93, %90 in 0 : vector<15x2xf32>, vector<1x2xf32> -> vector<16x2xf32>
    %95 = vector.broadcast %0 : f32 to vector<16x2xf32>
    %96 = arith.mulf %95, %29 : vector<16x2xf32>
    %97 = vector.broadcast %1 : f32 to vector<16x2xf32>
    %98 = arith.mulf %97, %26 : vector<16x2xf32>
    %99 = arith.addf %96, %98 : vector<16x2xf32>
    %100 = vector.broadcast %2 : f32 to vector<16x2xf32>
    %101 = arith.mulf %100, %31 : vector<16x2xf32>
    %102 = arith.addf %99, %101 : vector<16x2xf32>
    %103 = vector.broadcast %3 : f32 to vector<16x2xf32>
    %104 = arith.mulf %103, %56 : vector<16x2xf32>
    %105 = arith.addf %102, %104 : vector<16x2xf32>
    %106 = vector.broadcast %4 : f32 to vector<16x2xf32>
    %107 = arith.mulf %106, %53 : vector<16x2xf32>
    %108 = arith.addf %105, %107 : vector<16x2xf32>
    %109 = vector.broadcast %5 : f32 to vector<16x2xf32>
    %110 = arith.mulf %109, %58 : vector<16x2xf32>
    %111 = arith.addf %108, %110 : vector<16x2xf32>
    %112 = vector.broadcast %6 : f32 to vector<16x2xf32>
    %113 = arith.mulf %112, %92 : vector<16x2xf32>
    %114 = arith.addf %111, %113 : vector<16x2xf32>
    %115 = vector.broadcast %7 : f32 to vector<16x2xf32>
    %116 = arith.mulf %115, %89 : vector<16x2xf32>
    %117 = arith.addf %114, %116 : vector<16x2xf32>
    %118 = vector.broadcast %8 : f32 to vector<16x2xf32>
    %119 = arith.mulf %118, %94 : vector<16x2xf32>
    %120 = arith.addf %117, %119 : vector<16x2xf32>
    %c2_53 = arith.constant 2 : index
    %c0_54 = arith.constant 0 : index
    %c0_55 = arith.constant 0 : index
    %121 = vector.load %arg5[%c2_53, %c0_54, %c0_55] : memref<16x16x2xf32, #tpu.memory_space<vmem>>, vector<1x16x2xf32>
    %122 = vector.shape_cast %121 : vector<1x16x2xf32> to vector<16x2xf32>
    %123 = vector.shape_cast %120 : vector<16x2xf32> to vector<1x16x2xf32>
    tpu.vector_store %arg5[%c2_53, %c0_54, %c0_55], %123 {strides = array<i32>} : memref<16x16x2xf32, #tpu.memory_space<vmem>>, vector<1x16x2xf32>,
    %c4 = arith.constant 4 : index
    %c0_56 = arith.constant 0 : index
    %c0_57 = arith.constant 0 : index
    %124 = vector.load %arg1[%c4, %c0_56, %c0_57] : memref<16x16x2xf32, #tpu.memory_space<vmem>>, vector<1x16x2xf32>
    %125 = vector.shape_cast %124 : vector<1x16x2xf32> to vector<16x2xf32>
    %cst_58 = arith.constant 0.000000e+00 : f32
    %126 = vector.broadcast %cst_58 : f32 to vector<1x2xf32>
    %127 = vector.extract_strided_slice %125 {offsets = [0, 0], sizes = [15, 2], strides = [1, 1]} : vector<16x2xf32> to vector<15x2xf32>
    %128 = tpu.concatenate %126, %127 in 0 : vector<1x2xf32>, vector<15x2xf32> -> vector<16x2xf32>
    %129 = vector.extract_strided_slice %125 {offsets = [1, 0], sizes = [15, 2], strides = [1, 1]} : vector<16x2xf32> to vector<15x2xf32>
    %130 = tpu.concatenate %129, %126 in 0 : vector<15x2xf32>, vector<1x2xf32> -> vector<16x2xf32>
    %131 = vector.broadcast %0 : f32 to vector<16x2xf32>
    %132 = arith.mulf %131, %56 : vector<16x2xf32>
    %133 = vector.broadcast %1 : f32 to vector<16x2xf32>
    %134 = arith.mulf %133, %53 : vector<16x2xf32>
    %135 = arith.addf %132, %134 : vector<16x2xf32>
    %136 = vector.broadcast %2 : f32 to vector<16x2xf32>
    %137 = arith.mulf %136, %58 : vector<16x2xf32>
    %138 = arith.addf %135, %137 : vector<16x2xf32>
    %139 = vector.broadcast %3 : f32 to vector<16x2xf32>
    %140 = arith.mulf %139, %92 : vector<16x2xf32>
    %141 = arith.addf %138, %140 : vector<16x2xf32>
    %142 = vector.broadcast %4 : f32 to vector<16x2xf32>
    %143 = arith.mulf %142, %89 : vector<16x2xf32>
    %144 = arith.addf %141, %143 : vector<16x2xf32>
    %145 = vector.broadcast %5 : f32 to vector<16x2xf32>
    %146 = arith.mulf %145, %94 : vector<16x2xf32>
    %147 = arith.addf %144, %146 : vector<16x2xf32>
    %148 = vector.broadcast %6 : f32 to vector<16x2xf32>
    %149 = arith.mulf %148, %128 : vector<16x2xf32>
    %150 = arith.addf %147, %149 : vector<16x2xf32>
    %151 = vector.broadcast %7 : f32 to vector<16x2xf32>
    %152 = arith.mulf %151, %125 : vector<16x2xf32>
    %153 = arith.addf %150, %152 : vector<16x2xf32>
    %154 = vector.broadcast %8 : f32 to vector<16x2xf32>
    %155 = arith.mulf %154, %130 : vector<16x2xf32>
    %156 = arith.addf %153, %155 : vector<16x2xf32>
    %c3_59 = arith.constant 3 : index
    %c0_60 = arith.constant 0 : index
    %c0_61 = arith.constant 0 : index
    %157 = vector.load %arg5[%c3_59, %c0_60, %c0_61] : memref<16x16x2xf32, #tpu.memory_space<vmem>>, vector<1x16x2xf32>
    %158 = vector.shape_cast %157 : vector<1x16x2xf32> to vector<16x2xf32>
    %159 = vector.shape_cast %156 : vector<16x2xf32> to vector<1x16x2xf32>
    tpu.vector_store %arg5[%c3_59, %c0_60, %c0_61], %159 {strides = array<i32>} : memref<16x16x2xf32, #tpu.memory_space<vmem>>, vector<1x16x2xf32>,
    %c5 = arith.constant 5 : index
    %c0_62 = arith.constant 0 : index
    %c0_63 = arith.constant 0 : index
    %160 = vector.load %arg1[%c5, %c0_62, %c0_63] : memref<16x16x2xf32, #tpu.memory_space<vmem>>, vector<1x16x2xf32>
    %161 = vector.shape_cast %160 : vector<1x16x2xf32> to vector<16x2xf32>
    %cst_64 = arith.constant 0.000000e+00 : f32
    %162 = vector.broadcast %cst_64 : f32 to vector<1x2xf32>
    %163 = vector.extract_strided_slice %161 {offsets = [0, 0], sizes = [15, 2], strides = [1, 1]} : vector<16x2xf32> to vector<15x2xf32>
    %164 = tpu.concatenate %162, %163 in 0 : vector<1x2xf32>, vector<15x2xf32> -> vector<16x2xf32>
    %165 = vector.extract_strided_slice %161 {offsets = [1, 0], sizes = [15, 2], strides = [1, 1]} : vector<16x2xf32> to vector<15x2xf32>
    %166 = tpu.concatenate %165, %162 in 0 : vector<15x2xf32>, vector<1x2xf32> -> vector<16x2xf32>
    %167 = vector.broadcast %0 : f32 to vector<16x2xf32>
    %168 = arith.mulf %167, %92 : vector<16x2xf32>
    %169 = vector.broadcast %1 : f32 to vector<16x2xf32>
    %170 = arith.mulf %169, %89 : vector<16x2xf32>
    %171 = arith.addf %168, %170 : vector<16x2xf32>
    %172 = vector.broadcast %2 : f32 to vector<16x2xf32>
    %173 = arith.mulf %172, %94 : vector<16x2xf32>
    %174 = arith.addf %171, %173 : vector<16x2xf32>
    %175 = vector.broadcast %3 : f32 to vector<16x2xf32>
    %176 = arith.mulf %175, %128 : vector<16x2xf32>
    %177 = arith.addf %174, %176 : vector<16x2xf32>
    %178 = vector.broadcast %4 : f32 to vector<16x2xf32>
    %179 = arith.mulf %178, %125 : vector<16x2xf32>
    %180 = arith.addf %177, %179 : vector<16x2xf32>
    %181 = vector.broadcast %5 : f32 to vector<16x2xf32>
    %182 = arith.mulf %181, %130 : vector<16x2xf32>
    %183 = arith.addf %180, %182 : vector<16x2xf32>
    %184 = vector.broadcast %6 : f32 to vector<16x2xf32>
    %185 = arith.mulf %184, %164 : vector<16x2xf32>
    %186 = arith.addf %183, %185 : vector<16x2xf32>
    %187 = vector.broadcast %7 : f32 to vector<16x2xf32>
    %188 = arith.mulf %187, %161 : vector<16x2xf32>
    %189 = arith.addf %186, %188 : vector<16x2xf32>
    %190 = vector.broadcast %8 : f32 to vector<16x2xf32>
    %191 = arith.mulf %190, %166 : vector<16x2xf32>
    %192 = arith.addf %189, %191 : vector<16x2xf32>
    %c4_65 = arith.constant 4 : index
    %c0_66 = arith.constant 0 : index
    %c0_67 = arith.constant 0 : index
    %193 = vector.load %arg5[%c4_65, %c0_66, %c0_67] : memref<16x16x2xf32, #tpu.memory_space<vmem>>, vector<1x16x2xf32>
    %194 = vector.shape_cast %193 : vector<1x16x2xf32> to vector<16x2xf32>
    %195 = vector.shape_cast %192 : vector<16x2xf32> to vector<1x16x2xf32>
    tpu.vector_store %arg5[%c4_65, %c0_66, %c0_67], %195 {strides = array<i32>} : memref<16x16x2xf32, #tpu.memory_space<vmem>>, vector<1x16x2xf32>,
    %c6 = arith.constant 6 : index
    %c0_68 = arith.constant 0 : index
    %c0_69 = arith.constant 0 : index
    %196 = vector.load %arg1[%c6, %c0_68, %c0_69] : memref<16x16x2xf32, #tpu.memory_space<vmem>>, vector<1x16x2xf32>
    %197 = vector.shape_cast %196 : vector<1x16x2xf32> to vector<16x2xf32>
    %cst_70 = arith.constant 0.000000e+00 : f32
    %198 = vector.broadcast %cst_70 : f32 to vector<1x2xf32>
    %199 = vector.extract_strided_slice %197 {offsets = [0, 0], sizes = [15, 2], strides = [1, 1]} : vector<16x2xf32> to vector<15x2xf32>
    %200 = tpu.concatenate %198, %199 in 0 : vector<1x2xf32>, vector<15x2xf32> -> vector<16x2xf32>
    %201 = vector.extract_strided_slice %197 {offsets = [1, 0], sizes = [15, 2], strides = [1, 1]} : vector<16x2xf32> to vector<15x2xf32>
    %202 = tpu.concatenate %201, %198 in 0 : vector<15x2xf32>, vector<1x2xf32> -> vector<16x2xf32>
    %203 = vector.broadcast %0 : f32 to vector<16x2xf32>
    %204 = arith.mulf %203, %128 : vector<16x2xf32>
    %205 = vector.broadcast %1 : f32 to vector<16x2xf32>
    %206 = arith.mulf %205, %125 : vector<16x2xf32>
    %207 = arith.addf %204, %206 : vector<16x2xf32>
    %208 = vector.broadcast %2 : f32 to vector<16x2xf32>
    %209 = arith.mulf %208, %130 : vector<16x2xf32>
    %210 = arith.addf %207, %209 : vector<16x2xf32>
    %211 = vector.broadcast %3 : f32 to vector<16x2xf32>
    %212 = arith.mulf %211, %164 : vector<16x2xf32>
    %213 = arith.addf %210, %212 : vector<16x2xf32>
    %214 = vector.broadcast %4 : f32 to vector<16x2xf32>
    %215 = arith.mulf %214, %161 : vector<16x2xf32>
    %216 = arith.addf %213, %215 : vector<16x2xf32>
    %217 = vector.broadcast %5 : f32 to vector<16x2xf32>
    %218 = arith.mulf %217, %166 : vector<16x2xf32>
    %219 = arith.addf %216, %218 : vector<16x2xf32>
    %220 = vector.broadcast %6 : f32 to vector<16x2xf32>
    %221 = arith.mulf %220, %200 : vector<16x2xf32>
    %222 = arith.addf %219, %221 : vector<16x2xf32>
    %223 = vector.broadcast %7 : f32 to vector<16x2xf32>
    %224 = arith.mulf %223, %197 : vector<16x2xf32>
    %225 = arith.addf %222, %224 : vector<16x2xf32>
    %226 = vector.broadcast %8 : f32 to vector<16x2xf32>
    %227 = arith.mulf %226, %202 : vector<16x2xf32>
    %228 = arith.addf %225, %227 : vector<16x2xf32>
    %c5_71 = arith.constant 5 : index
    %c0_72 = arith.constant 0 : index
    %c0_73 = arith.constant 0 : index
    %229 = vector.load %arg5[%c5_71, %c0_72, %c0_73] : memref<16x16x2xf32, #tpu.memory_space<vmem>>, vector<1x16x2xf32>
    %230 = vector.shape_cast %229 : vector<1x16x2xf32> to vector<16x2xf32>
    %231 = vector.shape_cast %228 : vector<16x2xf32> to vector<1x16x2xf32>
    tpu.vector_store %arg5[%c5_71, %c0_72, %c0_73], %231 {strides = array<i32>} : memref<16x16x2xf32, #tpu.memory_space<vmem>>, vector<1x16x2xf32>,
    %c7 = arith.constant 7 : index
    %c0_74 = arith.constant 0 : index
    %c0_75 = arith.constant 0 : index
    %232 = vector.load %arg1[%c7, %c0_74, %c0_75] : memref<16x16x2xf32, #tpu.memory_space<vmem>>, vector<1x16x2xf32>
    %233 = vector.shape_cast %232 : vector<1x16x2xf32> to vector<16x2xf32>
    %cst_76 = arith.constant 0.000000e+00 : f32
    %234 = vector.broadcast %cst_76 : f32 to vector<1x2xf32>
    %235 = vector.extract_strided_slice %233 {offsets = [0, 0], sizes = [15, 2], strides = [1, 1]} : vector<16x2xf32> to vector<15x2xf32>
    %236 = tpu.concatenate %234, %235 in 0 : vector<1x2xf32>, vector<15x2xf32> -> vector<16x2xf32>
    %237 = vector.extract_strided_slice %233 {offsets = [1, 0], sizes = [15, 2], strides = [1, 1]} : vector<16x2xf32> to vector<15x2xf32>
    %238 = tpu.concatenate %237, %234 in 0 : vector<15x2xf32>, vector<1x2xf32> -> vector<16x2xf32>
    %239 = vector.broadcast %0 : f32 to vector<16x2xf32>
    %240 = arith.mulf %239, %164 : vector<16x2xf32>
    %241 = vector.broadcast %1 : f32 to vector<16x2xf32>
    %242 = arith.mulf %241, %161 : vector<16x2xf32>
    %243 = arith.addf %240, %242 : vector<16x2xf32>
    %244 = vector.broadcast %2 : f32 to vector<16x2xf32>
    %245 = arith.mulf %244, %166 : vector<16x2xf32>
    %246 = arith.addf %243, %245 : vector<16x2xf32>
    %247 = vector.broadcast %3 : f32 to vector<16x2xf32>
    %248 = arith.mulf %247, %200 : vector<16x2xf32>
    %249 = arith.addf %246, %248 : vector<16x2xf32>
    %250 = vector.broadcast %4 : f32 to vector<16x2xf32>
    %251 = arith.mulf %250, %197 : vector<16x2xf32>
    %252 = arith.addf %249, %251 : vector<16x2xf32>
    %253 = vector.broadcast %5 : f32 to vector<16x2xf32>
    %254 = arith.mulf %253, %202 : vector<16x2xf32>
    %255 = arith.addf %252, %254 : vector<16x2xf32>
    %256 = vector.broadcast %6 : f32 to vector<16x2xf32>
    %257 = arith.mulf %256, %236 : vector<16x2xf32>
    %258 = arith.addf %255, %257 : vector<16x2xf32>
    %259 = vector.broadcast %7 : f32 to vector<16x2xf32>
    %260 = arith.mulf %259, %233 : vector<16x2xf32>
    %261 = arith.addf %258, %260 : vector<16x2xf32>
    %262 = vector.broadcast %8 : f32 to vector<16x2xf32>
    %263 = arith.mulf %262, %238 : vector<16x2xf32>
    %264 = arith.addf %261, %263 : vector<16x2xf32>
    %c6_77 = arith.constant 6 : index
    %c0_78 = arith.constant 0 : index
    %c0_79 = arith.constant 0 : index
    %265 = vector.load %arg5[%c6_77, %c0_78, %c0_79] : memref<16x16x2xf32, #tpu.memory_space<vmem>>, vector<1x16x2xf32>
    %266 = vector.shape_cast %265 : vector<1x16x2xf32> to vector<16x2xf32>
    %267 = vector.shape_cast %264 : vector<16x2xf32> to vector<1x16x2xf32>
    tpu.vector_store %arg5[%c6_77, %c0_78, %c0_79], %267 {strides = array<i32>} : memref<16x16x2xf32, #tpu.memory_space<vmem>>, vector<1x16x2xf32>,
    %c8 = arith.constant 8 : index
    %c0_80 = arith.constant 0 : index
    %c0_81 = arith.constant 0 : index
    %268 = vector.load %arg1[%c8, %c0_80, %c0_81] : memref<16x16x2xf32, #tpu.memory_space<vmem>>, vector<1x16x2xf32>
    %269 = vector.shape_cast %268 : vector<1x16x2xf32> to vector<16x2xf32>
    %cst_82 = arith.constant 0.000000e+00 : f32
    %270 = vector.broadcast %cst_82 : f32 to vector<1x2xf32>
    %271 = vector.extract_strided_slice %269 {offsets = [0, 0], sizes = [15, 2], strides = [1, 1]} : vector<16x2xf32> to vector<15x2xf32>
    %272 = tpu.concatenate %270, %271 in 0 : vector<1x2xf32>, vector<15x2xf32> -> vector<16x2xf32>
    %273 = vector.extract_strided_slice %269 {offsets = [1, 0], sizes = [15, 2], strides = [1, 1]} : vector<16x2xf32> to vector<15x2xf32>
    %274 = tpu.concatenate %273, %270 in 0 : vector<15x2xf32>, vector<1x2xf32> -> vector<16x2xf32>
    %275 = vector.broadcast %0 : f32 to vector<16x2xf32>
    %276 = arith.mulf %275, %200 : vector<16x2xf32>
    %277 = vector.broadcast %1 : f32 to vector<16x2xf32>
    %278 = arith.mulf %277, %197 : vector<16x2xf32>
    %279 = arith.addf %276, %278 : vector<16x2xf32>
    %280 = vector.broadcast %2 : f32 to vector<16x2xf32>
    %281 = arith.mulf %280, %202 : vector<16x2xf32>
    %282 = arith.addf %279, %281 : vector<16x2xf32>
    %283 = vector.broadcast %3 : f32 to vector<16x2xf32>
    %284 = arith.mulf %283, %236 : vector<16x2xf32>
    %285 = arith.addf %282, %284 : vector<16x2xf32>
    %286 = vector.broadcast %4 : f32 to vector<16x2xf32>
    %287 = arith.mulf %286, %233 : vector<16x2xf32>
    %288 = arith.addf %285, %287 : vector<16x2xf32>
    %289 = vector.broadcast %5 : f32 to vector<16x2xf32>
    %290 = arith.mulf %289, %238 : vector<16x2xf32>
    %291 = arith.addf %288, %290 : vector<16x2xf32>
    %292 = vector.broadcast %6 : f32 to vector<16x2xf32>
    %293 = arith.mulf %292, %272 : vector<16x2xf32>
    %294 = arith.addf %291, %293 : vector<16x2xf32>
    %295 = vector.broadcast %7 : f32 to vector<16x2xf32>
    %296 = arith.mulf %295, %269 : vector<16x2xf32>
    %297 = arith.addf %294, %296 : vector<16x2xf32>
    %298 = vector.broadcast %8 : f32 to vector<16x2xf32>
    %299 = arith.mulf %298, %274 : vector<16x2xf32>
    %300 = arith.addf %297, %299 : vector<16x2xf32>
    %c7_83 = arith.constant 7 : index
    %c0_84 = arith.constant 0 : index
    %c0_85 = arith.constant 0 : index
    %301 = vector.load %arg5[%c7_83, %c0_84, %c0_85] : memref<16x16x2xf32, #tpu.memory_space<vmem>>, vector<1x16x2xf32>
    %302 = vector.shape_cast %301 : vector<1x16x2xf32> to vector<16x2xf32>
    %303 = vector.shape_cast %300 : vector<16x2xf32> to vector<1x16x2xf32>
    tpu.vector_store %arg5[%c7_83, %c0_84, %c0_85], %303 {strides = array<i32>} : memref<16x16x2xf32, #tpu.memory_space<vmem>>, vector<1x16x2xf32>,
    %c9 = arith.constant 9 : index
    %c0_86 = arith.constant 0 : index
    %c0_87 = arith.constant 0 : index
    %304 = vector.load %arg1[%c9, %c0_86, %c0_87] : memref<16x16x2xf32, #tpu.memory_space<vmem>>, vector<1x16x2xf32>
    %305 = vector.shape_cast %304 : vector<1x16x2xf32> to vector<16x2xf32>
    %cst_88 = arith.constant 0.000000e+00 : f32
    %306 = vector.broadcast %cst_88 : f32 to vector<1x2xf32>
    %307 = vector.extract_strided_slice %305 {offsets = [0, 0], sizes = [15, 2], strides = [1, 1]} : vector<16x2xf32> to vector<15x2xf32>
    %308 = tpu.concatenate %306, %307 in 0 : vector<1x2xf32>, vector<15x2xf32> -> vector<16x2xf32>
    %309 = vector.extract_strided_slice %305 {offsets = [1, 0], sizes = [15, 2], strides = [1, 1]} : vector<16x2xf32> to vector<15x2xf32>
    %310 = tpu.concatenate %309, %306 in 0 : vector<15x2xf32>, vector<1x2xf32> -> vector<16x2xf32>
    %311 = vector.broadcast %0 : f32 to vector<16x2xf32>
    %312 = arith.mulf %311, %236 : vector<16x2xf32>
    %313 = vector.broadcast %1 : f32 to vector<16x2xf32>
    %314 = arith.mulf %313, %233 : vector<16x2xf32>
    %315 = arith.addf %312, %314 : vector<16x2xf32>
    %316 = vector.broadcast %2 : f32 to vector<16x2xf32>
    %317 = arith.mulf %316, %238 : vector<16x2xf32>
    %318 = arith.addf %315, %317 : vector<16x2xf32>
    %319 = vector.broadcast %3 : f32 to vector<16x2xf32>
    %320 = arith.mulf %319, %272 : vector<16x2xf32>
    %321 = arith.addf %318, %320 : vector<16x2xf32>
    %322 = vector.broadcast %4 : f32 to vector<16x2xf32>
    %323 = arith.mulf %322, %269 : vector<16x2xf32>
    %324 = arith.addf %321, %323 : vector<16x2xf32>
    %325 = vector.broadcast %5 : f32 to vector<16x2xf32>
    %326 = arith.mulf %325, %274 : vector<16x2xf32>
    %327 = arith.addf %324, %326 : vector<16x2xf32>
    %328 = vector.broadcast %6 : f32 to vector<16x2xf32>
    %329 = arith.mulf %328, %308 : vector<16x2xf32>
    %330 = arith.addf %327, %329 : vector<16x2xf32>
    %331 = vector.broadcast %7 : f32 to vector<16x2xf32>
    %332 = arith.mulf %331, %305 : vector<16x2xf32>
    %333 = arith.addf %330, %332 : vector<16x2xf32>
    %334 = vector.broadcast %8 : f32 to vector<16x2xf32>
    %335 = arith.mulf %334, %310 : vector<16x2xf32>
    %336 = arith.addf %333, %335 : vector<16x2xf32>
    %c8_89 = arith.constant 8 : index
    %c0_90 = arith.constant 0 : index
    %c0_91 = arith.constant 0 : index
    %337 = vector.load %arg5[%c8_89, %c0_90, %c0_91] : memref<16x16x2xf32, #tpu.memory_space<vmem>>, vector<1x16x2xf32>
    %338 = vector.shape_cast %337 : vector<1x16x2xf32> to vector<16x2xf32>
    %339 = vector.shape_cast %336 : vector<16x2xf32> to vector<1x16x2xf32>
    tpu.vector_store %arg5[%c8_89, %c0_90, %c0_91], %339 {strides = array<i32>} : memref<16x16x2xf32, #tpu.memory_space<vmem>>, vector<1x16x2xf32>,
    %c10 = arith.constant 10 : index
    %c0_92 = arith.constant 0 : index
    %c0_93 = arith.constant 0 : index
    %340 = vector.load %arg1[%c10, %c0_92, %c0_93] : memref<16x16x2xf32, #tpu.memory_space<vmem>>, vector<1x16x2xf32>
    %341 = vector.shape_cast %340 : vector<1x16x2xf32> to vector<16x2xf32>
    %cst_94 = arith.constant 0.000000e+00 : f32
    %342 = vector.broadcast %cst_94 : f32 to vector<1x2xf32>
    %343 = vector.extract_strided_slice %341 {offsets = [0, 0], sizes = [15, 2], strides = [1, 1]} : vector<16x2xf32> to vector<15x2xf32>
    %344 = tpu.concatenate %342, %343 in 0 : vector<1x2xf32>, vector<15x2xf32> -> vector<16x2xf32>
    %345 = vector.extract_strided_slice %341 {offsets = [1, 0], sizes = [15, 2], strides = [1, 1]} : vector<16x2xf32> to vector<15x2xf32>
    %346 = tpu.concatenate %345, %342 in 0 : vector<15x2xf32>, vector<1x2xf32> -> vector<16x2xf32>
    %347 = vector.broadcast %0 : f32 to vector<16x2xf32>
    %348 = arith.mulf %347, %272 : vector<16x2xf32>
    %349 = vector.broadcast %1 : f32 to vector<16x2xf32>
    %350 = arith.mulf %349, %269 : vector<16x2xf32>
    %351 = arith.addf %348, %350 : vector<16x2xf32>
    %352 = vector.broadcast %2 : f32 to vector<16x2xf32>
    %353 = arith.mulf %352, %274 : vector<16x2xf32>
    %354 = arith.addf %351, %353 : vector<16x2xf32>
    %355 = vector.broadcast %3 : f32 to vector<16x2xf32>
    %356 = arith.mulf %355, %308 : vector<16x2xf32>
    %357 = arith.addf %354, %356 : vector<16x2xf32>
    %358 = vector.broadcast %4 : f32 to vector<16x2xf32>
    %359 = arith.mulf %358, %305 : vector<16x2xf32>
    %360 = arith.addf %357, %359 : vector<16x2xf32>
    %361 = vector.broadcast %5 : f32 to vector<16x2xf32>
    %362 = arith.mulf %361, %310 : vector<16x2xf32>
    %363 = arith.addf %360, %362 : vector<16x2xf32>
    %364 = vector.broadcast %6 : f32 to vector<16x2xf32>
    %365 = arith.mulf %364, %344 : vector<16x2xf32>
    %366 = arith.addf %363, %365 : vector<16x2xf32>
    %367 = vector.broadcast %7 : f32 to vector<16x2xf32>
    %368 = arith.mulf %367, %341 : vector<16x2xf32>
    %369 = arith.addf %366, %368 : vector<16x2xf32>
    %370 = vector.broadcast %8 : f32 to vector<16x2xf32>
    %371 = arith.mulf %370, %346 : vector<16x2xf32>
    %372 = arith.addf %369, %371 : vector<16x2xf32>
    %c9_95 = arith.constant 9 : index
    %c0_96 = arith.constant 0 : index
    %c0_97 = arith.constant 0 : index
    %373 = vector.load %arg5[%c9_95, %c0_96, %c0_97] : memref<16x16x2xf32, #tpu.memory_space<vmem>>, vector<1x16x2xf32>
    %374 = vector.shape_cast %373 : vector<1x16x2xf32> to vector<16x2xf32>
    %375 = vector.shape_cast %372 : vector<16x2xf32> to vector<1x16x2xf32>
    tpu.vector_store %arg5[%c9_95, %c0_96, %c0_97], %375 {strides = array<i32>} : memref<16x16x2xf32, #tpu.memory_space<vmem>>, vector<1x16x2xf32>,
    %c11 = arith.constant 11 : index
    %c0_98 = arith.constant 0 : index
    %c0_99 = arith.constant 0 : index
    %376 = vector.load %arg1[%c11, %c0_98, %c0_99] : memref<16x16x2xf32, #tpu.memory_space<vmem>>, vector<1x16x2xf32>
    %377 = vector.shape_cast %376 : vector<1x16x2xf32> to vector<16x2xf32>
    %cst_100 = arith.constant 0.000000e+00 : f32
    %378 = vector.broadcast %cst_100 : f32 to vector<1x2xf32>
    %379 = vector.extract_strided_slice %377 {offsets = [0, 0], sizes = [15, 2], strides = [1, 1]} : vector<16x2xf32> to vector<15x2xf32>
    %380 = tpu.concatenate %378, %379 in 0 : vector<1x2xf32>, vector<15x2xf32> -> vector<16x2xf32>
    %381 = vector.extract_strided_slice %377 {offsets = [1, 0], sizes = [15, 2], strides = [1, 1]} : vector<16x2xf32> to vector<15x2xf32>
    %382 = tpu.concatenate %381, %378 in 0 : vector<15x2xf32>, vector<1x2xf32> -> vector<16x2xf32>
    %383 = vector.broadcast %0 : f32 to vector<16x2xf32>
    %384 = arith.mulf %383, %308 : vector<16x2xf32>
    %385 = vector.broadcast %1 : f32 to vector<16x2xf32>
    %386 = arith.mulf %385, %305 : vector<16x2xf32>
    %387 = arith.addf %384, %386 : vector<16x2xf32>
    %388 = vector.broadcast %2 : f32 to vector<16x2xf32>
    %389 = arith.mulf %388, %310 : vector<16x2xf32>
    %390 = arith.addf %387, %389 : vector<16x2xf32>
    %391 = vector.broadcast %3 : f32 to vector<16x2xf32>
    %392 = arith.mulf %391, %344 : vector<16x2xf32>
    %393 = arith.addf %390, %392 : vector<16x2xf32>
    %394 = vector.broadcast %4 : f32 to vector<16x2xf32>
    %395 = arith.mulf %394, %341 : vector<16x2xf32>
    %396 = arith.addf %393, %395 : vector<16x2xf32>
    %397 = vector.broadcast %5 : f32 to vector<16x2xf32>
    %398 = arith.mulf %397, %346 : vector<16x2xf32>
    %399 = arith.addf %396, %398 : vector<16x2xf32>
    %400 = vector.broadcast %6 : f32 to vector<16x2xf32>
    %401 = arith.mulf %400, %380 : vector<16x2xf32>
    %402 = arith.addf %399, %401 : vector<16x2xf32>
    %403 = vector.broadcast %7 : f32 to vector<16x2xf32>
    %404 = arith.mulf %403, %377 : vector<16x2xf32>
    %405 = arith.addf %402, %404 : vector<16x2xf32>
    %406 = vector.broadcast %8 : f32 to vector<16x2xf32>
    %407 = arith.mulf %406, %382 : vector<16x2xf32>
    %408 = arith.addf %405, %407 : vector<16x2xf32>
    %c10_101 = arith.constant 10 : index
    %c0_102 = arith.constant 0 : index
    %c0_103 = arith.constant 0 : index
    %409 = vector.load %arg5[%c10_101, %c0_102, %c0_103] : memref<16x16x2xf32, #tpu.memory_space<vmem>>, vector<1x16x2xf32>
    %410 = vector.shape_cast %409 : vector<1x16x2xf32> to vector<16x2xf32>
    %411 = vector.shape_cast %408 : vector<16x2xf32> to vector<1x16x2xf32>
    tpu.vector_store %arg5[%c10_101, %c0_102, %c0_103], %411 {strides = array<i32>} : memref<16x16x2xf32, #tpu.memory_space<vmem>>, vector<1x16x2xf32>,
    %c12 = arith.constant 12 : index
    %c0_104 = arith.constant 0 : index
    %c0_105 = arith.constant 0 : index
    %412 = vector.load %arg1[%c12, %c0_104, %c0_105] : memref<16x16x2xf32, #tpu.memory_space<vmem>>, vector<1x16x2xf32>
    %413 = vector.shape_cast %412 : vector<1x16x2xf32> to vector<16x2xf32>
    %cst_106 = arith.constant 0.000000e+00 : f32
    %414 = vector.broadcast %cst_106 : f32 to vector<1x2xf32>
    %415 = vector.extract_strided_slice %413 {offsets = [0, 0], sizes = [15, 2], strides = [1, 1]} : vector<16x2xf32> to vector<15x2xf32>
    %416 = tpu.concatenate %414, %415 in 0 : vector<1x2xf32>, vector<15x2xf32> -> vector<16x2xf32>
    %417 = vector.extract_strided_slice %413 {offsets = [1, 0], sizes = [15, 2], strides = [1, 1]} : vector<16x2xf32> to vector<15x2xf32>
    %418 = tpu.concatenate %417, %414 in 0 : vector<15x2xf32>, vector<1x2xf32> -> vector<16x2xf32>
    %419 = vector.broadcast %0 : f32 to vector<16x2xf32>
    %420 = arith.mulf %419, %344 : vector<16x2xf32>
    %421 = vector.broadcast %1 : f32 to vector<16x2xf32>
    %422 = arith.mulf %421, %341 : vector<16x2xf32>
    %423 = arith.addf %420, %422 : vector<16x2xf32>
    %424 = vector.broadcast %2 : f32 to vector<16x2xf32>
    %425 = arith.mulf %424, %346 : vector<16x2xf32>
    %426 = arith.addf %423, %425 : vector<16x2xf32>
    %427 = vector.broadcast %3 : f32 to vector<16x2xf32>
    %428 = arith.mulf %427, %380 : vector<16x2xf32>
    %429 = arith.addf %426, %428 : vector<16x2xf32>
    %430 = vector.broadcast %4 : f32 to vector<16x2xf32>
    %431 = arith.mulf %430, %377 : vector<16x2xf32>
    %432 = arith.addf %429, %431 : vector<16x2xf32>
    %433 = vector.broadcast %5 : f32 to vector<16x2xf32>
    %434 = arith.mulf %433, %382 : vector<16x2xf32>
    %435 = arith.addf %432, %434 : vector<16x2xf32>
    %436 = vector.broadcast %6 : f32 to vector<16x2xf32>
    %437 = arith.mulf %436, %416 : vector<16x2xf32>
    %438 = arith.addf %435, %437 : vector<16x2xf32>
    %439 = vector.broadcast %7 : f32 to vector<16x2xf32>
    %440 = arith.mulf %439, %413 : vector<16x2xf32>
    %441 = arith.addf %438, %440 : vector<16x2xf32>
    %442 = vector.broadcast %8 : f32 to vector<16x2xf32>
    %443 = arith.mulf %442, %418 : vector<16x2xf32>
    %444 = arith.addf %441, %443 : vector<16x2xf32>
    %c11_107 = arith.constant 11 : index
    %c0_108 = arith.constant 0 : index
    %c0_109 = arith.constant 0 : index
    %445 = vector.load %arg5[%c11_107, %c0_108, %c0_109] : memref<16x16x2xf32, #tpu.memory_space<vmem>>, vector<1x16x2xf32>
    %446 = vector.shape_cast %445 : vector<1x16x2xf32> to vector<16x2xf32>
    %447 = vector.shape_cast %444 : vector<16x2xf32> to vector<1x16x2xf32>
    tpu.vector_store %arg5[%c11_107, %c0_108, %c0_109], %447 {strides = array<i32>} : memref<16x16x2xf32, #tpu.memory_space<vmem>>, vector<1x16x2xf32>,
    %c13 = arith.constant 13 : index
    %c0_110 = arith.constant 0 : index
    %c0_111 = arith.constant 0 : index
    %448 = vector.load %arg1[%c13, %c0_110, %c0_111] : memref<16x16x2xf32, #tpu.memory_space<vmem>>, vector<1x16x2xf32>
    %449 = vector.shape_cast %448 : vector<1x16x2xf32> to vector<16x2xf32>
    %cst_112 = arith.constant 0.000000e+00 : f32
    %450 = vector.broadcast %cst_112 : f32 to vector<1x2xf32>
    %451 = vector.extract_strided_slice %449 {offsets = [0, 0], sizes = [15, 2], strides = [1, 1]} : vector<16x2xf32> to vector<15x2xf32>
    %452 = tpu.concatenate %450, %451 in 0 : vector<1x2xf32>, vector<15x2xf32> -> vector<16x2xf32>
    %453 = vector.extract_strided_slice %449 {offsets = [1, 0], sizes = [15, 2], strides = [1, 1]} : vector<16x2xf32> to vector<15x2xf32>
    %454 = tpu.concatenate %453, %450 in 0 : vector<15x2xf32>, vector<1x2xf32> -> vector<16x2xf32>
    %455 = vector.broadcast %0 : f32 to vector<16x2xf32>
    %456 = arith.mulf %455, %380 : vector<16x2xf32>
    %457 = vector.broadcast %1 : f32 to vector<16x2xf32>
    %458 = arith.mulf %457, %377 : vector<16x2xf32>
    %459 = arith.addf %456, %458 : vector<16x2xf32>
    %460 = vector.broadcast %2 : f32 to vector<16x2xf32>
    %461 = arith.mulf %460, %382 : vector<16x2xf32>
    %462 = arith.addf %459, %461 : vector<16x2xf32>
    %463 = vector.broadcast %3 : f32 to vector<16x2xf32>
    %464 = arith.mulf %463, %416 : vector<16x2xf32>
    %465 = arith.addf %462, %464 : vector<16x2xf32>
    %466 = vector.broadcast %4 : f32 to vector<16x2xf32>
    %467 = arith.mulf %466, %413 : vector<16x2xf32>
    %468 = arith.addf %465, %467 : vector<16x2xf32>
    %469 = vector.broadcast %5 : f32 to vector<16x2xf32>
    %470 = arith.mulf %469, %418 : vector<16x2xf32>
    %471 = arith.addf %468, %470 : vector<16x2xf32>
    %472 = vector.broadcast %6 : f32 to vector<16x2xf32>
    %473 = arith.mulf %472, %452 : vector<16x2xf32>
    %474 = arith.addf %471, %473 : vector<16x2xf32>
    %475 = vector.broadcast %7 : f32 to vector<16x2xf32>
    %476 = arith.mulf %475, %449 : vector<16x2xf32>
    %477 = arith.addf %474, %476 : vector<16x2xf32>
    %478 = vector.broadcast %8 : f32 to vector<16x2xf32>
    %479 = arith.mulf %478, %454 : vector<16x2xf32>
    %480 = arith.addf %477, %479 : vector<16x2xf32>
    %c12_113 = arith.constant 12 : index
    %c0_114 = arith.constant 0 : index
    %c0_115 = arith.constant 0 : index
    %481 = vector.load %arg5[%c12_113, %c0_114, %c0_115] : memref<16x16x2xf32, #tpu.memory_space<vmem>>, vector<1x16x2xf32>
    %482 = vector.shape_cast %481 : vector<1x16x2xf32> to vector<16x2xf32>
    %483 = vector.shape_cast %480 : vector<16x2xf32> to vector<1x16x2xf32>
    tpu.vector_store %arg5[%c12_113, %c0_114, %c0_115], %483 {strides = array<i32>} : memref<16x16x2xf32, #tpu.memory_space<vmem>>, vector<1x16x2xf32>,
    %c14 = arith.constant 14 : index
    %c0_116 = arith.constant 0 : index
    %c0_117 = arith.constant 0 : index
    %484 = vector.load %arg1[%c14, %c0_116, %c0_117] : memref<16x16x2xf32, #tpu.memory_space<vmem>>, vector<1x16x2xf32>
    %485 = vector.shape_cast %484 : vector<1x16x2xf32> to vector<16x2xf32>
    %cst_118 = arith.constant 0.000000e+00 : f32
    %486 = vector.broadcast %cst_118 : f32 to vector<1x2xf32>
    %487 = vector.extract_strided_slice %485 {offsets = [0, 0], sizes = [15, 2], strides = [1, 1]} : vector<16x2xf32> to vector<15x2xf32>
    %488 = tpu.concatenate %486, %487 in 0 : vector<1x2xf32>, vector<15x2xf32> -> vector<16x2xf32>
    %489 = vector.extract_strided_slice %485 {offsets = [1, 0], sizes = [15, 2], strides = [1, 1]} : vector<16x2xf32> to vector<15x2xf32>
    %490 = tpu.concatenate %489, %486 in 0 : vector<15x2xf32>, vector<1x2xf32> -> vector<16x2xf32>
    %491 = vector.broadcast %0 : f32 to vector<16x2xf32>
    %492 = arith.mulf %491, %416 : vector<16x2xf32>
    %493 = vector.broadcast %1 : f32 to vector<16x2xf32>
    %494 = arith.mulf %493, %413 : vector<16x2xf32>
    %495 = arith.addf %492, %494 : vector<16x2xf32>
    %496 = vector.broadcast %2 : f32 to vector<16x2xf32>
    %497 = arith.mulf %496, %418 : vector<16x2xf32>
    %498 = arith.addf %495, %497 : vector<16x2xf32>
    %499 = vector.broadcast %3 : f32 to vector<16x2xf32>
    %500 = arith.mulf %499, %452 : vector<16x2xf32>
    %501 = arith.addf %498, %500 : vector<16x2xf32>
    %502 = vector.broadcast %4 : f32 to vector<16x2xf32>
    %503 = arith.mulf %502, %449 : vector<16x2xf32>
    %504 = arith.addf %501, %503 : vector<16x2xf32>
    %505 = vector.broadcast %5 : f32 to vector<16x2xf32>
    %506 = arith.mulf %505, %454 : vector<16x2xf32>
    %507 = arith.addf %504, %506 : vector<16x2xf32>
    %508 = vector.broadcast %6 : f32 to vector<16x2xf32>
    %509 = arith.mulf %508, %488 : vector<16x2xf32>
    %510 = arith.addf %507, %509 : vector<16x2xf32>
    %511 = vector.broadcast %7 : f32 to vector<16x2xf32>
    %512 = arith.mulf %511, %485 : vector<16x2xf32>
    %513 = arith.addf %510, %512 : vector<16x2xf32>
    %514 = vector.broadcast %8 : f32 to vector<16x2xf32>
    %515 = arith.mulf %514, %490 : vector<16x2xf32>
    %516 = arith.addf %513, %515 : vector<16x2xf32>
    %c13_119 = arith.constant 13 : index
    %c0_120 = arith.constant 0 : index
    %c0_121 = arith.constant 0 : index
    %517 = vector.load %arg5[%c13_119, %c0_120, %c0_121] : memref<16x16x2xf32, #tpu.memory_space<vmem>>, vector<1x16x2xf32>
    %518 = vector.shape_cast %517 : vector<1x16x2xf32> to vector<16x2xf32>
    %519 = vector.shape_cast %516 : vector<16x2xf32> to vector<1x16x2xf32>
    tpu.vector_store %arg5[%c13_119, %c0_120, %c0_121], %519 {strides = array<i32>} : memref<16x16x2xf32, #tpu.memory_space<vmem>>, vector<1x16x2xf32>,
    %c15 = arith.constant 15 : index
    %c0_122 = arith.constant 0 : index
    %c0_123 = arith.constant 0 : index
    %520 = vector.load %arg1[%c15, %c0_122, %c0_123] : memref<16x16x2xf32, #tpu.memory_space<vmem>>, vector<1x16x2xf32>
    %521 = vector.shape_cast %520 : vector<1x16x2xf32> to vector<16x2xf32>
    %cst_124 = arith.constant 0.000000e+00 : f32
    %522 = vector.broadcast %cst_124 : f32 to vector<1x2xf32>
    %523 = vector.extract_strided_slice %521 {offsets = [0, 0], sizes = [15, 2], strides = [1, 1]} : vector<16x2xf32> to vector<15x2xf32>
    %524 = tpu.concatenate %522, %523 in 0 : vector<1x2xf32>, vector<15x2xf32> -> vector<16x2xf32>
    %525 = vector.extract_strided_slice %521 {offsets = [1, 0], sizes = [15, 2], strides = [1, 1]} : vector<16x2xf32> to vector<15x2xf32>
    %526 = tpu.concatenate %525, %522 in 0 : vector<15x2xf32>, vector<1x2xf32> -> vector<16x2xf32>
    %527 = vector.broadcast %0 : f32 to vector<16x2xf32>
    %528 = arith.mulf %527, %452 : vector<16x2xf32>
    %529 = vector.broadcast %1 : f32 to vector<16x2xf32>
    %530 = arith.mulf %529, %449 : vector<16x2xf32>
    %531 = arith.addf %528, %530 : vector<16x2xf32>
    %532 = vector.broadcast %2 : f32 to vector<16x2xf32>
    %533 = arith.mulf %532, %454 : vector<16x2xf32>
    %534 = arith.addf %531, %533 : vector<16x2xf32>
    %535 = vector.broadcast %3 : f32 to vector<16x2xf32>
    %536 = arith.mulf %535, %488 : vector<16x2xf32>
    %537 = arith.addf %534, %536 : vector<16x2xf32>
    %538 = vector.broadcast %4 : f32 to vector<16x2xf32>
    %539 = arith.mulf %538, %485 : vector<16x2xf32>
    %540 = arith.addf %537, %539 : vector<16x2xf32>
    %541 = vector.broadcast %5 : f32 to vector<16x2xf32>
    %542 = arith.mulf %541, %490 : vector<16x2xf32>
    %543 = arith.addf %540, %542 : vector<16x2xf32>
    %544 = vector.broadcast %6 : f32 to vector<16x2xf32>
    %545 = arith.mulf %544, %524 : vector<16x2xf32>
    %546 = arith.addf %543, %545 : vector<16x2xf32>
    %547 = vector.broadcast %7 : f32 to vector<16x2xf32>
    %548 = arith.mulf %547, %521 : vector<16x2xf32>
    %549 = arith.addf %546, %548 : vector<16x2xf32>
    %550 = vector.broadcast %8 : f32 to vector<16x2xf32>
    %551 = arith.mulf %550, %526 : vector<16x2xf32>
    %552 = arith.addf %549, %551 : vector<16x2xf32>
    %c14_125 = arith.constant 14 : index
    %c0_126 = arith.constant 0 : index
    %c0_127 = arith.constant 0 : index
    %553 = vector.load %arg5[%c14_125, %c0_126, %c0_127] : memref<16x16x2xf32, #tpu.memory_space<vmem>>, vector<1x16x2xf32>
    %554 = vector.shape_cast %553 : vector<1x16x2xf32> to vector<16x2xf32>
    %555 = vector.shape_cast %552 : vector<16x2xf32> to vector<1x16x2xf32>
    tpu.vector_store %arg5[%c14_125, %c0_126, %c0_127], %555 {strides = array<i32>} : memref<16x16x2xf32, #tpu.memory_space<vmem>>, vector<1x16x2xf32>,
    %556 = vector.broadcast %0 : f32 to vector<16x2xf32>
    %557 = arith.mulf %556, %488 : vector<16x2xf32>
    %558 = vector.broadcast %1 : f32 to vector<16x2xf32>
    %559 = arith.mulf %558, %485 : vector<16x2xf32>
    %560 = arith.addf %557, %559 : vector<16x2xf32>
    %561 = vector.broadcast %2 : f32 to vector<16x2xf32>
    %562 = arith.mulf %561, %490 : vector<16x2xf32>
    %563 = arith.addf %560, %562 : vector<16x2xf32>
    %564 = vector.broadcast %3 : f32 to vector<16x2xf32>
    %565 = arith.mulf %564, %524 : vector<16x2xf32>
    %566 = arith.addf %563, %565 : vector<16x2xf32>
    %567 = vector.broadcast %4 : f32 to vector<16x2xf32>
    %568 = arith.mulf %567, %521 : vector<16x2xf32>
    %569 = arith.addf %566, %568 : vector<16x2xf32>
    %570 = vector.broadcast %5 : f32 to vector<16x2xf32>
    %571 = arith.mulf %570, %526 : vector<16x2xf32>
    %572 = arith.addf %569, %571 : vector<16x2xf32>
    %c15_128 = arith.constant 15 : index
    %c0_129 = arith.constant 0 : index
    %c0_130 = arith.constant 0 : index
    %573 = vector.load %arg5[%c15_128, %c0_129, %c0_130] : memref<16x16x2xf32, #tpu.memory_space<vmem>>, vector<1x16x2xf32>
    %574 = vector.shape_cast %573 : vector<1x16x2xf32> to vector<16x2xf32>
    %575 = vector.shape_cast %572 : vector<16x2xf32> to vector<1x16x2xf32>
    tpu.vector_store %arg5[%c15_128, %c0_129, %c0_130], %575 {strides = array<i32>} : memref<16x16x2xf32, #tpu.memory_space<vmem>>, vector<1x16x2xf32>,
    %c0_131 = arith.constant 0 : index
    %c0_132 = arith.constant 0 : index
    %c0_133 = arith.constant 0 : index
    %576 = vector.load %arg5[%c0_131, %c0_132, %c0_133] : memref<16x16x2xf32, #tpu.memory_space<vmem>>, vector<1x16x2xf32>
    %577 = vector.shape_cast %576 : vector<1x16x2xf32> to vector<16x2xf32>
    %cst_134 = arith.constant 0.000000e+00 : f32
    %578 = vector.broadcast %cst_134 : f32 to vector<1x2xf32>
    %579 = vector.extract_strided_slice %577 {offsets = [0, 0], sizes = [15, 2], strides = [1, 1]} : vector<16x2xf32> to vector<15x2xf32>
    %580 = tpu.concatenate %578, %579 in 0 : vector<1x2xf32>, vector<15x2xf32> -> vector<16x2xf32>
    %581 = vector.extract_strided_slice %577 {offsets = [1, 0], sizes = [15, 2], strides = [1, 1]} : vector<16x2xf32> to vector<15x2xf32>
    %582 = tpu.concatenate %581, %578 in 0 : vector<15x2xf32>, vector<1x2xf32> -> vector<16x2xf32>
    %c1_135 = arith.constant 1 : index
    %c0_136 = arith.constant 0 : index
    %c0_137 = arith.constant 0 : index
    %583 = vector.load %arg5[%c1_135, %c0_136, %c0_137] : memref<16x16x2xf32, #tpu.memory_space<vmem>>, vector<1x16x2xf32>
    %584 = vector.shape_cast %583 : vector<1x16x2xf32> to vector<16x2xf32>
    %cst_138 = arith.constant 0.000000e+00 : f32
    %585 = vector.broadcast %cst_138 : f32 to vector<1x2xf32>
    %586 = vector.extract_strided_slice %584 {offsets = [0, 0], sizes = [15, 2], strides = [1, 1]} : vector<16x2xf32> to vector<15x2xf32>
    %587 = tpu.concatenate %585, %586 in 0 : vector<1x2xf32>, vector<15x2xf32> -> vector<16x2xf32>
    %588 = vector.extract_strided_slice %584 {offsets = [1, 0], sizes = [15, 2], strides = [1, 1]} : vector<16x2xf32> to vector<15x2xf32>
    %589 = tpu.concatenate %588, %585 in 0 : vector<15x2xf32>, vector<1x2xf32> -> vector<16x2xf32>
    %590 = vector.broadcast %12 : f32 to vector<16x2xf32>
    %591 = arith.mulf %590, %580 : vector<16x2xf32>
    %592 = vector.broadcast %13 : f32 to vector<16x2xf32>
    %593 = arith.mulf %592, %577 : vector<16x2xf32>
    %594 = arith.addf %591, %593 : vector<16x2xf32>
    %595 = vector.broadcast %14 : f32 to vector<16x2xf32>
    %596 = arith.mulf %595, %582 : vector<16x2xf32>
    %597 = arith.addf %594, %596 : vector<16x2xf32>
    %598 = vector.broadcast %15 : f32 to vector<16x2xf32>
    %599 = arith.mulf %598, %587 : vector<16x2xf32>
    %600 = arith.addf %597, %599 : vector<16x2xf32>
    %601 = vector.broadcast %16 : f32 to vector<16x2xf32>
    %602 = arith.mulf %601, %584 : vector<16x2xf32>
    %603 = arith.addf %600, %602 : vector<16x2xf32>
    %604 = vector.broadcast %17 : f32 to vector<16x2xf32>
    %605 = arith.mulf %604, %589 : vector<16x2xf32>
    %606 = arith.addf %603, %605 : vector<16x2xf32>
    %c0_139 = arith.constant 0 : index
    %c0_140 = arith.constant 0 : index
    %c0_141 = arith.constant 0 : index
    %607 = vector.load %arg4[%c0_139, %c0_140, %c0_141] : memref<16x16x2xf32, #tpu.memory_space<vmem>>, vector<1x16x2xf32>
    %608 = vector.shape_cast %607 : vector<1x16x2xf32> to vector<16x2xf32>
    %609 = vector.shape_cast %606 : vector<16x2xf32> to vector<1x16x2xf32>
    tpu.vector_store %arg4[%c0_139, %c0_140, %c0_141], %609 {strides = array<i32>} : memref<16x16x2xf32, #tpu.memory_space<vmem>>, vector<1x16x2xf32>,
    %c2_142 = arith.constant 2 : index
    %c0_143 = arith.constant 0 : index
    %c0_144 = arith.constant 0 : index
    %610 = vector.load %arg5[%c2_142, %c0_143, %c0_144] : memref<16x16x2xf32, #tpu.memory_space<vmem>>, vector<1x16x2xf32>
    %611 = vector.shape_cast %610 : vector<1x16x2xf32> to vector<16x2xf32>
    %cst_145 = arith.constant 0.000000e+00 : f32
    %612 = vector.broadcast %cst_145 : f32 to vector<1x2xf32>
    %613 = vector.extract_strided_slice %611 {offsets = [0, 0], sizes = [15, 2], strides = [1, 1]} : vector<16x2xf32> to vector<15x2xf32>
    %614 = tpu.concatenate %612, %613 in 0 : vector<1x2xf32>, vector<15x2xf32> -> vector<16x2xf32>
    %615 = vector.extract_strided_slice %611 {offsets = [1, 0], sizes = [15, 2], strides = [1, 1]} : vector<16x2xf32> to vector<15x2xf32>
    %616 = tpu.concatenate %615, %612 in 0 : vector<15x2xf32>, vector<1x2xf32> -> vector<16x2xf32>
    %617 = vector.broadcast %9 : f32 to vector<16x2xf32>
    %618 = arith.mulf %617, %580 : vector<16x2xf32>
    %619 = vector.broadcast %10 : f32 to vector<16x2xf32>
    %620 = arith.mulf %619, %577 : vector<16x2xf32>
    %621 = arith.addf %618, %620 : vector<16x2xf32>
    %622 = vector.broadcast %11 : f32 to vector<16x2xf32>
    %623 = arith.mulf %622, %582 : vector<16x2xf32>
    %624 = arith.addf %621, %623 : vector<16x2xf32>
    %625 = vector.broadcast %12 : f32 to vector<16x2xf32>
    %626 = arith.mulf %625, %587 : vector<16x2xf32>
    %627 = arith.addf %624, %626 : vector<16x2xf32>
    %628 = vector.broadcast %13 : f32 to vector<16x2xf32>
    %629 = arith.mulf %628, %584 : vector<16x2xf32>
    %630 = arith.addf %627, %629 : vector<16x2xf32>
    %631 = vector.broadcast %14 : f32 to vector<16x2xf32>
    %632 = arith.mulf %631, %589 : vector<16x2xf32>
    %633 = arith.addf %630, %632 : vector<16x2xf32>
    %634 = vector.broadcast %15 : f32 to vector<16x2xf32>
    %635 = arith.mulf %634, %614 : vector<16x2xf32>
    %636 = arith.addf %633, %635 : vector<16x2xf32>
    %637 = vector.broadcast %16 : f32 to vector<16x2xf32>
    %638 = arith.mulf %637, %611 : vector<16x2xf32>
    %639 = arith.addf %636, %638 : vector<16x2xf32>
    %640 = vector.broadcast %17 : f32 to vector<16x2xf32>
    %641 = arith.mulf %640, %616 : vector<16x2xf32>
    %642 = arith.addf %639, %641 : vector<16x2xf32>
    %c1_146 = arith.constant 1 : index
    %c0_147 = arith.constant 0 : index
    %c0_148 = arith.constant 0 : index
    %643 = vector.load %arg4[%c1_146, %c0_147, %c0_148] : memref<16x16x2xf32, #tpu.memory_space<vmem>>, vector<1x16x2xf32>
    %644 = vector.shape_cast %643 : vector<1x16x2xf32> to vector<16x2xf32>
    %645 = vector.shape_cast %642 : vector<16x2xf32> to vector<1x16x2xf32>
    tpu.vector_store %arg4[%c1_146, %c0_147, %c0_148], %645 {strides = array<i32>} : memref<16x16x2xf32, #tpu.memory_space<vmem>>, vector<1x16x2xf32>,
    %c3_149 = arith.constant 3 : index
    %c0_150 = arith.constant 0 : index
    %c0_151 = arith.constant 0 : index
    %646 = vector.load %arg5[%c3_149, %c0_150, %c0_151] : memref<16x16x2xf32, #tpu.memory_space<vmem>>, vector<1x16x2xf32>
    %647 = vector.shape_cast %646 : vector<1x16x2xf32> to vector<16x2xf32>
    %cst_152 = arith.constant 0.000000e+00 : f32
    %648 = vector.broadcast %cst_152 : f32 to vector<1x2xf32>
    %649 = vector.extract_strided_slice %647 {offsets = [0, 0], sizes = [15, 2], strides = [1, 1]} : vector<16x2xf32> to vector<15x2xf32>
    %650 = tpu.concatenate %648, %649 in 0 : vector<1x2xf32>, vector<15x2xf32> -> vector<16x2xf32>
    %651 = vector.extract_strided_slice %647 {offsets = [1, 0], sizes = [15, 2], strides = [1, 1]} : vector<16x2xf32> to vector<15x2xf32>
    %652 = tpu.concatenate %651, %648 in 0 : vector<15x2xf32>, vector<1x2xf32> -> vector<16x2xf32>
    %653 = vector.broadcast %9 : f32 to vector<16x2xf32>
    %654 = arith.mulf %653, %587 : vector<16x2xf32>
    %655 = vector.broadcast %10 : f32 to vector<16x2xf32>
    %656 = arith.mulf %655, %584 : vector<16x2xf32>
    %657 = arith.addf %654, %656 : vector<16x2xf32>
    %658 = vector.broadcast %11 : f32 to vector<16x2xf32>
    %659 = arith.mulf %658, %589 : vector<16x2xf32>
    %660 = arith.addf %657, %659 : vector<16x2xf32>
    %661 = vector.broadcast %12 : f32 to vector<16x2xf32>
    %662 = arith.mulf %661, %614 : vector<16x2xf32>
    %663 = arith.addf %660, %662 : vector<16x2xf32>
    %664 = vector.broadcast %13 : f32 to vector<16x2xf32>
    %665 = arith.mulf %664, %611 : vector<16x2xf32>
    %666 = arith.addf %663, %665 : vector<16x2xf32>
    %667 = vector.broadcast %14 : f32 to vector<16x2xf32>
    %668 = arith.mulf %667, %616 : vector<16x2xf32>
    %669 = arith.addf %666, %668 : vector<16x2xf32>
    %670 = vector.broadcast %15 : f32 to vector<16x2xf32>
    %671 = arith.mulf %670, %650 : vector<16x2xf32>
    %672 = arith.addf %669, %671 : vector<16x2xf32>
    %673 = vector.broadcast %16 : f32 to vector<16x2xf32>
    %674 = arith.mulf %673, %647 : vector<16x2xf32>
    %675 = arith.addf %672, %674 : vector<16x2xf32>
    %676 = vector.broadcast %17 : f32 to vector<16x2xf32>
    %677 = arith.mulf %676, %652 : vector<16x2xf32>
    %678 = arith.addf %675, %677 : vector<16x2xf32>
    %c2_153 = arith.constant 2 : index
    %c0_154 = arith.constant 0 : index
    %c0_155 = arith.constant 0 : index
    %679 = vector.load %arg4[%c2_153, %c0_154, %c0_155] : memref<16x16x2xf32, #tpu.memory_space<vmem>>, vector<1x16x2xf32>
    %680 = vector.shape_cast %679 : vector<1x16x2xf32> to vector<16x2xf32>
    %681 = vector.shape_cast %678 : vector<16x2xf32> to vector<1x16x2xf32>
    tpu.vector_store %arg4[%c2_153, %c0_154, %c0_155], %681 {strides = array<i32>} : memref<16x16x2xf32, #tpu.memory_space<vmem>>, vector<1x16x2xf32>,
    %c4_156 = arith.constant 4 : index
    %c0_157 = arith.constant 0 : index
    %c0_158 = arith.constant 0 : index
    %682 = vector.load %arg5[%c4_156, %c0_157, %c0_158] : memref<16x16x2xf32, #tpu.memory_space<vmem>>, vector<1x16x2xf32>
    %683 = vector.shape_cast %682 : vector<1x16x2xf32> to vector<16x2xf32>
    %cst_159 = arith.constant 0.000000e+00 : f32
    %684 = vector.broadcast %cst_159 : f32 to vector<1x2xf32>
    %685 = vector.extract_strided_slice %683 {offsets = [0, 0], sizes = [15, 2], strides = [1, 1]} : vector<16x2xf32> to vector<15x2xf32>
    %686 = tpu.concatenate %684, %685 in 0 : vector<1x2xf32>, vector<15x2xf32> -> vector<16x2xf32>
    %687 = vector.extract_strided_slice %683 {offsets = [1, 0], sizes = [15, 2], strides = [1, 1]} : vector<16x2xf32> to vector<15x2xf32>
    %688 = tpu.concatenate %687, %684 in 0 : vector<15x2xf32>, vector<1x2xf32> -> vector<16x2xf32>
    %689 = vector.broadcast %9 : f32 to vector<16x2xf32>
    %690 = arith.mulf %689, %614 : vector<16x2xf32>
    %691 = vector.broadcast %10 : f32 to vector<16x2xf32>
    %692 = arith.mulf %691, %611 : vector<16x2xf32>
    %693 = arith.addf %690, %692 : vector<16x2xf32>
    %694 = vector.broadcast %11 : f32 to vector<16x2xf32>
    %695 = arith.mulf %694, %616 : vector<16x2xf32>
    %696 = arith.addf %693, %695 : vector<16x2xf32>
    %697 = vector.broadcast %12 : f32 to vector<16x2xf32>
    %698 = arith.mulf %697, %650 : vector<16x2xf32>
    %699 = arith.addf %696, %698 : vector<16x2xf32>
    %700 = vector.broadcast %13 : f32 to vector<16x2xf32>
    %701 = arith.mulf %700, %647 : vector<16x2xf32>
    %702 = arith.addf %699, %701 : vector<16x2xf32>
    %703 = vector.broadcast %14 : f32 to vector<16x2xf32>
    %704 = arith.mulf %703, %652 : vector<16x2xf32>
    %705 = arith.addf %702, %704 : vector<16x2xf32>
    %706 = vector.broadcast %15 : f32 to vector<16x2xf32>
    %707 = arith.mulf %706, %686 : vector<16x2xf32>
    %708 = arith.addf %705, %707 : vector<16x2xf32>
    %709 = vector.broadcast %16 : f32 to vector<16x2xf32>
    %710 = arith.mulf %709, %683 : vector<16x2xf32>
    %711 = arith.addf %708, %710 : vector<16x2xf32>
    %712 = vector.broadcast %17 : f32 to vector<16x2xf32>
    %713 = arith.mulf %712, %688 : vector<16x2xf32>
    %714 = arith.addf %711, %713 : vector<16x2xf32>
    %c3_160 = arith.constant 3 : index
    %c0_161 = arith.constant 0 : index
    %c0_162 = arith.constant 0 : index
    %715 = vector.load %arg4[%c3_160, %c0_161, %c0_162] : memref<16x16x2xf32, #tpu.memory_space<vmem>>, vector<1x16x2xf32>
    %716 = vector.shape_cast %715 : vector<1x16x2xf32> to vector<16x2xf32>
    %717 = vector.shape_cast %714 : vector<16x2xf32> to vector<1x16x2xf32>
    tpu.vector_store %arg4[%c3_160, %c0_161, %c0_162], %717 {strides = array<i32>} : memref<16x16x2xf32, #tpu.memory_space<vmem>>, vector<1x16x2xf32>,
    %c5_163 = arith.constant 5 : index
    %c0_164 = arith.constant 0 : index
    %c0_165 = arith.constant 0 : index
    %718 = vector.load %arg5[%c5_163, %c0_164, %c0_165] : memref<16x16x2xf32, #tpu.memory_space<vmem>>, vector<1x16x2xf32>
    %719 = vector.shape_cast %718 : vector<1x16x2xf32> to vector<16x2xf32>
    %cst_166 = arith.constant 0.000000e+00 : f32
    %720 = vector.broadcast %cst_166 : f32 to vector<1x2xf32>
    %721 = vector.extract_strided_slice %719 {offsets = [0, 0], sizes = [15, 2], strides = [1, 1]} : vector<16x2xf32> to vector<15x2xf32>
    %722 = tpu.concatenate %720, %721 in 0 : vector<1x2xf32>, vector<15x2xf32> -> vector<16x2xf32>
    %723 = vector.extract_strided_slice %719 {offsets = [1, 0], sizes = [15, 2], strides = [1, 1]} : vector<16x2xf32> to vector<15x2xf32>
    %724 = tpu.concatenate %723, %720 in 0 : vector<15x2xf32>, vector<1x2xf32> -> vector<16x2xf32>
    %725 = vector.broadcast %9 : f32 to vector<16x2xf32>
    %726 = arith.mulf %725, %650 : vector<16x2xf32>
    %727 = vector.broadcast %10 : f32 to vector<16x2xf32>
    %728 = arith.mulf %727, %647 : vector<16x2xf32>
    %729 = arith.addf %726, %728 : vector<16x2xf32>
    %730 = vector.broadcast %11 : f32 to vector<16x2xf32>
    %731 = arith.mulf %730, %652 : vector<16x2xf32>
    %732 = arith.addf %729, %731 : vector<16x2xf32>
    %733 = vector.broadcast %12 : f32 to vector<16x2xf32>
    %734 = arith.mulf %733, %686 : vector<16x2xf32>
    %735 = arith.addf %732, %734 : vector<16x2xf32>
    %736 = vector.broadcast %13 : f32 to vector<16x2xf32>
    %737 = arith.mulf %736, %683 : vector<16x2xf32>
    %738 = arith.addf %735, %737 : vector<16x2xf32>
    %739 = vector.broadcast %14 : f32 to vector<16x2xf32>
    %740 = arith.mulf %739, %688 : vector<16x2xf32>
    %741 = arith.addf %738, %740 : vector<16x2xf32>
    %742 = vector.broadcast %15 : f32 to vector<16x2xf32>
    %743 = arith.mulf %742, %722 : vector<16x2xf32>
    %744 = arith.addf %741, %743 : vector<16x2xf32>
    %745 = vector.broadcast %16 : f32 to vector<16x2xf32>
    %746 = arith.mulf %745, %719 : vector<16x2xf32>
    %747 = arith.addf %744, %746 : vector<16x2xf32>
    %748 = vector.broadcast %17 : f32 to vector<16x2xf32>
    %749 = arith.mulf %748, %724 : vector<16x2xf32>
    %750 = arith.addf %747, %749 : vector<16x2xf32>
    %c4_167 = arith.constant 4 : index
    %c0_168 = arith.constant 0 : index
    %c0_169 = arith.constant 0 : index
    %751 = vector.load %arg4[%c4_167, %c0_168, %c0_169] : memref<16x16x2xf32, #tpu.memory_space<vmem>>, vector<1x16x2xf32>
    %752 = vector.shape_cast %751 : vector<1x16x2xf32> to vector<16x2xf32>
    %753 = vector.shape_cast %750 : vector<16x2xf32> to vector<1x16x2xf32>
    tpu.vector_store %arg4[%c4_167, %c0_168, %c0_169], %753 {strides = array<i32>} : memref<16x16x2xf32, #tpu.memory_space<vmem>>, vector<1x16x2xf32>,
    %c6_170 = arith.constant 6 : index
    %c0_171 = arith.constant 0 : index
    %c0_172 = arith.constant 0 : index
    %754 = vector.load %arg5[%c6_170, %c0_171, %c0_172] : memref<16x16x2xf32, #tpu.memory_space<vmem>>, vector<1x16x2xf32>
    %755 = vector.shape_cast %754 : vector<1x16x2xf32> to vector<16x2xf32>
    %cst_173 = arith.constant 0.000000e+00 : f32
    %756 = vector.broadcast %cst_173 : f32 to vector<1x2xf32>
    %757 = vector.extract_strided_slice %755 {offsets = [0, 0], sizes = [15, 2], strides = [1, 1]} : vector<16x2xf32> to vector<15x2xf32>
    %758 = tpu.concatenate %756, %757 in 0 : vector<1x2xf32>, vector<15x2xf32> -> vector<16x2xf32>
    %759 = vector.extract_strided_slice %755 {offsets = [1, 0], sizes = [15, 2], strides = [1, 1]} : vector<16x2xf32> to vector<15x2xf32>
    %760 = tpu.concatenate %759, %756 in 0 : vector<15x2xf32>, vector<1x2xf32> -> vector<16x2xf32>
    %761 = vector.broadcast %9 : f32 to vector<16x2xf32>
    %762 = arith.mulf %761, %686 : vector<16x2xf32>
    %763 = vector.broadcast %10 : f32 to vector<16x2xf32>
    %764 = arith.mulf %763, %683 : vector<16x2xf32>
    %765 = arith.addf %762, %764 : vector<16x2xf32>
    %766 = vector.broadcast %11 : f32 to vector<16x2xf32>
    %767 = arith.mulf %766, %688 : vector<16x2xf32>
    %768 = arith.addf %765, %767 : vector<16x2xf32>
    %769 = vector.broadcast %12 : f32 to vector<16x2xf32>
    %770 = arith.mulf %769, %722 : vector<16x2xf32>
    %771 = arith.addf %768, %770 : vector<16x2xf32>
    %772 = vector.broadcast %13 : f32 to vector<16x2xf32>
    %773 = arith.mulf %772, %719 : vector<16x2xf32>
    %774 = arith.addf %771, %773 : vector<16x2xf32>
    %775 = vector.broadcast %14 : f32 to vector<16x2xf32>
    %776 = arith.mulf %775, %724 : vector<16x2xf32>
    %777 = arith.addf %774, %776 : vector<16x2xf32>
    %778 = vector.broadcast %15 : f32 to vector<16x2xf32>
    %779 = arith.mulf %778, %758 : vector<16x2xf32>
    %780 = arith.addf %777, %779 : vector<16x2xf32>
    %781 = vector.broadcast %16 : f32 to vector<16x2xf32>
    %782 = arith.mulf %781, %755 : vector<16x2xf32>
    %783 = arith.addf %780, %782 : vector<16x2xf32>
    %784 = vector.broadcast %17 : f32 to vector<16x2xf32>
    %785 = arith.mulf %784, %760 : vector<16x2xf32>
    %786 = arith.addf %783, %785 : vector<16x2xf32>
    %c5_174 = arith.constant 5 : index
    %c0_175 = arith.constant 0 : index
    %c0_176 = arith.constant 0 : index
    %787 = vector.load %arg4[%c5_174, %c0_175, %c0_176] : memref<16x16x2xf32, #tpu.memory_space<vmem>>, vector<1x16x2xf32>
    %788 = vector.shape_cast %787 : vector<1x16x2xf32> to vector<16x2xf32>
    %789 = vector.shape_cast %786 : vector<16x2xf32> to vector<1x16x2xf32>
    tpu.vector_store %arg4[%c5_174, %c0_175, %c0_176], %789 {strides = array<i32>} : memref<16x16x2xf32, #tpu.memory_space<vmem>>, vector<1x16x2xf32>,
    %c7_177 = arith.constant 7 : index
    %c0_178 = arith.constant 0 : index
    %c0_179 = arith.constant 0 : index
    %790 = vector.load %arg5[%c7_177, %c0_178, %c0_179] : memref<16x16x2xf32, #tpu.memory_space<vmem>>, vector<1x16x2xf32>
    %791 = vector.shape_cast %790 : vector<1x16x2xf32> to vector<16x2xf32>
    %cst_180 = arith.constant 0.000000e+00 : f32
    %792 = vector.broadcast %cst_180 : f32 to vector<1x2xf32>
    %793 = vector.extract_strided_slice %791 {offsets = [0, 0], sizes = [15, 2], strides = [1, 1]} : vector<16x2xf32> to vector<15x2xf32>
    %794 = tpu.concatenate %792, %793 in 0 : vector<1x2xf32>, vector<15x2xf32> -> vector<16x2xf32>
    %795 = vector.extract_strided_slice %791 {offsets = [1, 0], sizes = [15, 2], strides = [1, 1]} : vector<16x2xf32> to vector<15x2xf32>
    %796 = tpu.concatenate %795, %792 in 0 : vector<15x2xf32>, vector<1x2xf32> -> vector<16x2xf32>
    %797 = vector.broadcast %9 : f32 to vector<16x2xf32>
    %798 = arith.mulf %797, %722 : vector<16x2xf32>
    %799 = vector.broadcast %10 : f32 to vector<16x2xf32>
    %800 = arith.mulf %799, %719 : vector<16x2xf32>
    %801 = arith.addf %798, %800 : vector<16x2xf32>
    %802 = vector.broadcast %11 : f32 to vector<16x2xf32>
    %803 = arith.mulf %802, %724 : vector<16x2xf32>
    %804 = arith.addf %801, %803 : vector<16x2xf32>
    %805 = vector.broadcast %12 : f32 to vector<16x2xf32>
    %806 = arith.mulf %805, %758 : vector<16x2xf32>
    %807 = arith.addf %804, %806 : vector<16x2xf32>
    %808 = vector.broadcast %13 : f32 to vector<16x2xf32>
    %809 = arith.mulf %808, %755 : vector<16x2xf32>
    %810 = arith.addf %807, %809 : vector<16x2xf32>
    %811 = vector.broadcast %14 : f32 to vector<16x2xf32>
    %812 = arith.mulf %811, %760 : vector<16x2xf32>
    %813 = arith.addf %810, %812 : vector<16x2xf32>
    %814 = vector.broadcast %15 : f32 to vector<16x2xf32>
    %815 = arith.mulf %814, %794 : vector<16x2xf32>
    %816 = arith.addf %813, %815 : vector<16x2xf32>
    %817 = vector.broadcast %16 : f32 to vector<16x2xf32>
    %818 = arith.mulf %817, %791 : vector<16x2xf32>
    %819 = arith.addf %816, %818 : vector<16x2xf32>
    %820 = vector.broadcast %17 : f32 to vector<16x2xf32>
    %821 = arith.mulf %820, %796 : vector<16x2xf32>
    %822 = arith.addf %819, %821 : vector<16x2xf32>
    %c6_181 = arith.constant 6 : index
    %c0_182 = arith.constant 0 : index
    %c0_183 = arith.constant 0 : index
    %823 = vector.load %arg4[%c6_181, %c0_182, %c0_183] : memref<16x16x2xf32, #tpu.memory_space<vmem>>, vector<1x16x2xf32>
    %824 = vector.shape_cast %823 : vector<1x16x2xf32> to vector<16x2xf32>
    %825 = vector.shape_cast %822 : vector<16x2xf32> to vector<1x16x2xf32>
    tpu.vector_store %arg4[%c6_181, %c0_182, %c0_183], %825 {strides = array<i32>} : memref<16x16x2xf32, #tpu.memory_space<vmem>>, vector<1x16x2xf32>,
    %c8_184 = arith.constant 8 : index
    %c0_185 = arith.constant 0 : index
    %c0_186 = arith.constant 0 : index
    %826 = vector.load %arg5[%c8_184, %c0_185, %c0_186] : memref<16x16x2xf32, #tpu.memory_space<vmem>>, vector<1x16x2xf32>
    %827 = vector.shape_cast %826 : vector<1x16x2xf32> to vector<16x2xf32>
    %cst_187 = arith.constant 0.000000e+00 : f32
    %828 = vector.broadcast %cst_187 : f32 to vector<1x2xf32>
    %829 = vector.extract_strided_slice %827 {offsets = [0, 0], sizes = [15, 2], strides = [1, 1]} : vector<16x2xf32> to vector<15x2xf32>
    %830 = tpu.concatenate %828, %829 in 0 : vector<1x2xf32>, vector<15x2xf32> -> vector<16x2xf32>
    %831 = vector.extract_strided_slice %827 {offsets = [1, 0], sizes = [15, 2], strides = [1, 1]} : vector<16x2xf32> to vector<15x2xf32>
    %832 = tpu.concatenate %831, %828 in 0 : vector<15x2xf32>, vector<1x2xf32> -> vector<16x2xf32>
    %833 = vector.broadcast %9 : f32 to vector<16x2xf32>
    %834 = arith.mulf %833, %758 : vector<16x2xf32>
    %835 = vector.broadcast %10 : f32 to vector<16x2xf32>
    %836 = arith.mulf %835, %755 : vector<16x2xf32>
    %837 = arith.addf %834, %836 : vector<16x2xf32>
    %838 = vector.broadcast %11 : f32 to vector<16x2xf32>
    %839 = arith.mulf %838, %760 : vector<16x2xf32>
    %840 = arith.addf %837, %839 : vector<16x2xf32>
    %841 = vector.broadcast %12 : f32 to vector<16x2xf32>
    %842 = arith.mulf %841, %794 : vector<16x2xf32>
    %843 = arith.addf %840, %842 : vector<16x2xf32>
    %844 = vector.broadcast %13 : f32 to vector<16x2xf32>
    %845 = arith.mulf %844, %791 : vector<16x2xf32>
    %846 = arith.addf %843, %845 : vector<16x2xf32>
    %847 = vector.broadcast %14 : f32 to vector<16x2xf32>
    %848 = arith.mulf %847, %796 : vector<16x2xf32>
    %849 = arith.addf %846, %848 : vector<16x2xf32>
    %850 = vector.broadcast %15 : f32 to vector<16x2xf32>
    %851 = arith.mulf %850, %830 : vector<16x2xf32>
    %852 = arith.addf %849, %851 : vector<16x2xf32>
    %853 = vector.broadcast %16 : f32 to vector<16x2xf32>
    %854 = arith.mulf %853, %827 : vector<16x2xf32>
    %855 = arith.addf %852, %854 : vector<16x2xf32>
    %856 = vector.broadcast %17 : f32 to vector<16x2xf32>
    %857 = arith.mulf %856, %832 : vector<16x2xf32>
    %858 = arith.addf %855, %857 : vector<16x2xf32>
    %c7_188 = arith.constant 7 : index
    %c0_189 = arith.constant 0 : index
    %c0_190 = arith.constant 0 : index
    %859 = vector.load %arg4[%c7_188, %c0_189, %c0_190] : memref<16x16x2xf32, #tpu.memory_space<vmem>>, vector<1x16x2xf32>
    %860 = vector.shape_cast %859 : vector<1x16x2xf32> to vector<16x2xf32>
    %861 = vector.shape_cast %858 : vector<16x2xf32> to vector<1x16x2xf32>
    tpu.vector_store %arg4[%c7_188, %c0_189, %c0_190], %861 {strides = array<i32>} : memref<16x16x2xf32, #tpu.memory_space<vmem>>, vector<1x16x2xf32>,
    %c9_191 = arith.constant 9 : index
    %c0_192 = arith.constant 0 : index
    %c0_193 = arith.constant 0 : index
    %862 = vector.load %arg5[%c9_191, %c0_192, %c0_193] : memref<16x16x2xf32, #tpu.memory_space<vmem>>, vector<1x16x2xf32>
    %863 = vector.shape_cast %862 : vector<1x16x2xf32> to vector<16x2xf32>
    %cst_194 = arith.constant 0.000000e+00 : f32
    %864 = vector.broadcast %cst_194 : f32 to vector<1x2xf32>
    %865 = vector.extract_strided_slice %863 {offsets = [0, 0], sizes = [15, 2], strides = [1, 1]} : vector<16x2xf32> to vector<15x2xf32>
    %866 = tpu.concatenate %864, %865 in 0 : vector<1x2xf32>, vector<15x2xf32> -> vector<16x2xf32>
    %867 = vector.extract_strided_slice %863 {offsets = [1, 0], sizes = [15, 2], strides = [1, 1]} : vector<16x2xf32> to vector<15x2xf32>
    %868 = tpu.concatenate %867, %864 in 0 : vector<15x2xf32>, vector<1x2xf32> -> vector<16x2xf32>
    %869 = vector.broadcast %9 : f32 to vector<16x2xf32>
    %870 = arith.mulf %869, %794 : vector<16x2xf32>
    %871 = vector.broadcast %10 : f32 to vector<16x2xf32>
    %872 = arith.mulf %871, %791 : vector<16x2xf32>
    %873 = arith.addf %870, %872 : vector<16x2xf32>
    %874 = vector.broadcast %11 : f32 to vector<16x2xf32>
    %875 = arith.mulf %874, %796 : vector<16x2xf32>
    %876 = arith.addf %873, %875 : vector<16x2xf32>
    %877 = vector.broadcast %12 : f32 to vector<16x2xf32>
    %878 = arith.mulf %877, %830 : vector<16x2xf32>
    %879 = arith.addf %876, %878 : vector<16x2xf32>
    %880 = vector.broadcast %13 : f32 to vector<16x2xf32>
    %881 = arith.mulf %880, %827 : vector<16x2xf32>
    %882 = arith.addf %879, %881 : vector<16x2xf32>
    %883 = vector.broadcast %14 : f32 to vector<16x2xf32>
    %884 = arith.mulf %883, %832 : vector<16x2xf32>
    %885 = arith.addf %882, %884 : vector<16x2xf32>
    %886 = vector.broadcast %15 : f32 to vector<16x2xf32>
    %887 = arith.mulf %886, %866 : vector<16x2xf32>
    %888 = arith.addf %885, %887 : vector<16x2xf32>
    %889 = vector.broadcast %16 : f32 to vector<16x2xf32>
    %890 = arith.mulf %889, %863 : vector<16x2xf32>
    %891 = arith.addf %888, %890 : vector<16x2xf32>
    %892 = vector.broadcast %17 : f32 to vector<16x2xf32>
    %893 = arith.mulf %892, %868 : vector<16x2xf32>
    %894 = arith.addf %891, %893 : vector<16x2xf32>
    %c8_195 = arith.constant 8 : index
    %c0_196 = arith.constant 0 : index
    %c0_197 = arith.constant 0 : index
    %895 = vector.load %arg4[%c8_195, %c0_196, %c0_197] : memref<16x16x2xf32, #tpu.memory_space<vmem>>, vector<1x16x2xf32>
    %896 = vector.shape_cast %895 : vector<1x16x2xf32> to vector<16x2xf32>
    %897 = vector.shape_cast %894 : vector<16x2xf32> to vector<1x16x2xf32>
    tpu.vector_store %arg4[%c8_195, %c0_196, %c0_197], %897 {strides = array<i32>} : memref<16x16x2xf32, #tpu.memory_space<vmem>>, vector<1x16x2xf32>,
    %c10_198 = arith.constant 10 : index
    %c0_199 = arith.constant 0 : index
    %c0_200 = arith.constant 0 : index
    %898 = vector.load %arg5[%c10_198, %c0_199, %c0_200] : memref<16x16x2xf32, #tpu.memory_space<vmem>>, vector<1x16x2xf32>
    %899 = vector.shape_cast %898 : vector<1x16x2xf32> to vector<16x2xf32>
    %cst_201 = arith.constant 0.000000e+00 : f32
    %900 = vector.broadcast %cst_201 : f32 to vector<1x2xf32>
    %901 = vector.extract_strided_slice %899 {offsets = [0, 0], sizes = [15, 2], strides = [1, 1]} : vector<16x2xf32> to vector<15x2xf32>
    %902 = tpu.concatenate %900, %901 in 0 : vector<1x2xf32>, vector<15x2xf32> -> vector<16x2xf32>
    %903 = vector.extract_strided_slice %899 {offsets = [1, 0], sizes = [15, 2], strides = [1, 1]} : vector<16x2xf32> to vector<15x2xf32>
    %904 = tpu.concatenate %903, %900 in 0 : vector<15x2xf32>, vector<1x2xf32> -> vector<16x2xf32>
    %905 = vector.broadcast %9 : f32 to vector<16x2xf32>
    %906 = arith.mulf %905, %830 : vector<16x2xf32>
    %907 = vector.broadcast %10 : f32 to vector<16x2xf32>
    %908 = arith.mulf %907, %827 : vector<16x2xf32>
    %909 = arith.addf %906, %908 : vector<16x2xf32>
    %910 = vector.broadcast %11 : f32 to vector<16x2xf32>
    %911 = arith.mulf %910, %832 : vector<16x2xf32>
    %912 = arith.addf %909, %911 : vector<16x2xf32>
    %913 = vector.broadcast %12 : f32 to vector<16x2xf32>
    %914 = arith.mulf %913, %866 : vector<16x2xf32>
    %915 = arith.addf %912, %914 : vector<16x2xf32>
    %916 = vector.broadcast %13 : f32 to vector<16x2xf32>
    %917 = arith.mulf %916, %863 : vector<16x2xf32>
    %918 = arith.addf %915, %917 : vector<16x2xf32>
    %919 = vector.broadcast %14 : f32 to vector<16x2xf32>
    %920 = arith.mulf %919, %868 : vector<16x2xf32>
    %921 = arith.addf %918, %920 : vector<16x2xf32>
    %922 = vector.broadcast %15 : f32 to vector<16x2xf32>
    %923 = arith.mulf %922, %902 : vector<16x2xf32>
    %924 = arith.addf %921, %923 : vector<16x2xf32>
    %925 = vector.broadcast %16 : f32 to vector<16x2xf32>
    %926 = arith.mulf %925, %899 : vector<16x2xf32>
    %927 = arith.addf %924, %926 : vector<16x2xf32>
    %928 = vector.broadcast %17 : f32 to vector<16x2xf32>
    %929 = arith.mulf %928, %904 : vector<16x2xf32>
    %930 = arith.addf %927, %929 : vector<16x2xf32>
    %c9_202 = arith.constant 9 : index
    %c0_203 = arith.constant 0 : index
    %c0_204 = arith.constant 0 : index
    %931 = vector.load %arg4[%c9_202, %c0_203, %c0_204] : memref<16x16x2xf32, #tpu.memory_space<vmem>>, vector<1x16x2xf32>
    %932 = vector.shape_cast %931 : vector<1x16x2xf32> to vector<16x2xf32>
    %933 = vector.shape_cast %930 : vector<16x2xf32> to vector<1x16x2xf32>
    tpu.vector_store %arg4[%c9_202, %c0_203, %c0_204], %933 {strides = array<i32>} : memref<16x16x2xf32, #tpu.memory_space<vmem>>, vector<1x16x2xf32>,
    %c11_205 = arith.constant 11 : index
    %c0_206 = arith.constant 0 : index
    %c0_207 = arith.constant 0 : index
    %934 = vector.load %arg5[%c11_205, %c0_206, %c0_207] : memref<16x16x2xf32, #tpu.memory_space<vmem>>, vector<1x16x2xf32>
    %935 = vector.shape_cast %934 : vector<1x16x2xf32> to vector<16x2xf32>
    %cst_208 = arith.constant 0.000000e+00 : f32
    %936 = vector.broadcast %cst_208 : f32 to vector<1x2xf32>
    %937 = vector.extract_strided_slice %935 {offsets = [0, 0], sizes = [15, 2], strides = [1, 1]} : vector<16x2xf32> to vector<15x2xf32>
    %938 = tpu.concatenate %936, %937 in 0 : vector<1x2xf32>, vector<15x2xf32> -> vector<16x2xf32>
    %939 = vector.extract_strided_slice %935 {offsets = [1, 0], sizes = [15, 2], strides = [1, 1]} : vector<16x2xf32> to vector<15x2xf32>
    %940 = tpu.concatenate %939, %936 in 0 : vector<15x2xf32>, vector<1x2xf32> -> vector<16x2xf32>
    %941 = vector.broadcast %9 : f32 to vector<16x2xf32>
    %942 = arith.mulf %941, %866 : vector<16x2xf32>
    %943 = vector.broadcast %10 : f32 to vector<16x2xf32>
    %944 = arith.mulf %943, %863 : vector<16x2xf32>
    %945 = arith.addf %942, %944 : vector<16x2xf32>
    %946 = vector.broadcast %11 : f32 to vector<16x2xf32>
    %947 = arith.mulf %946, %868 : vector<16x2xf32>
    %948 = arith.addf %945, %947 : vector<16x2xf32>
    %949 = vector.broadcast %12 : f32 to vector<16x2xf32>
    %950 = arith.mulf %949, %902 : vector<16x2xf32>
    %951 = arith.addf %948, %950 : vector<16x2xf32>
    %952 = vector.broadcast %13 : f32 to vector<16x2xf32>
    %953 = arith.mulf %952, %899 : vector<16x2xf32>
    %954 = arith.addf %951, %953 : vector<16x2xf32>
    %955 = vector.broadcast %14 : f32 to vector<16x2xf32>
    %956 = arith.mulf %955, %904 : vector<16x2xf32>
    %957 = arith.addf %954, %956 : vector<16x2xf32>
    %958 = vector.broadcast %15 : f32 to vector<16x2xf32>
    %959 = arith.mulf %958, %938 : vector<16x2xf32>
    %960 = arith.addf %957, %959 : vector<16x2xf32>
    %961 = vector.broadcast %16 : f32 to vector<16x2xf32>
    %962 = arith.mulf %961, %935 : vector<16x2xf32>
    %963 = arith.addf %960, %962 : vector<16x2xf32>
    %964 = vector.broadcast %17 : f32 to vector<16x2xf32>
    %965 = arith.mulf %964, %940 : vector<16x2xf32>
    %966 = arith.addf %963, %965 : vector<16x2xf32>
    %c10_209 = arith.constant 10 : index
    %c0_210 = arith.constant 0 : index
    %c0_211 = arith.constant 0 : index
    %967 = vector.load %arg4[%c10_209, %c0_210, %c0_211] : memref<16x16x2xf32, #tpu.memory_space<vmem>>, vector<1x16x2xf32>
    %968 = vector.shape_cast %967 : vector<1x16x2xf32> to vector<16x2xf32>
    %969 = vector.shape_cast %966 : vector<16x2xf32> to vector<1x16x2xf32>
    tpu.vector_store %arg4[%c10_209, %c0_210, %c0_211], %969 {strides = array<i32>} : memref<16x16x2xf32, #tpu.memory_space<vmem>>, vector<1x16x2xf32>,
    %c12_212 = arith.constant 12 : index
    %c0_213 = arith.constant 0 : index
    %c0_214 = arith.constant 0 : index
    %970 = vector.load %arg5[%c12_212, %c0_213, %c0_214] : memref<16x16x2xf32, #tpu.memory_space<vmem>>, vector<1x16x2xf32>
    %971 = vector.shape_cast %970 : vector<1x16x2xf32> to vector<16x2xf32>
    %cst_215 = arith.constant 0.000000e+00 : f32
    %972 = vector.broadcast %cst_215 : f32 to vector<1x2xf32>
    %973 = vector.extract_strided_slice %971 {offsets = [0, 0], sizes = [15, 2], strides = [1, 1]} : vector<16x2xf32> to vector<15x2xf32>
    %974 = tpu.concatenate %972, %973 in 0 : vector<1x2xf32>, vector<15x2xf32> -> vector<16x2xf32>
    %975 = vector.extract_strided_slice %971 {offsets = [1, 0], sizes = [15, 2], strides = [1, 1]} : vector<16x2xf32> to vector<15x2xf32>
    %976 = tpu.concatenate %975, %972 in 0 : vector<15x2xf32>, vector<1x2xf32> -> vector<16x2xf32>
    %977 = vector.broadcast %9 : f32 to vector<16x2xf32>
    %978 = arith.mulf %977, %902 : vector<16x2xf32>
    %979 = vector.broadcast %10 : f32 to vector<16x2xf32>
    %980 = arith.mulf %979, %899 : vector<16x2xf32>
    %981 = arith.addf %978, %980 : vector<16x2xf32>
    %982 = vector.broadcast %11 : f32 to vector<16x2xf32>
    %983 = arith.mulf %982, %904 : vector<16x2xf32>
    %984 = arith.addf %981, %983 : vector<16x2xf32>
    %985 = vector.broadcast %12 : f32 to vector<16x2xf32>
    %986 = arith.mulf %985, %938 : vector<16x2xf32>
    %987 = arith.addf %984, %986 : vector<16x2xf32>
    %988 = vector.broadcast %13 : f32 to vector<16x2xf32>
    %989 = arith.mulf %988, %935 : vector<16x2xf32>
    %990 = arith.addf %987, %989 : vector<16x2xf32>
    %991 = vector.broadcast %14 : f32 to vector<16x2xf32>
    %992 = arith.mulf %991, %940 : vector<16x2xf32>
    %993 = arith.addf %990, %992 : vector<16x2xf32>
    %994 = vector.broadcast %15 : f32 to vector<16x2xf32>
    %995 = arith.mulf %994, %974 : vector<16x2xf32>
    %996 = arith.addf %993, %995 : vector<16x2xf32>
    %997 = vector.broadcast %16 : f32 to vector<16x2xf32>
    %998 = arith.mulf %997, %971 : vector<16x2xf32>
    %999 = arith.addf %996, %998 : vector<16x2xf32>
    %1000 = vector.broadcast %17 : f32 to vector<16x2xf32>
    %1001 = arith.mulf %1000, %976 : vector<16x2xf32>
    %1002 = arith.addf %999, %1001 : vector<16x2xf32>
    %c11_216 = arith.constant 11 : index
    %c0_217 = arith.constant 0 : index
    %c0_218 = arith.constant 0 : index
    %1003 = vector.load %arg4[%c11_216, %c0_217, %c0_218] : memref<16x16x2xf32, #tpu.memory_space<vmem>>, vector<1x16x2xf32>
    %1004 = vector.shape_cast %1003 : vector<1x16x2xf32> to vector<16x2xf32>
    %1005 = vector.shape_cast %1002 : vector<16x2xf32> to vector<1x16x2xf32>
    tpu.vector_store %arg4[%c11_216, %c0_217, %c0_218], %1005 {strides = array<i32>} : memref<16x16x2xf32, #tpu.memory_space<vmem>>, vector<1x16x2xf32>,
    %c13_219 = arith.constant 13 : index
    %c0_220 = arith.constant 0 : index
    %c0_221 = arith.constant 0 : index
    %1006 = vector.load %arg5[%c13_219, %c0_220, %c0_221] : memref<16x16x2xf32, #tpu.memory_space<vmem>>, vector<1x16x2xf32>
    %1007 = vector.shape_cast %1006 : vector<1x16x2xf32> to vector<16x2xf32>
    %cst_222 = arith.constant 0.000000e+00 : f32
    %1008 = vector.broadcast %cst_222 : f32 to vector<1x2xf32>
    %1009 = vector.extract_strided_slice %1007 {offsets = [0, 0], sizes = [15, 2], strides = [1, 1]} : vector<16x2xf32> to vector<15x2xf32>
    %1010 = tpu.concatenate %1008, %1009 in 0 : vector<1x2xf32>, vector<15x2xf32> -> vector<16x2xf32>
    %1011 = vector.extract_strided_slice %1007 {offsets = [1, 0], sizes = [15, 2], strides = [1, 1]} : vector<16x2xf32> to vector<15x2xf32>
    %1012 = tpu.concatenate %1011, %1008 in 0 : vector<15x2xf32>, vector<1x2xf32> -> vector<16x2xf32>
    %1013 = vector.broadcast %9 : f32 to vector<16x2xf32>
    %1014 = arith.mulf %1013, %938 : vector<16x2xf32>
    %1015 = vector.broadcast %10 : f32 to vector<16x2xf32>
    %1016 = arith.mulf %1015, %935 : vector<16x2xf32>
    %1017 = arith.addf %1014, %1016 : vector<16x2xf32>
    %1018 = vector.broadcast %11 : f32 to vector<16x2xf32>
    %1019 = arith.mulf %1018, %940 : vector<16x2xf32>
    %1020 = arith.addf %1017, %1019 : vector<16x2xf32>
    %1021 = vector.broadcast %12 : f32 to vector<16x2xf32>
    %1022 = arith.mulf %1021, %974 : vector<16x2xf32>
    %1023 = arith.addf %1020, %1022 : vector<16x2xf32>
    %1024 = vector.broadcast %13 : f32 to vector<16x2xf32>
    %1025 = arith.mulf %1024, %971 : vector<16x2xf32>
    %1026 = arith.addf %1023, %1025 : vector<16x2xf32>
    %1027 = vector.broadcast %14 : f32 to vector<16x2xf32>
    %1028 = arith.mulf %1027, %976 : vector<16x2xf32>
    %1029 = arith.addf %1026, %1028 : vector<16x2xf32>
    %1030 = vector.broadcast %15 : f32 to vector<16x2xf32>
    %1031 = arith.mulf %1030, %1010 : vector<16x2xf32>
    %1032 = arith.addf %1029, %1031 : vector<16x2xf32>
    %1033 = vector.broadcast %16 : f32 to vector<16x2xf32>
    %1034 = arith.mulf %1033, %1007 : vector<16x2xf32>
    %1035 = arith.addf %1032, %1034 : vector<16x2xf32>
    %1036 = vector.broadcast %17 : f32 to vector<16x2xf32>
    %1037 = arith.mulf %1036, %1012 : vector<16x2xf32>
    %1038 = arith.addf %1035, %1037 : vector<16x2xf32>
    %c12_223 = arith.constant 12 : index
    %c0_224 = arith.constant 0 : index
    %c0_225 = arith.constant 0 : index
    %1039 = vector.load %arg4[%c12_223, %c0_224, %c0_225] : memref<16x16x2xf32, #tpu.memory_space<vmem>>, vector<1x16x2xf32>
    %1040 = vector.shape_cast %1039 : vector<1x16x2xf32> to vector<16x2xf32>
    %1041 = vector.shape_cast %1038 : vector<16x2xf32> to vector<1x16x2xf32>
    tpu.vector_store %arg4[%c12_223, %c0_224, %c0_225], %1041 {strides = array<i32>} : memref<16x16x2xf32, #tpu.memory_space<vmem>>, vector<1x16x2xf32>,
    %c14_226 = arith.constant 14 : index
    %c0_227 = arith.constant 0 : index
    %c0_228 = arith.constant 0 : index
    %1042 = vector.load %arg5[%c14_226, %c0_227, %c0_228] : memref<16x16x2xf32, #tpu.memory_space<vmem>>, vector<1x16x2xf32>
    %1043 = vector.shape_cast %1042 : vector<1x16x2xf32> to vector<16x2xf32>
    %cst_229 = arith.constant 0.000000e+00 : f32
    %1044 = vector.broadcast %cst_229 : f32 to vector<1x2xf32>
    %1045 = vector.extract_strided_slice %1043 {offsets = [0, 0], sizes = [15, 2], strides = [1, 1]} : vector<16x2xf32> to vector<15x2xf32>
    %1046 = tpu.concatenate %1044, %1045 in 0 : vector<1x2xf32>, vector<15x2xf32> -> vector<16x2xf32>
    %1047 = vector.extract_strided_slice %1043 {offsets = [1, 0], sizes = [15, 2], strides = [1, 1]} : vector<16x2xf32> to vector<15x2xf32>
    %1048 = tpu.concatenate %1047, %1044 in 0 : vector<15x2xf32>, vector<1x2xf32> -> vector<16x2xf32>
    %1049 = vector.broadcast %9 : f32 to vector<16x2xf32>
    %1050 = arith.mulf %1049, %974 : vector<16x2xf32>
    %1051 = vector.broadcast %10 : f32 to vector<16x2xf32>
    %1052 = arith.mulf %1051, %971 : vector<16x2xf32>
    %1053 = arith.addf %1050, %1052 : vector<16x2xf32>
    %1054 = vector.broadcast %11 : f32 to vector<16x2xf32>
    %1055 = arith.mulf %1054, %976 : vector<16x2xf32>
    %1056 = arith.addf %1053, %1055 : vector<16x2xf32>
    %1057 = vector.broadcast %12 : f32 to vector<16x2xf32>
    %1058 = arith.mulf %1057, %1010 : vector<16x2xf32>
    %1059 = arith.addf %1056, %1058 : vector<16x2xf32>
    %1060 = vector.broadcast %13 : f32 to vector<16x2xf32>
    %1061 = arith.mulf %1060, %1007 : vector<16x2xf32>
    %1062 = arith.addf %1059, %1061 : vector<16x2xf32>
    %1063 = vector.broadcast %14 : f32 to vector<16x2xf32>
    %1064 = arith.mulf %1063, %1012 : vector<16x2xf32>
    %1065 = arith.addf %1062, %1064 : vector<16x2xf32>
    %1066 = vector.broadcast %15 : f32 to vector<16x2xf32>
    %1067 = arith.mulf %1066, %1046 : vector<16x2xf32>
    %1068 = arith.addf %1065, %1067 : vector<16x2xf32>
    %1069 = vector.broadcast %16 : f32 to vector<16x2xf32>
    %1070 = arith.mulf %1069, %1043 : vector<16x2xf32>
    %1071 = arith.addf %1068, %1070 : vector<16x2xf32>
    %1072 = vector.broadcast %17 : f32 to vector<16x2xf32>
    %1073 = arith.mulf %1072, %1048 : vector<16x2xf32>
    %1074 = arith.addf %1071, %1073 : vector<16x2xf32>
    %c13_230 = arith.constant 13 : index
    %c0_231 = arith.constant 0 : index
    %c0_232 = arith.constant 0 : index
    %1075 = vector.load %arg4[%c13_230, %c0_231, %c0_232] : memref<16x16x2xf32, #tpu.memory_space<vmem>>, vector<1x16x2xf32>
    %1076 = vector.shape_cast %1075 : vector<1x16x2xf32> to vector<16x2xf32>
    %1077 = vector.shape_cast %1074 : vector<16x2xf32> to vector<1x16x2xf32>
    tpu.vector_store %arg4[%c13_230, %c0_231, %c0_232], %1077 {strides = array<i32>} : memref<16x16x2xf32, #tpu.memory_space<vmem>>, vector<1x16x2xf32>,
    %c15_233 = arith.constant 15 : index
    %c0_234 = arith.constant 0 : index
    %c0_235 = arith.constant 0 : index
    %1078 = vector.load %arg5[%c15_233, %c0_234, %c0_235] : memref<16x16x2xf32, #tpu.memory_space<vmem>>, vector<1x16x2xf32>
    %1079 = vector.shape_cast %1078 : vector<1x16x2xf32> to vector<16x2xf32>
    %cst_236 = arith.constant 0.000000e+00 : f32
    %1080 = vector.broadcast %cst_236 : f32 to vector<1x2xf32>
    %1081 = vector.extract_strided_slice %1079 {offsets = [0, 0], sizes = [15, 2], strides = [1, 1]} : vector<16x2xf32> to vector<15x2xf32>
    %1082 = tpu.concatenate %1080, %1081 in 0 : vector<1x2xf32>, vector<15x2xf32> -> vector<16x2xf32>
    %1083 = vector.extract_strided_slice %1079 {offsets = [1, 0], sizes = [15, 2], strides = [1, 1]} : vector<16x2xf32> to vector<15x2xf32>
    %1084 = tpu.concatenate %1083, %1080 in 0 : vector<15x2xf32>, vector<1x2xf32> -> vector<16x2xf32>
    %1085 = vector.broadcast %9 : f32 to vector<16x2xf32>
    %1086 = arith.mulf %1085, %1010 : vector<16x2xf32>
    %1087 = vector.broadcast %10 : f32 to vector<16x2xf32>
    %1088 = arith.mulf %1087, %1007 : vector<16x2xf32>
    %1089 = arith.addf %1086, %1088 : vector<16x2xf32>
    %1090 = vector.broadcast %11 : f32 to vector<16x2xf32>
    %1091 = arith.mulf %1090, %1012 : vector<16x2xf32>
    %1092 = arith.addf %1089, %1091 : vector<16x2xf32>
    %1093 = vector.broadcast %12 : f32 to vector<16x2xf32>
    %1094 = arith.mulf %1093, %1046 : vector<16x2xf32>
    %1095 = arith.addf %1092, %1094 : vector<16x2xf32>
    %1096 = vector.broadcast %13 : f32 to vector<16x2xf32>
    %1097 = arith.mulf %1096, %1043 : vector<16x2xf32>
    %1098 = arith.addf %1095, %1097 : vector<16x2xf32>
    %1099 = vector.broadcast %14 : f32 to vector<16x2xf32>
    %1100 = arith.mulf %1099, %1048 : vector<16x2xf32>
    %1101 = arith.addf %1098, %1100 : vector<16x2xf32>
    %1102 = vector.broadcast %15 : f32 to vector<16x2xf32>
    %1103 = arith.mulf %1102, %1082 : vector<16x2xf32>
    %1104 = arith.addf %1101, %1103 : vector<16x2xf32>
    %1105 = vector.broadcast %16 : f32 to vector<16x2xf32>
    %1106 = arith.mulf %1105, %1079 : vector<16x2xf32>
    %1107 = arith.addf %1104, %1106 : vector<16x2xf32>
    %1108 = vector.broadcast %17 : f32 to vector<16x2xf32>
    %1109 = arith.mulf %1108, %1084 : vector<16x2xf32>
    %1110 = arith.addf %1107, %1109 : vector<16x2xf32>
    %c14_237 = arith.constant 14 : index
    %c0_238 = arith.constant 0 : index
    %c0_239 = arith.constant 0 : index
    %1111 = vector.load %arg4[%c14_237, %c0_238, %c0_239] : memref<16x16x2xf32, #tpu.memory_space<vmem>>, vector<1x16x2xf32>
    %1112 = vector.shape_cast %1111 : vector<1x16x2xf32> to vector<16x2xf32>
    %1113 = vector.shape_cast %1110 : vector<16x2xf32> to vector<1x16x2xf32>
    tpu.vector_store %arg4[%c14_237, %c0_238, %c0_239], %1113 {strides = array<i32>} : memref<16x16x2xf32, #tpu.memory_space<vmem>>, vector<1x16x2xf32>,
    %1114 = vector.broadcast %9 : f32 to vector<16x2xf32>
    %1115 = arith.mulf %1114, %1046 : vector<16x2xf32>
    %1116 = vector.broadcast %10 : f32 to vector<16x2xf32>
    %1117 = arith.mulf %1116, %1043 : vector<16x2xf32>
    %1118 = arith.addf %1115, %1117 : vector<16x2xf32>
    %1119 = vector.broadcast %11 : f32 to vector<16x2xf32>
    %1120 = arith.mulf %1119, %1048 : vector<16x2xf32>
    %1121 = arith.addf %1118, %1120 : vector<16x2xf32>
    %1122 = vector.broadcast %12 : f32 to vector<16x2xf32>
    %1123 = arith.mulf %1122, %1082 : vector<16x2xf32>
    %1124 = arith.addf %1121, %1123 : vector<16x2xf32>
    %1125 = vector.broadcast %13 : f32 to vector<16x2xf32>
    %1126 = arith.mulf %1125, %1079 : vector<16x2xf32>
    %1127 = arith.addf %1124, %1126 : vector<16x2xf32>
    %1128 = vector.broadcast %14 : f32 to vector<16x2xf32>
    %1129 = arith.mulf %1128, %1084 : vector<16x2xf32>
    %1130 = arith.addf %1127, %1129 : vector<16x2xf32>
    %c15_240 = arith.constant 15 : index
    %c0_241 = arith.constant 0 : index
    %c0_242 = arith.constant 0 : index
    %1131 = vector.load %arg4[%c15_240, %c0_241, %c0_242] : memref<16x16x2xf32, #tpu.memory_space<vmem>>, vector<1x16x2xf32>
    %1132 = vector.shape_cast %1131 : vector<1x16x2xf32> to vector<16x2xf32>
    %1133 = vector.shape_cast %1130 : vector<16x2xf32> to vector<1x16x2xf32>
    tpu.vector_store %arg4[%c15_240, %c0_241, %c0_242], %1133 {strides = array<i32>} : memref<16x16x2xf32, #tpu.memory_space<vmem>>, vector<1x16x2xf32>,
    return
  }
  func.func @transform_0(%arg0: i32) -> (i32, i32, i32) {
    %c0_i32 = arith.constant 0 : i32
    %c0_i32_0 = arith.constant 0 : i32
    %c0_i32_1 = arith.constant 0 : i32
    return %c0_i32, %c0_i32_0, %arg0 : i32, i32, i32
  }
  func.func @transform_1(%arg0: i32) -> (i32, i32) {
    %c0_i32 = arith.constant 0 : i32
    %c0_i32_0 = arith.constant 0 : i32
    %c0_i32_1 = arith.constant 0 : i32
    return %c0_i32, %c0_i32_0 : i32, i32
  }
  func.func @transform_2(%arg0: i32) -> (i32, i32) {
    %c0_i32 = arith.constant 0 : i32
    %c0_i32_0 = arith.constant 0 : i32
    %c0_i32_1 = arith.constant 0 : i32
    return %c0_i32, %c0_i32_0 : i32, i32
  }
  func.func @transform_3(%arg0: i32) -> (i32, i32, i32) {
    %c0_i32 = arith.constant 0 : i32
    %c0_i32_0 = arith.constant 0 : i32
    %c0_i32_1 = arith.constant 0 : i32
    return %c0_i32, %c0_i32_0, %arg0 : i32, i32, i32
  }
}

</mosaic_0001>

<llo_original>
// kernel: basenet_forward.1
$region0: #{basenet_forward.1}
  #allocation0 [shape = 'u32[]', space=smem, size = 0x4, offset = 0x4, fixed_abs, tag = 'smem constant byte address 0x4 - core index']
  #allocation1 [shape = 'u32[144,128]{1,0:T(1,128)}', space=vmem, size = 0x12000, scoped, tag = 'internal scratch']
  #allocation2 [shape = 'f32[16,16,2]{2,1,0:T(8,128)}', space=vmem, size = 0x20000, scoped, tag = 'scratch operand']
  %s0 = inlined_call_operand.vmem [shape: f32[16,16,2], index: 0, kind: input, shape index: {}]
  %s1 = inlined_call_operand.vmem [shape: f32[3,3], index: 1, kind: input, shape index: {}]
  %s2 = inlined_call_operand.vmem [shape: f32[3,3], index: 2, kind: input, shape index: {}]
  %s3 = inlined_call_operand.vmem [shape: f32[16,16,2], index: 3, kind: output, shape index: {}]
  %s4 = sld [smem:[#allocation0]]
  $region30: #{basenet_forward.1} parent=0
    _
  %s6 = ssub.s32 1, %s4
  %s7 = scalar_select 0, %s6, %s4
  $region1: #{basenet_forward.1} parent=0
    #allocation3 [shape = 'u8[2048]{0}', space=smem, size = 0x800, scoped, tag = 'input window, operand 1, single buffered']
    #allocation4 [shape = 's32[1]{0}', space=sflag, size = 0x4, scoped, tag = 'scoped memory for basenet_forward.1']
    #allocation5 [shape = 'u8[2048]{0}', space=smem, size = 0x800, scoped, tag = 'input window, operand 2, single buffered']
    #allocation6 [shape = 's32[1]{0}', space=sflag, size = 0x4, scoped, tag = 'scoped memory for basenet_forward.1']
    %8 = vsyncpa [#allocation4], 0
    %9 = vsyncpa [#allocation6], 0
    // Predicated region
    $region2: #{basenet_forward.1} parent=1 // pred_check
      _
    $region3: #{basenet_forward.1} parent=1 // pred_check_branch
      %11 = sbr.rel (0) target = $region5
    $region4: #{basenet_forward.1} parent=1 // pred_region
      _
    $region5: #{basenet_forward.1} parent=1 // pred_fallthru
      _
    // Predicated region
    $region6: #{basenet_forward.1} parent=1 // pred_check
      _
    $region7: #{basenet_forward.1} parent=1 // pred_check_branch
      %13 = sbr.rel (0) target = $region9
    $region8: #{basenet_forward.1} parent=1 // pred_region
      %s15 = ssub.s32 64, 64
      %16 = vsyncadd [#allocation4], %s15
      %s18 = sshll.u32 %s1, 4
      %s19 = int_to_ptr.vmem [resolvable:$true] %s18
      %21 = dma.vmem_to_smem %s19, 64, [#allocation3], [#allocation4]
    $region9: #{basenet_forward.1} parent=1 // pred_fallthru
      _
    // Predicated region
    $region10: #{basenet_forward.1} parent=1 // pred_check
      _
    $region11: #{basenet_forward.1} parent=1 // pred_check_branch
      %23 = sbr.rel (0) target = $region13
    $region12: #{basenet_forward.1} parent=1 // pred_region
      %s25 = ssub.s32 64, 64
      %26 = vsyncadd [#allocation6], %s25
      %s28 = sshll.u32 %s2, 4
      %s29 = int_to_ptr.vmem [resolvable:$true] %s28
      %31 = dma.vmem_to_smem %s29, 64, [#allocation5], [#allocation6]
    $region13: #{basenet_forward.1} parent=1 // pred_fallthru
      _
    // Predicated region
    $region14: #{basenet_forward.1} parent=1 // pred_check
      _
    $region15: #{basenet_forward.1} parent=1 // pred_check_branch
      %33 = sbr.rel (0) target = $region17
    $region16: #{basenet_forward.1} parent=1 // pred_region
      %34 = dma.done [#allocation4], 64
    $region17: #{basenet_forward.1} parent=1 // pred_fallthru
      _
    // Predicated region
    $region18: #{basenet_forward.1} parent=1 // pred_check
      _
    $region19: #{basenet_forward.1} parent=1 // pred_check_branch
      %36 = sbr.rel (0) target = $region21
    $region20: #{basenet_forward.1} parent=1 // pred_region
      %37 = dma.done [#allocation6], 64
    $region21: #{basenet_forward.1} parent=1 // pred_fallthru
      _
    %38 = sfence
    %s39 = sld [smem:[#allocation3]]
    %s40 = sld [smem:[#allocation3 + $0x1]]
    %s41 = sld [smem:[#allocation3 + $0x2]]
    %s42 = sld [smem:[#allocation3 + $0x80]]
    %s43 = sld [smem:[#allocation3 + $0x81]]
    %s44 = sld [smem:[#allocation3 + $0x82]]
    %s45 = sld [smem:[#allocation3 + $0x100]]
    %s46 = sld [smem:[#allocation3 + $0x101]]
    %s47 = sld [smem:[#allocation3 + $0x102]]
    %s48 = sld [smem:[#allocation5]]
    %s49 = sld [smem:[#allocation5 + $0x1]]
    %s50 = sld [smem:[#allocation5 + $0x2]]
    %s51 = sld [smem:[#allocation5 + $0x80]]
    %s52 = sld [smem:[#allocation5 + $0x81]]
    %s53 = sld [smem:[#allocation5 + $0x82]]
    %s54 = sld [smem:[#allocation5 + $0x100]]
    %s55 = sld [smem:[#allocation5 + $0x101]]
    %s56 = sld [smem:[#allocation5 + $0x102]]
    %v57 = vld [vmem:[%s0] sm:$0xff]
    %v58 = vld [vmem:[%s0 + $0x8] sm:$0xff]
    %vm61 = vcmask 1040384
    %v62 = vrot.slane %v57, 7
    %v63 = vrot.slane %v58, 7
    %v64 = vsel %vm61, %v62, %v63
    %v67 = vsel %vm61, 0.0, %v62
    %vm68 = vcmask 1046528
    %v69 = vrot.slane %v57, 1
    %v70 = vrot.slane %v58, 1
    %v71 = vsel %vm68, %v69, %v70
    %v74 = vsel %vm68, %v70, 0.0
    %s75 = scalar_lea.vmem %s0, 16
    %v76 = vld [vmem:[%s75] sm:$0xff]
    %v77 = vld [vmem:[%s75 + $0x8] sm:$0xff]
    %v80 = vrot.slane %v76, 7
    %v81 = vrot.slane %v77, 7
    %v82 = vsel %vm61, %v80, %v81
    %v85 = vsel %vm61, 0.0, %v80
    %v86 = vrot.slane %v76, 1
    %v87 = vrot.slane %v77, 1
    %v88 = vsel %vm68, %v86, %v87
    %v91 = vsel %vm68, %v87, 0.0
    %v92 = vstv %s42
    %v93 = vmul.f32 %v92, %v67
    %v94 = vmul.f32 %v92, %v64
    %v95 = vstv %s43
    %v96 = vmul.f32 %v95, %v57
    %v97 = vmul.f32 %v95, %v58
    %v98 = vadd.f32 %v93, %v96
    %v99 = vadd.f32 %v94, %v97
    %v100 = vstv %s44
    %v101 = vmul.f32 %v100, %v71
    %v102 = vmul.f32 %v100, %v74
    %v103 = vadd.f32 %v98, %v101
    %v104 = vadd.f32 %v99, %v102
    %v105 = vstv %s45
    %v106 = vmul.f32 %v105, %v85
    %v107 = vmul.f32 %v105, %v82
    %v108 = vadd.f32 %v103, %v106
    %v109 = vadd.f32 %v104, %v107
    %v110 = vstv %s46
    %v111 = vmul.f32 %v110, %v76
    %v112 = vmul.f32 %v110, %v77
    %v113 = vadd.f32 %v108, %v111
    %v114 = vadd.f32 %v109, %v112
    %v115 = vstv %s47
    %v116 = vmul.f32 %v115, %v88
    %v117 = vmul.f32 %v115, %v91
    %v118 = vadd.f32 %v113, %v116
    %v119 = vadd.f32 %v114, %v117
    %vm120 = vcmask 15360
    %121 = vst.msk [vmem:[#allocation2] sm:$0xff] %vm120, %v118
    %122 = vst.msk [vmem:[#allocation2 + $0x8] sm:$0xff] %vm120, %v119
    %s123 = scalar_lea.vmem %s0, 32
    %v124 = vld [vmem:[%s123] sm:$0xff]
    %v125 = vld [vmem:[%s123 + $0x8] sm:$0xff]
    %v128 = vrot.slane %v124, 7
    %v129 = vrot.slane %v125, 7
    %v130 = vsel %vm61, %v128, %v129
    %v133 = vsel %vm61, 0.0, %v128
    %v134 = vrot.slane %v124, 1
    %v135 = vrot.slane %v125, 1
    %v136 = vsel %vm68, %v134, %v135
    %v139 = vsel %vm68, %v135, 0.0
    %v140 = vstv %s39
    %v141 = vmul.f32 %v140, %v67
    %v142 = vmul.f32 %v140, %v64
    %v143 = vstv %s40
    %v144 = vmul.f32 %v143, %v57
    %v145 = vmul.f32 %v143, %v58
    %v146 = vadd.f32 %v141, %v144
    %v147 = vadd.f32 %v142, %v145
    %v148 = vstv %s41
    %v149 = vmul.f32 %v148, %v71
    %v150 = vmul.f32 %v148, %v74
    %v151 = vadd.f32 %v146, %v149
    %v152 = vadd.f32 %v147, %v150
    %v153 = vmul.f32 %v92, %v85
    %v154 = vmul.f32 %v92, %v82
    %v155 = vadd.f32 %v151, %v153
    %v156 = vadd.f32 %v152, %v154
    %v157 = vmul.f32 %v95, %v76
    %v158 = vmul.f32 %v95, %v77
    %v159 = vadd.f32 %v155, %v157
    %v160 = vadd.f32 %v156, %v158
    %v161 = vmul.f32 %v100, %v88
    %v162 = vmul.f32 %v100, %v91
    %v163 = vadd.f32 %v159, %v161
    %v164 = vadd.f32 %v160, %v162
    %v165 = vmul.f32 %v105, %v133
    %v166 = vmul.f32 %v105, %v130
    %v167 = vadd.f32 %v163, %v165
    %v168 = vadd.f32 %v164, %v166
    %v169 = vmul.f32 %v110, %v124
    %v170 = vmul.f32 %v110, %v125
    %v171 = vadd.f32 %v167, %v169
    %v172 = vadd.f32 %v168, %v170
    %v173 = vmul.f32 %v115, %v136
    %v174 = vmul.f32 %v115, %v139
    %v175 = vadd.f32 %v171, %v173
    %v176 = vadd.f32 %v172, %v174
    %s177 = scalar_lea.vmem [#allocation2], 16
    %178 = vst.msk [vmem:[%s177] sm:$0xff] %vm120, %v175
    %179 = vst.msk [vmem:[%s177 + $0x8] sm:$0xff] %vm120, %v176
    %s180 = scalar_lea.vmem %s0, 48
    %v181 = vld [vmem:[%s180] sm:$0xff]
    %v182 = vld [vmem:[%s180 + $0x8] sm:$0xff]
    %v185 = vrot.slane %v181, 7
    %v186 = vrot.slane %v182, 7
    %v187 = vsel %vm61, %v185, %v186
    %v190 = vsel %vm61, 0.0, %v185
    %v191 = vrot.slane %v181, 1
    %v192 = vrot.slane %v182, 1
    %v193 = vsel %vm68, %v191, %v192
    %v196 = vsel %vm68, %v192, 0.0
    %v197 = vmul.f32 %v140, %v85
    %v198 = vmul.f32 %v140, %v82
    %v199 = vmul.f32 %v143, %v76
    %v200 = vmul.f32 %v143, %v77
    %v201 = vadd.f32 %v197, %v199
    %v202 = vadd.f32 %v198, %v200
    %v203 = vmul.f32 %v148, %v88
    %v204 = vmul.f32 %v148, %v91
    %v205 = vadd.f32 %v201, %v203
    %v206 = vadd.f32 %v202, %v204
    %v207 = vmul.f32 %v92, %v133
    %v208 = vmul.f32 %v92, %v130
    %v209 = vadd.f32 %v205, %v207
    %v210 = vadd.f32 %v206, %v208
    %v211 = vmul.f32 %v95, %v124
    %v212 = vmul.f32 %v95, %v125
    %v213 = vadd.f32 %v209, %v211
    %v214 = vadd.f32 %v210, %v212
    %v215 = vmul.f32 %v100, %v136
    %v216 = vmul.f32 %v100, %v139
    %v217 = vadd.f32 %v213, %v215
    %v218 = vadd.f32 %v214, %v216
    %v219 = vmul.f32 %v105, %v190
    %v220 = vmul.f32 %v105, %v187
    %v221 = vadd.f32 %v217, %v219
    %v222 = vadd.f32 %v218, %v220
    %v223 = vmul.f32 %v110, %v181
    %v224 = vmul.f32 %v110, %v182
    %v225 = vadd.f32 %v221, %v223
    %v226 = vadd.f32 %v222, %v224
    %v227 = vmul.f32 %v115, %v193
    %v228 = vmul.f32 %v115, %v196
    %v229 = vadd.f32 %v225, %v227
    %v230 = vadd.f32 %v226, %v228
    %s231 = scalar_lea.vmem [#allocation2], 32
    %232 = vst.msk [vmem:[%s231] sm:$0xff] %vm120, %v229
    %233 = vst.msk [vmem:[%s231 + $0x8] sm:$0xff] %vm120, %v230
    %s234 = scalar_lea.vmem %s0, 64
    %v235 = vld [vmem:[%s234] sm:$0xff]
    %v236 = vld [vmem:[%s234 + $0x8] sm:$0xff]
    %v239 = vrot.slane %v235, 7
    %v240 = vrot.slane %v236, 7
    %v241 = vsel %vm61, %v239, %v240
    %v244 = vsel %vm61, 0.0, %v239
    %v245 = vrot.slane %v235, 1
    %v246 = vrot.slane %v236, 1
    %v247 = vsel %vm68, %v245, %v246
    %v250 = vsel %vm68, %v246, 0.0
    %v251 = vmul.f32 %v140, %v133
    %v252 = vmul.f32 %v140, %v130
    %v253 = vmul.f32 %v143, %v124
    %v254 = vmul.f32 %v143, %v125
    %v255 = vadd.f32 %v251, %v253
    %v256 = vadd.f32 %v252, %v254
    %v257 = vmul.f32 %v148, %v136
    %v258 = vmul.f32 %v148, %v139
    %v259 = vadd.f32 %v255, %v257
    %v260 = vadd.f32 %v256, %v258
    %v261 = vmul.f32 %v92, %v190
    %v262 = vmul.f32 %v92, %v187
    %v263 = vadd.f32 %v259, %v261
    %v264 = vadd.f32 %v260, %v262
    %v265 = vmul.f32 %v95, %v181
    %v266 = vmul.f32 %v95, %v182
    %v267 = vadd.f32 %v263, %v265
    %v268 = vadd.f32 %v264, %v266
    %v269 = vmul.f32 %v100, %v193
    %v270 = vmul.f32 %v100, %v196
    %v271 = vadd.f32 %v267, %v269
    %v272 = vadd.f32 %v268, %v270
    %v273 = vmul.f32 %v105, %v244
    %v274 = vmul.f32 %v105, %v241
    %v275 = vadd.f32 %v271, %v273
    %v276 = vadd.f32 %v272, %v274
    %v277 = vmul.f32 %v110, %v235
    %v278 = vmul.f32 %v110, %v236
    %v279 = vadd.f32 %v275, %v277
    %v280 = vadd.f32 %v276, %v278
    %v281 = vmul.f32 %v115, %v247
    %v282 = vmul.f32 %v115, %v250
    %v283 = vadd.f32 %v279, %v281
    %v284 = vadd.f32 %v280, %v282
    %s285 = scalar_lea.vmem [#allocation2], 48
    %286 = vst.msk [vmem:[%s285] sm:$0xff] %vm120, %v283
    %287 = vst.msk [vmem:[%s285 + $0x8] sm:$0xff] %vm120, %v284
    %s288 = scalar_lea.vmem %s0, 80
    %v289 = vld [vmem:[%s288] sm:$0xff]
    %v290 = vld [vmem:[%s288 + $0x8] sm:$0xff]
    %v293 = vrot.slane %v289, 7
    %v294 = vrot.slane %v290, 7
    %v295 = vsel %vm61, %v293, %v294
    %v298 = vsel %vm61, 0.0, %v293
    %v299 = vrot.slane %v289, 1
    %v300 = vrot.slane %v290, 1
    %v301 = vsel %vm68, %v299, %v300
    %v304 = vsel %vm68, %v300, 0.0
    %v305 = vmul.f32 %v140, %v190
    %v306 = vmul.f32 %v140, %v187
    %v307 = vmul.f32 %v143, %v181
    %v308 = vmul.f32 %v143, %v182
    %v309 = vadd.f32 %v305, %v307
    %v310 = vadd.f32 %v306, %v308
    %v311 = vmul.f32 %v148, %v193
    %v312 = vmul.f32 %v148, %v196
    %v313 = vadd.f32 %v309, %v311
    %v314 = vadd.f32 %v310, %v312
    %v315 = vmul.f32 %v92, %v244
    %v316 = vmul.f32 %v92, %v241
    %v317 = vadd.f32 %v313, %v315
    %v318 = vadd.f32 %v314, %v316
    %v319 = vmul.f32 %v95, %v235
    %v320 = vmul.f32 %v95, %v236
    %v321 = vadd.f32 %v317, %v319
    %v322 = vadd.f32 %v318, %v320
    %v323 = vmul.f32 %v100, %v247
    %v324 = vmul.f32 %v100, %v250
    %v325 = vadd.f32 %v321, %v323
    %v326 = vadd.f32 %v322, %v324
    %v327 = vmul.f32 %v105, %v298
    %v328 = vmul.f32 %v105, %v295
    %v329 = vadd.f32 %v325, %v327
    %v330 = vadd.f32 %v326, %v328
    %v331 = vmul.f32 %v110, %v289
    %v332 = vmul.f32 %v110, %v290
    %v333 = vadd.f32 %v329, %v331
    %v334 = vadd.f32 %v330, %v332
    %v335 = vmul.f32 %v115, %v301
    %v336 = vmul.f32 %v115, %v304
    %v337 = vadd.f32 %v333, %v335
    %v338 = vadd.f32 %v334, %v336
    %s339 = scalar_lea.vmem [#allocation2], 64
    %340 = vst.msk [vmem:[%s339] sm:$0xff] %vm120, %v337
    %341 = vst.msk [vmem:[%s339 + $0x8] sm:$0xff] %vm120, %v338
    %s342 = scalar_lea.vmem %s0, 96
    %v343 = vld [vmem:[%s342] sm:$0xff]
    %v344 = vld [vmem:[%s342 + $0x8] sm:$0xff]
    %v347 = vrot.slane %v343, 7
    %v348 = vrot.slane %v344, 7
    %v349 = vsel %vm61, %v347, %v348
    %v352 = vsel %vm61, 0.0, %v347
    %v353 = vrot.slane %v343, 1
    %v354 = vrot.slane %v344, 1
    %v355 = vsel %vm68, %v353, %v354
    %v358 = vsel %vm68, %v354, 0.0
    %v359 = vmul.f32 %v140, %v244
    %v360 = vmul.f32 %v140, %v241
    %v361 = vmul.f32 %v143, %v235
    %v362 = vmul.f32 %v143, %v236
    %v363 = vadd.f32 %v359, %v361
    %v364 = vadd.f32 %v360, %v362
    %v365 = vmul.f32 %v148, %v247
    %v366 = vmul.f32 %v148, %v250
    %v367 = vadd.f32 %v363, %v365
    %v368 = vadd.f32 %v364, %v366
    %v369 = vmul.f32 %v92, %v298
    %v370 = vmul.f32 %v92, %v295
    %v371 = vadd.f32 %v367, %v369
    %v372 = vadd.f32 %v368, %v370
    %v373 = vmul.f32 %v95, %v289
    %v374 = vmul.f32 %v95, %v290
    %v375 = vadd.f32 %v371, %v373
    %v376 = vadd.f32 %v372, %v374
    %v377 = vmul.f32 %v100, %v301
    %v378 = vmul.f32 %v100, %v304
    %v379 = vadd.f32 %v375, %v377
    %v380 = vadd.f32 %v376, %v378
    %v381 = vmul.f32 %v105, %v352
    %v382 = vmul.f32 %v105, %v349
    %v383 = vadd.f32 %v379, %v381
    %v384 = vadd.f32 %v380, %v382
    %v385 = vmul.f32 %v110, %v343
    %v386 = vmul.f32 %v110, %v344
    %v387 = vadd.f32 %v383, %v385
    %v388 = vadd.f32 %v384, %v386
    %v389 = vmul.f32 %v115, %v355
    %v390 = vmul.f32 %v115, %v358
    %v391 = vadd.f32 %v387, %v389
    %v392 = vadd.f32 %v388, %v390
    %s393 = scalar_lea.vmem [#allocation2], 80
    %394 = vst.msk [vmem:[%s393] sm:$0xff] %vm120, %v391
    %395 = vst.msk [vmem:[%s393 + $0x8] sm:$0xff] %vm120, %v392
    %s396 = scalar_lea.vmem %s0, 112
    %v397 = vld [vmem:[%s396] sm:$0xff]
    %v398 = vld [vmem:[%s396 + $0x8] sm:$0xff]
    %v401 = vrot.slane %v397, 7
    %v402 = vrot.slane %v398, 7
    %v403 = vsel %vm61, %v401, %v402
    %v406 = vsel %vm61, 0.0, %v401
    %v407 = vrot.slane %v397, 1
    %v408 = vrot.slane %v398, 1
    %v409 = vsel %vm68, %v407, %v408
    %v412 = vsel %vm68, %v408, 0.0
    %v413 = vmul.f32 %v140, %v298
    %v414 = vmul.f32 %v140, %v295
    %v415 = vmul.f32 %v143, %v289
    %v416 = vmul.f32 %v143, %v290
    %v417 = vadd.f32 %v413, %v415
    %v418 = vadd.f32 %v414, %v416
    %v419 = vmul.f32 %v148, %v301
    %v420 = vmul.f32 %v148, %v304
    %v421 = vadd.f32 %v417, %v419
    %v422 = vadd.f32 %v418, %v420
    %v423 = vmul.f32 %v92, %v352
    %v424 = vmul.f32 %v92, %v349
    %v425 = vadd.f32 %v421, %v423
    %v426 = vadd.f32 %v422, %v424
    %v427 = vmul.f32 %v95, %v343
    %v428 = vmul.f32 %v95, %v344
    %v429 = vadd.f32 %v425, %v427
    %v430 = vadd.f32 %v426, %v428
    %v431 = vmul.f32 %v100, %v355
    %v432 = vmul.f32 %v100, %v358
    %v433 = vadd.f32 %v429, %v431
    %v434 = vadd.f32 %v430, %v432
    %v435 = vmul.f32 %v105, %v406
    %v436 = vmul.f32 %v105, %v403
    %v437 = vadd.f32 %v433, %v435
    %v438 = vadd.f32 %v434, %v436
    %v439 = vmul.f32 %v110, %v397
    %v440 = vmul.f32 %v110, %v398
    %v441 = vadd.f32 %v437, %v439
    %v442 = vadd.f32 %v438, %v440
    %v443 = vmul.f32 %v115, %v409
    %v444 = vmul.f32 %v115, %v412
    %v445 = vadd.f32 %v441, %v443
    %v446 = vadd.f32 %v442, %v444
    %s447 = scalar_lea.vmem [#allocation2], 96
    %448 = vst.msk [vmem:[%s447] sm:$0xff] %vm120, %v445
    %449 = vst.msk [vmem:[%s447 + $0x8] sm:$0xff] %vm120, %v446
    %s450 = scalar_lea.vmem %s0, 128
    %v451 = vld [vmem:[%s450] sm:$0xff]
    %v452 = vld [vmem:[%s450 + $0x8] sm:$0xff]
    %v455 = vrot.slane %v451, 7
    %v456 = vrot.slane %v452, 7
    %v457 = vsel %vm61, %v455, %v456
    %v460 = vsel %vm61, 0.0, %v455
    %v461 = vrot.slane %v451, 1
    %v462 = vrot.slane %v452, 1
    %v463 = vsel %vm68, %v461, %v462
    %v466 = vsel %vm68, %v462, 0.0
    %v467 = vmul.f32 %v140, %v352
    %v468 = vmul.f32 %v140, %v349
    %v469 = vmul.f32 %v143, %v343
    %v470 = vmul.f32 %v143, %v344
    %v471 = vadd.f32 %v467, %v469
    %v472 = vadd.f32 %v468, %v470
    %v473 = vmul.f32 %v148, %v355
    %v474 = vmul.f32 %v148, %v358
    %v475 = vadd.f32 %v471, %v473
    %v476 = vadd.f32 %v472, %v474
    %v477 = vmul.f32 %v92, %v406
    %v478 = vmul.f32 %v92, %v403
    %v479 = vadd.f32 %v475, %v477
    %v480 = vadd.f32 %v476, %v478
    %v481 = vmul.f32 %v95, %v397
    %v482 = vmul.f32 %v95, %v398
    %v483 = vadd.f32 %v479, %v481
    %v484 = vadd.f32 %v480, %v482
    %v485 = vmul.f32 %v100, %v409
    %v486 = vmul.f32 %v100, %v412
    %v487 = vadd.f32 %v483, %v485
    %v488 = vadd.f32 %v484, %v486
    %v489 = vmul.f32 %v105, %v460
    %v490 = vmul.f32 %v105, %v457
    %v491 = vadd.f32 %v487, %v489
    %v492 = vadd.f32 %v488, %v490
    %v493 = vmul.f32 %v110, %v451
    %v494 = vmul.f32 %v110, %v452
    %v495 = vadd.f32 %v491, %v493
    %v496 = vadd.f32 %v492, %v494
    %v497 = vmul.f32 %v115, %v463
    %v498 = vmul.f32 %v115, %v466
    %v499 = vadd.f32 %v495, %v497
    %v500 = vadd.f32 %v496, %v498
    %s501 = scalar_lea.vmem [#allocation2], 112
    %502 = vst.msk [vmem:[%s501] sm:$0xff] %vm120, %v499
    %503 = vst.msk [vmem:[%s501 + $0x8] sm:$0xff] %vm120, %v500
    %s504 = scalar_lea.vmem %s0, 144
    %v505 = vld [vmem:[%s504] sm:$0xff]
    %v506 = vld [vmem:[%s504 + $0x8] sm:$0xff]
    %v509 = vrot.slane %v505, 7
    %v510 = vrot.slane %v506, 7
    %v511 = vsel %vm61, %v509, %v510
    %v514 = vsel %vm61, 0.0, %v509
    %v515 = vrot.slane %v505, 1
    %v516 = vrot.slane %v506, 1
    %v517 = vsel %vm68, %v515, %v516
    %v520 = vsel %vm68, %v516, 0.0
    %v521 = vmul.f32 %v140, %v406
    %v522 = vmul.f32 %v140, %v403
    %v523 = vmul.f32 %v143, %v397
    %v524 = vmul.f32 %v143, %v398
    %v525 = vadd.f32 %v521, %v523
    %v526 = vadd.f32 %v522, %v524
    %v527 = vmul.f32 %v148, %v409
    %v528 = vmul.f32 %v148, %v412
    %v529 = vadd.f32 %v525, %v527
    %v530 = vadd.f32 %v526, %v528
    %v531 = vmul.f32 %v92, %v460
    %v532 = vmul.f32 %v92, %v457
    %v533 = vadd.f32 %v529, %v531
    %v534 = vadd.f32 %v530, %v532
    %v535 = vmul.f32 %v95, %v451
    %v536 = vmul.f32 %v95, %v452
    %v537 = vadd.f32 %v533, %v535
    %v538 = vadd.f32 %v534, %v536
    %v539 = vmul.f32 %v100, %v463
    %v540 = vmul.f32 %v100, %v466
    %v541 = vadd.f32 %v537, %v539
    %v542 = vadd.f32 %v538, %v540
    %v543 = vmul.f32 %v105, %v514
    %v544 = vmul.f32 %v105, %v511
    %v545 = vadd.f32 %v541, %v543
    %v546 = vadd.f32 %v542, %v544
    %v547 = vmul.f32 %v110, %v505
    %v548 = vmul.f32 %v110, %v506
    %v549 = vadd.f32 %v545, %v547
    %v550 = vadd.f32 %v546, %v548
    %v551 = vmul.f32 %v115, %v517
    %v552 = vmul.f32 %v115, %v520
    %v553 = vadd.f32 %v549, %v551
    %v554 = vadd.f32 %v550, %v552
    %s555 = scalar_lea.vmem [#allocation2], 128
    %556 = vst.msk [vmem:[%s555] sm:$0xff] %vm120, %v553
    %557 = vst.msk [vmem:[%s555 + $0x8] sm:$0xff] %vm120, %v554
    %s558 = scalar_lea.vmem %s0, 160
    %v559 = vld [vmem:[%s558] sm:$0xff]
    %v560 = vld [vmem:[%s558 + $0x8] sm:$0xff]
    %v563 = vrot.slane %v559, 7
    %v564 = vrot.slane %v560, 7
    %v565 = vsel %vm61, %v563, %v564
    %v568 = vsel %vm61, 0.0, %v563
    %v569 = vrot.slane %v559, 1
    %v570 = vrot.slane %v560, 1
    %v571 = vsel %vm68, %v569, %v570
    %v574 = vsel %vm68, %v570, 0.0
    %v575 = vmul.f32 %v140, %v460
    %v576 = vmul.f32 %v140, %v457
    %v577 = vmul.f32 %v143, %v451
    %v578 = vmul.f32 %v143, %v452
    %v579 = vadd.f32 %v575, %v577
    %v580 = vadd.f32 %v576, %v578
    %v581 = vmul.f32 %v148, %v463
    %v582 = vmul.f32 %v148, %v466
    %v583 = vadd.f32 %v579, %v581
    %v584 = vadd.f32 %v580, %v582
    %v585 = vmul.f32 %v92, %v514
    %v586 = vmul.f32 %v92, %v511
    %v587 = vadd.f32 %v583, %v585
    %v588 = vadd.f32 %v584, %v586
    %v589 = vmul.f32 %v95, %v505
    %v590 = vmul.f32 %v95, %v506
    %v591 = vadd.f32 %v587, %v589
    %v592 = vadd.f32 %v588, %v590
    %v593 = vmul.f32 %v100, %v517
    %v594 = vmul.f32 %v100, %v520
    %v595 = vadd.f32 %v591, %v593
    %v596 = vadd.f32 %v592, %v594
    %v597 = vmul.f32 %v105, %v568
    %v598 = vmul.f32 %v105, %v565
    %v599 = vadd.f32 %v595, %v597
    %v600 = vadd.f32 %v596, %v598
    %v601 = vmul.f32 %v110, %v559
    %v602 = vmul.f32 %v110, %v560
    %v603 = vadd.f32 %v599, %v601
    %v604 = vadd.f32 %v600, %v602
    %v605 = vmul.f32 %v115, %v571
    %v606 = vmul.f32 %v115, %v574
    %v607 = vadd.f32 %v603, %v605
    %v608 = vadd.f32 %v604, %v606
    %s609 = scalar_lea.vmem [#allocation2], 144
    %610 = vst.msk [vmem:[%s609] sm:$0xff] %vm120, %v607
    %611 = vst.msk [vmem:[%s609 + $0x8] sm:$0xff] %vm120, %v608
    %s612 = scalar_lea.vmem %s0, 176
    %v613 = vld [vmem:[%s612] sm:$0xff]
    %v614 = vld [vmem:[%s612 + $0x8] sm:$0xff]
    %v617 = vrot.slane %v613, 7
    %v618 = vrot.slane %v614, 7
    %v619 = vsel %vm61, %v617, %v618
    %v622 = vsel %vm61, 0.0, %v617
    %v623 = vrot.slane %v613, 1
    %v624 = vrot.slane %v614, 1
    %v625 = vsel %vm68, %v623, %v624
    %v628 = vsel %vm68, %v624, 0.0
    %v629 = vmul.f32 %v140, %v514
    %v630 = vmul.f32 %v140, %v511
    %v631 = vmul.f32 %v143, %v505
    %v632 = vmul.f32 %v143, %v506
    %v633 = vadd.f32 %v629, %v631
    %v634 = vadd.f32 %v630, %v632
    %v635 = vmul.f32 %v148, %v517
    %v636 = vmul.f32 %v148, %v520
    %v637 = vadd.f32 %v633, %v635
    %v638 = vadd.f32 %v634, %v636
    %v639 = vmul.f32 %v92, %v568
    %v640 = vmul.f32 %v92, %v565
    %v641 = vadd.f32 %v637, %v639
    %v642 = vadd.f32 %v638, %v640
    %v643 = vmul.f32 %v95, %v559
    %v644 = vmul.f32 %v95, %v560
    %v645 = vadd.f32 %v641, %v643
    %v646 = vadd.f32 %v642, %v644
    %v647 = vmul.f32 %v100, %v571
    %v648 = vmul.f32 %v100, %v574
    %v649 = vadd.f32 %v645, %v647
    %v650 = vadd.f32 %v646, %v648
    %v651 = vmul.f32 %v105, %v622
    %v652 = vmul.f32 %v105, %v619
    %v653 = vadd.f32 %v649, %v651
    %v654 = vadd.f32 %v650, %v652
    %v655 = vmul.f32 %v110, %v613
    %v656 = vmul.f32 %v110, %v614
    %v657 = vadd.f32 %v653, %v655
    %v658 = vadd.f32 %v654, %v656
    %v659 = vmul.f32 %v115, %v625
    %v660 = vmul.f32 %v115, %v628
    %v661 = vadd.f32 %v657, %v659
    %v662 = vadd.f32 %v658, %v660
    %s663 = scalar_lea.vmem [#allocation2], 160
    %664 = vst.msk [vmem:[%s663] sm:$0xff] %vm120, %v661
    %665 = vst.msk [vmem:[%s663 + $0x8] sm:$0xff] %vm120, %v662
    %s666 = scalar_lea.vmem %s0, 192
    %v667 = vld [vmem:[%s666] sm:$0xff]
    %v668 = vld [vmem:[%s666 + $0x8] sm:$0xff]
    %v671 = vrot.slane %v667, 7
    %v672 = vrot.slane %v668, 7
    %v673 = vsel %vm61, %v671, %v672
    %v676 = vsel %vm61, 0.0, %v671
    %v677 = vrot.slane %v667, 1
    %v678 = vrot.slane %v668, 1
    %v679 = vsel %vm68, %v677, %v678
    %v682 = vsel %vm68, %v678, 0.0
    %v683 = vmul.f32 %v140, %v568
    %v684 = vmul.f32 %v140, %v565
    %v685 = vmul.f32 %v143, %v559
    %v686 = vmul.f32 %v143, %v560
    %v687 = vadd.f32 %v683, %v685
    %v688 = vadd.f32 %v684, %v686
    %v689 = vmul.f32 %v148, %v571
    %v690 = vmul.f32 %v148, %v574
    %v691 = vadd.f32 %v687, %v689
    %v692 = vadd.f32 %v688, %v690
    %v693 = vmul.f32 %v92, %v622
    %v694 = vmul.f32 %v92, %v619
    %v695 = vadd.f32 %v691, %v693
    %v696 = vadd.f32 %v692, %v694
    %v697 = vmul.f32 %v95, %v613
    %v698 = vmul.f32 %v95, %v614
    %v699 = vadd.f32 %v695, %v697
    %v700 = vadd.f32 %v696, %v698
    %v701 = vmul.f32 %v100, %v625
    %v702 = vmul.f32 %v100, %v628
    %v703 = vadd.f32 %v699, %v701
    %v704 = vadd.f32 %v700, %v702
    %v705 = vmul.f32 %v105, %v676
    %v706 = vmul.f32 %v105, %v673
    %v707 = vadd.f32 %v703, %v705
    %v708 = vadd.f32 %v704, %v706
    %v709 = vmul.f32 %v110, %v667
    %v710 = vmul.f32 %v110, %v668
    %v711 = vadd.f32 %v707, %v709
    %v712 = vadd.f32 %v708, %v710
    %v713 = vmul.f32 %v115, %v679
    %v714 = vmul.f32 %v115, %v682
    %v715 = vadd.f32 %v711, %v713
    %v716 = vadd.f32 %v712, %v714
    %s717 = scalar_lea.vmem [#allocation2], 176
    %718 = vst.msk [vmem:[%s717] sm:$0xff] %vm120, %v715
    %719 = vst.msk [vmem:[%s717 + $0x8] sm:$0xff] %vm120, %v716
    %s720 = scalar_lea.vmem %s0, 208
    %v721 = vld [vmem:[%s720] sm:$0xff]
    %v722 = vld [vmem:[%s720 + $0x8] sm:$0xff]
    %v725 = vrot.slane %v721, 7
    %v726 = vrot.slane %v722, 7
    %v727 = vsel %vm61, %v725, %v726
    %v730 = vsel %vm61, 0.0, %v725
    %v731 = vrot.slane %v721, 1
    %v732 = vrot.slane %v722, 1
    %v733 = vsel %vm68, %v731, %v732
    %v736 = vsel %vm68, %v732, 0.0
    %v737 = vmul.f32 %v140, %v622
    %v738 = vmul.f32 %v140, %v619
    %v739 = vmul.f32 %v143, %v613
    %v740 = vmul.f32 %v143, %v614
    %v741 = vadd.f32 %v737, %v739
    %v742 = vadd.f32 %v738, %v740
    %v743 = vmul.f32 %v148, %v625
    %v744 = vmul.f32 %v148, %v628
    %v745 = vadd.f32 %v741, %v743
    %v746 = vadd.f32 %v742, %v744
    %v747 = vmul.f32 %v92, %v676
    %v748 = vmul.f32 %v92, %v673
    %v749 = vadd.f32 %v745, %v747
    %v750 = vadd.f32 %v746, %v748
    %v751 = vmul.f32 %v95, %v667
    %v752 = vmul.f32 %v95, %v668
    %v753 = vadd.f32 %v749, %v751
    %v754 = vadd.f32 %v750, %v752
    %v755 = vmul.f32 %v100, %v679
    %v756 = vmul.f32 %v100, %v682
    %v757 = vadd.f32 %v753, %v755
    %v758 = vadd.f32 %v754, %v756
    %v759 = vmul.f32 %v105, %v730
    %v760 = vmul.f32 %v105, %v727
    %v761 = vadd.f32 %v757, %v759
    %v762 = vadd.f32 %v758, %v760
    %v763 = vmul.f32 %v110, %v721
    %v764 = vmul.f32 %v110, %v722
    %v765 = vadd.f32 %v761, %v763
    %v766 = vadd.f32 %v762, %v764
    %v767 = vmul.f32 %v115, %v733
    %v768 = vmul.f32 %v115, %v736
    %v769 = vadd.f32 %v765, %v767
    %v770 = vadd.f32 %v766, %v768
    %s771 = scalar_lea.vmem [#allocation2], 192
    %772 = vst.msk [vmem:[%s771] sm:$0xff] %vm120, %v769
    %773 = vst.msk [vmem:[%s771 + $0x8] sm:$0xff] %vm120, %v770
    %s774 = scalar_lea.vmem %s0, 224
    %v775 = vld [vmem:[%s774] sm:$0xff]
    %v776 = vld [vmem:[%s774 + $0x8] sm:$0xff]
    %v779 = vrot.slane %v775, 7
    %v780 = vrot.slane %v776, 7
    %v781 = vsel %vm61, %v779, %v780
    %v784 = vsel %vm61, 0.0, %v779
    %v785 = vrot.slane %v775, 1
    %v786 = vrot.slane %v776, 1
    %v787 = vsel %vm68, %v785, %v786
    %v790 = vsel %vm68, %v786, 0.0
    %v791 = vmul.f32 %v140, %v676
    %v792 = vmul.f32 %v140, %v673
    %v793 = vmul.f32 %v143, %v667
    %v794 = vmul.f32 %v143, %v668
    %v795 = vadd.f32 %v791, %v793
    %v796 = vadd.f32 %v792, %v794
    %v797 = vmul.f32 %v148, %v679
    %v798 = vmul.f32 %v148, %v682
    %v799 = vadd.f32 %v795, %v797
    %v800 = vadd.f32 %v796, %v798
    %v801 = vmul.f32 %v92, %v730
    %v802 = vmul.f32 %v92, %v727
    %v803 = vadd.f32 %v799, %v801
    %v804 = vadd.f32 %v800, %v802
    %v805 = vmul.f32 %v95, %v721
    %v806 = vmul.f32 %v95, %v722
    %v807 = vadd.f32 %v803, %v805
    %v808 = vadd.f32 %v804, %v806
    %v809 = vmul.f32 %v100, %v733
    %v810 = vmul.f32 %v100, %v736
    %v811 = vadd.f32 %v807, %v809
    %v812 = vadd.f32 %v808, %v810
    %v813 = vmul.f32 %v105, %v784
    %v814 = vmul.f32 %v105, %v781
    %v815 = vadd.f32 %v811, %v813
    %v816 = vadd.f32 %v812, %v814
    %v817 = vmul.f32 %v110, %v775
    %v818 = vmul.f32 %v110, %v776
    %v819 = vadd.f32 %v815, %v817
    %v820 = vadd.f32 %v816, %v818
    %v821 = vmul.f32 %v115, %v787
    %v822 = vmul.f32 %v115, %v790
    %v823 = vadd.f32 %v819, %v821
    %v824 = vadd.f32 %v820, %v822
    %s825 = scalar_lea.vmem [#allocation2], 208
    %826 = vst.msk [vmem:[%s825] sm:$0xff] %vm120, %v823
    %827 = vst.msk [vmem:[%s825 + $0x8] sm:$0xff] %vm120, %v824
    %s828 = scalar_lea.vmem %s0, 240
    %v829 = vld [vmem:[%s828] sm:$0xff]
    %v830 = vld [vmem:[%s828 + $0x8] sm:$0xff]
    %v833 = vrot.slane %v829, 7
    %v834 = vrot.slane %v830, 7
    %v835 = vsel %vm61, %v833, %v834
    %v838 = vsel %vm61, 0.0, %v833
    %v839 = vrot.slane %v829, 1
    %v840 = vrot.slane %v830, 1
    %v841 = vsel %vm68, %v839, %v840
    %v844 = vsel %vm68, %v840, 0.0
    %v845 = vmul.f32 %v140, %v730
    %v846 = vmul.f32 %v140, %v727
    %v847 = vmul.f32 %v143, %v721
    %v848 = vmul.f32 %v143, %v722
    %v849 = vadd.f32 %v845, %v847
    %v850 = vadd.f32 %v846, %v848
    %v851 = vmul.f32 %v148, %v733
    %v852 = vmul.f32 %v148, %v736
    %v853 = vadd.f32 %v849, %v851
    %v854 = vadd.f32 %v850, %v852
    %v855 = vmul.f32 %v92, %v784
    %v856 = vmul.f32 %v92, %v781
    %v857 = vadd.f32 %v853, %v855
    %v858 = vadd.f32 %v854, %v856
    %v859 = vmul.f32 %v95, %v775
    %v860 = vmul.f32 %v95, %v776
    %v861 = vadd.f32 %v857, %v859
    %v862 = vadd.f32 %v858, %v860
    %v863 = vmul.f32 %v100, %v787
    %v864 = vmul.f32 %v100, %v790
    %v865 = vadd.f32 %v861, %v863
    %v866 = vadd.f32 %v862, %v864
    %v867 = vmul.f32 %v105, %v838
    %v868 = vmul.f32 %v105, %v835
    %v869 = vadd.f32 %v865, %v867
    %v870 = vadd.f32 %v866, %v868
    %v871 = vmul.f32 %v110, %v829
    %v872 = vmul.f32 %v110, %v830
    %v873 = vadd.f32 %v869, %v871
    %v874 = vadd.f32 %v870, %v872
    %v875 = vmul.f32 %v115, %v841
    %v876 = vmul.f32 %v115, %v844
    %v877 = vadd.f32 %v873, %v875
    %v878 = vadd.f32 %v874, %v876
    %s879 = scalar_lea.vmem [#allocation2], 224
    %880 = vst.msk [vmem:[%s879] sm:$0xff] %vm120, %v877
    %881 = vst.msk [vmem:[%s879 + $0x8] sm:$0xff] %vm120, %v878
    %v882 = vmul.f32 %v140, %v784
    %v883 = vmul.f32 %v140, %v781
    %v884 = vmul.f32 %v143, %v775
    %v885 = vmul.f32 %v143, %v776
    %v886 = vadd.f32 %v882, %v884
    %v887 = vadd.f32 %v883, %v885
    %v888 = vmul.f32 %v148, %v787
    %v889 = vmul.f32 %v148, %v790
    %v890 = vadd.f32 %v886, %v888
    %v891 = vadd.f32 %v887, %v889
    %v892 = vmul.f32 %v92, %v838
    %v893 = vmul.f32 %v92, %v835
    %v894 = vadd.f32 %v890, %v892
    %v895 = vadd.f32 %v891, %v893
    %v896 = vmul.f32 %v95, %v829
    %v897 = vmul.f32 %v95, %v830
    %v898 = vadd.f32 %v894, %v896
    %v899 = vadd.f32 %v895, %v897
    %v900 = vmul.f32 %v100, %v841
    %v901 = vmul.f32 %v100, %v844
    %v902 = vadd.f32 %v898, %v900
    %v903 = vadd.f32 %v899, %v901
    %s904 = scalar_lea.vmem [#allocation2], 240
    %905 = vst.msk [vmem:[%s904] sm:$0xff] %vm120, %v902
    %906 = vst.msk [vmem:[%s904 + $0x8] sm:$0xff] %vm120, %v903
    %v907 = vld [vmem:[#allocation2] sm:$0xff]
    %v908 = vld [vmem:[#allocation2 + $0x8] sm:$0xff]
    %v911 = vrot.slane %v907, 7
    %v912 = vrot.slane %v908, 7
    %v913 = vsel %vm61, %v911, %v912
    %v916 = vsel %vm61, 0.0, %v911
    %v917 = vrot.slane %v907, 1
    %v918 = vrot.slane %v908, 1
    %v919 = vsel %vm68, %v917, %v918
    %v922 = vsel %vm68, %v918, 0.0
    %v923 = vld [vmem:[%s177] sm:$0xff]
    %v924 = vld [vmem:[%s177 + $0x8] sm:$0xff]
    %v927 = vrot.slane %v923, 7
    %v928 = vrot.slane %v924, 7
    %v929 = vsel %vm61, %v927, %v928
    %v932 = vsel %vm61, 0.0, %v927
    %v933 = vrot.slane %v923, 1
    %v934 = vrot.slane %v924, 1
    %v935 = vsel %vm68, %v933, %v934
    %v938 = vsel %vm68, %v934, 0.0
    %v939 = vstv %s51
    %v940 = vmul.f32 %v939, %v916
    %v941 = vmul.f32 %v939, %v913
    %v942 = vstv %s52
    %v943 = vmul.f32 %v942, %v907
    %v944 = vmul.f32 %v942, %v908
    %v945 = vadd.f32 %v940, %v943
    %v946 = vadd.f32 %v941, %v944
    %v947 = vstv %s53
    %v948 = vmul.f32 %v947, %v919
    %v949 = vmul.f32 %v947, %v922
    %v950 = vadd.f32 %v945, %v948
    %v951 = vadd.f32 %v946, %v949
    %v952 = vstv %s54
    %v953 = vmul.f32 %v952, %v932
    %v954 = vmul.f32 %v952, %v929
    %v955 = vadd.f32 %v950, %v953
    %v956 = vadd.f32 %v951, %v954
    %v957 = vstv %s55
    %v958 = vmul.f32 %v957, %v923
    %v959 = vmul.f32 %v957, %v924
    %v960 = vadd.f32 %v955, %v958
    %v961 = vadd.f32 %v956, %v959
    %v962 = vstv %s56
    %v963 = vmul.f32 %v962, %v935
    %v964 = vmul.f32 %v962, %v938
    %v965 = vadd.f32 %v960, %v963
    %v966 = vadd.f32 %v961, %v964
    %967 = vst.msk [vmem:[%s3] sm:$0xff] %vm120, %v965
    %968 = vst.msk [vmem:[%s3 + $0x8] sm:$0xff] %vm120, %v966
    %v969 = vld [vmem:[%s231] sm:$0xff]
    %v970 = vld [vmem:[%s231 + $0x8] sm:$0xff]
    %v973 = vrot.slane %v969, 7
    %v974 = vrot.slane %v970, 7
    %v975 = vsel %vm61, %v973, %v974
    %v978 = vsel %vm61, 0.0, %v973
    %v979 = vrot.slane %v969, 1
    %v980 = vrot.slane %v970, 1
    %v981 = vsel %vm68, %v979, %v980
    %v984 = vsel %vm68, %v980, 0.0
    %v985 = vstv %s48
    %v986 = vmul.f32 %v985, %v916
    %v987 = vmul.f32 %v985, %v913
    %v988 = vstv %s49
    %v989 = vmul.f32 %v988, %v907
    %v990 = vmul.f32 %v988, %v908
    %v991 = vadd.f32 %v986, %v989
    %v992 = vadd.f32 %v987, %v990
    %v993 = vstv %s50
    %v994 = vmul.f32 %v993, %v919
    %v995 = vmul.f32 %v993, %v922
    %v996 = vadd.f32 %v991, %v994
    %v997 = vadd.f32 %v992, %v995
    %v998 = vmul.f32 %v939, %v932
    %v999 = vmul.f32 %v939, %v929
    %v1000 = vadd.f32 %v996, %v998
    %v1001 = vadd.f32 %v997, %v999
    %v1002 = vmul.f32 %v942, %v923
    %v1003 = vmul.f32 %v942, %v924
    %v1004 = vadd.f32 %v1000, %v1002
    %v1005 = vadd.f32 %v1001, %v1003
    %v1006 = vmul.f32 %v947, %v935
    %v1007 = vmul.f32 %v947, %v938
    %v1008 = vadd.f32 %v1004, %v1006
    %v1009 = vadd.f32 %v1005, %v1007
    %v1010 = vmul.f32 %v952, %v978
    %v1011 = vmul.f32 %v952, %v975
    %v1012 = vadd.f32 %v1008, %v1010
    %v1013 = vadd.f32 %v1009, %v1011
    %v1014 = vmul.f32 %v957, %v969
    %v1015 = vmul.f32 %v957, %v970
    %v1016 = vadd.f32 %v1012, %v1014
    %v1017 = vadd.f32 %v1013, %v1015
    %v1018 = vmul.f32 %v962, %v981
    %v1019 = vmul.f32 %v962, %v984
    %v1020 = vadd.f32 %v1016, %v1018
    %v1021 = vadd.f32 %v1017, %v1019
    %s1022 = scalar_lea.vmem %s3, 16
    %1023 = vst.msk [vmem:[%s1022] sm:$0xff] %vm120, %v1020
    %1024 = vst.msk [vmem:[%s1022 + $0x8] sm:$0xff] %vm120, %v1021
    %v1025 = vld [vmem:[%s285] sm:$0xff]
    %v1026 = vld [vmem:[%s285 + $0x8] sm:$0xff]
    %v1029 = vrot.slane %v1025, 7
    %v1030 = vrot.slane %v1026, 7
    %v1031 = vsel %vm61, %v1029, %v1030
    %v1034 = vsel %vm61, 0.0, %v1029
    %v1035 = vrot.slane %v1025, 1
    %v1036 = vrot.slane %v1026, 1
    %v1037 = vsel %vm68, %v1035, %v1036
    %v1040 = vsel %vm68, %v1036, 0.0
    %v1041 = vmul.f32 %v985, %v932
    %v1042 = vmul.f32 %v985, %v929
    %v1043 = vmul.f32 %v988, %v923
    %v1044 = vmul.f32 %v988, %v924
    %v1045 = vadd.f32 %v1041, %v1043
    %v1046 = vadd.f32 %v1042, %v1044
    %v1047 = vmul.f32 %v993, %v935
    %v1048 = vmul.f32 %v993, %v938
    %v1049 = vadd.f32 %v1045, %v1047
    %v1050 = vadd.f32 %v1046, %v1048
    %v1051 = vmul.f32 %v939, %v978
    %v1052 = vmul.f32 %v939, %v975
    %v1053 = vadd.f32 %v1049, %v1051
    %v1054 = vadd.f32 %v1050, %v1052
    %v1055 = vmul.f32 %v942, %v969
    %v1056 = vmul.f32 %v942, %v970
    %v1057 = vadd.f32 %v1053, %v1055
    %v1058 = vadd.f32 %v1054, %v1056
    %v1059 = vmul.f32 %v947, %v981
    %v1060 = vmul.f32 %v947, %v984
    %v1061 = vadd.f32 %v1057, %v1059
    %v1062 = vadd.f32 %v1058, %v1060
    %v1063 = vmul.f32 %v952, %v1034
    %v1064 = vmul.f32 %v952, %v1031
    %v1065 = vadd.f32 %v1061, %v1063
    %v1066 = vadd.f32 %v1062, %v1064
    %v1067 = vmul.f32 %v957, %v1025
    %v1068 = vmul.f32 %v957, %v1026
    %v1069 = vadd.f32 %v1065, %v1067
    %v1070 = vadd.f32 %v1066, %v1068
    %v1071 = vmul.f32 %v962, %v1037
    %v1072 = vmul.f32 %v962, %v1040
    %v1073 = vadd.f32 %v1069, %v1071
    %v1074 = vadd.f32 %v1070, %v1072
    %s1075 = scalar_lea.vmem %s3, 32
    %1076 = vst.msk [vmem:[%s1075] sm:$0xff] %vm120, %v1073
    %1077 = vst.msk [vmem:[%s1075 + $0x8] sm:$0xff] %vm120, %v1074
    %v1078 = vld [vmem:[%s339] sm:$0xff]
    %v1079 = vld [vmem:[%s339 + $0x8] sm:$0xff]
    %v1082 = vrot.slane %v1078, 7
    %v1083 = vrot.slane %v1079, 7
    %v1084 = vsel %vm61, %v1082, %v1083
    %v1087 = vsel %vm61, 0.0, %v1082
    %v1088 = vrot.slane %v1078, 1
    %v1089 = vrot.slane %v1079, 1
    %v1090 = vsel %vm68, %v1088, %v1089
    %v1093 = vsel %vm68, %v1089, 0.0
    %v1094 = vmul.f32 %v985, %v978
    %v1095 = vmul.f32 %v985, %v975
    %v1096 = vmul.f32 %v988, %v969
    %v1097 = vmul.f32 %v988, %v970
    %v1098 = vadd.f32 %v1094, %v1096
    %v1099 = vadd.f32 %v1095, %v1097
    %v1100 = vmul.f32 %v993, %v981
    %v1101 = vmul.f32 %v993, %v984
    %v1102 = vadd.f32 %v1098, %v1100
    %v1103 = vadd.f32 %v1099, %v1101
    %v1104 = vmul.f32 %v939, %v1034
    %v1105 = vmul.f32 %v939, %v1031
    %v1106 = vadd.f32 %v1102, %v1104
    %v1107 = vadd.f32 %v1103, %v1105
    %v1108 = vmul.f32 %v942, %v1025
    %v1109 = vmul.f32 %v942, %v1026
    %v1110 = vadd.f32 %v1106, %v1108
    %v1111 = vadd.f32 %v1107, %v1109
    %v1112 = vmul.f32 %v947, %v1037
    %v1113 = vmul.f32 %v947, %v1040
    %v1114 = vadd.f32 %v1110, %v1112
    %v1115 = vadd.f32 %v1111, %v1113
    %v1116 = vmul.f32 %v952, %v1087
    %v1117 = vmul.f32 %v952, %v1084
    %v1118 = vadd.f32 %v1114, %v1116
    %v1119 = vadd.f32 %v1115, %v1117
    %v1120 = vmul.f32 %v957, %v1078
    %v1121 = vmul.f32 %v957, %v1079
    %v1122 = vadd.f32 %v1118, %v1120
    %v1123 = vadd.f32 %v1119, %v1121
    %v1124 = vmul.f32 %v962, %v1090
    %v1125 = vmul.f32 %v962, %v1093
    %v1126 = vadd.f32 %v1122, %v1124
    %v1127 = vadd.f32 %v1123, %v1125
    %s1128 = scalar_lea.vmem %s3, 48
    %1129 = vst.msk [vmem:[%s1128] sm:$0xff] %vm120, %v1126
    %1130 = vst.msk [vmem:[%s1128 + $0x8] sm:$0xff] %vm120, %v1127
    %v1131 = vld [vmem:[%s393] sm:$0xff]
    %v1132 = vld [vmem:[%s393 + $0x8] sm:$0xff]
    %v1135 = vrot.slane %v1131, 7
    %v1136 = vrot.slane %v1132, 7
    %v1137 = vsel %vm61, %v1135, %v1136
    %v1140 = vsel %vm61, 0.0, %v1135
    %v1141 = vrot.slane %v1131, 1
    %v1142 = vrot.slane %v1132, 1
    %v1143 = vsel %vm68, %v1141, %v1142
    %v1146 = vsel %vm68, %v1142, 0.0
    %v1147 = vmul.f32 %v985, %v1034
    %v1148 = vmul.f32 %v985, %v1031
    %v1149 = vmul.f32 %v988, %v1025
    %v1150 = vmul.f32 %v988, %v1026
    %v1151 = vadd.f32 %v1147, %v1149
    %v1152 = vadd.f32 %v1148, %v1150
    %v1153 = vmul.f32 %v993, %v1037
    %v1154 = vmul.f32 %v993, %v1040
    %v1155 = vadd.f32 %v1151, %v1153
    %v1156 = vadd.f32 %v1152, %v1154
    %v1157 = vmul.f32 %v939, %v1087
    %v1158 = vmul.f32 %v939, %v1084
    %v1159 = vadd.f32 %v1155, %v1157
    %v1160 = vadd.f32 %v1156, %v1158
    %v1161 = vmul.f32 %v942, %v1078
    %v1162 = vmul.f32 %v942, %v1079
    %v1163 = vadd.f32 %v1159, %v1161
    %v1164 = vadd.f32 %v1160, %v1162
    %v1165 = vmul.f32 %v947, %v1090
    %v1166 = vmul.f32 %v947, %v1093
    %v1167 = vadd.f32 %v1163, %v1165
    %v1168 = vadd.f32 %v1164, %v1166
    %v1169 = vmul.f32 %v952, %v1140
    %v1170 = vmul.f32 %v952, %v1137
    %v1171 = vadd.f32 %v1167, %v1169
    %v1172 = vadd.f32 %v1168, %v1170
    %v1173 = vmul.f32 %v957, %v1131
    %v1174 = vmul.f32 %v957, %v1132
    %v1175 = vadd.f32 %v1171, %v1173
    %v1176 = vadd.f32 %v1172, %v1174
    %v1177 = vmul.f32 %v962, %v1143
    %v1178 = vmul.f32 %v962, %v1146
    %v1179 = vadd.f32 %v1175, %v1177
    %v1180 = vadd.f32 %v1176, %v1178
    %s1181 = scalar_lea.vmem %s3, 64
    %1182 = vst.msk [vmem:[%s1181] sm:$0xff] %vm120, %v1179
    %1183 = vst.msk [vmem:[%s1181 + $0x8] sm:$0xff] %vm120, %v1180
    %v1184 = vld [vmem:[%s447] sm:$0xff]
    %v1185 = vld [vmem:[%s447 + $0x8] sm:$0xff]
    %v1188 = vrot.slane %v1184, 7
    %v1189 = vrot.slane %v1185, 7
    %v1190 = vsel %vm61, %v1188, %v1189
    %v1193 = vsel %vm61, 0.0, %v1188
    %v1194 = vrot.slane %v1184, 1
    %v1195 = vrot.slane %v1185, 1
    %v1196 = vsel %vm68, %v1194, %v1195
    %v1199 = vsel %vm68, %v1195, 0.0
    %v1200 = vmul.f32 %v985, %v1087
    %v1201 = vmul.f32 %v985, %v1084
    %v1202 = vmul.f32 %v988, %v1078
    %v1203 = vmul.f32 %v988, %v1079
    %v1204 = vadd.f32 %v1200, %v1202
    %v1205 = vadd.f32 %v1201, %v1203
    %v1206 = vmul.f32 %v993, %v1090
    %v1207 = vmul.f32 %v993, %v1093
    %v1208 = vadd.f32 %v1204, %v1206
    %v1209 = vadd.f32 %v1205, %v1207
    %v1210 = vmul.f32 %v939, %v1140
    %v1211 = vmul.f32 %v939, %v1137
    %v1212 = vadd.f32 %v1208, %v1210
    %v1213 = vadd.f32 %v1209, %v1211
    %v1214 = vmul.f32 %v942, %v1131
    %v1215 = vmul.f32 %v942, %v1132
    %v1216 = vadd.f32 %v1212, %v1214
    %v1217 = vadd.f32 %v1213, %v1215
    %v1218 = vmul.f32 %v947, %v1143
    %v1219 = vmul.f32 %v947, %v1146
    %v1220 = vadd.f32 %v1216, %v1218
    %v1221 = vadd.f32 %v1217, %v1219
    %v1222 = vmul.f32 %v952, %v1193
    %v1223 = vmul.f32 %v952, %v1190
    %v1224 = vadd.f32 %v1220, %v1222
    %v1225 = vadd.f32 %v1221, %v1223
    %v1226 = vmul.f32 %v957, %v1184
    %v1227 = vmul.f32 %v957, %v1185
    %v1228 = vadd.f32 %v1224, %v1226
    %v1229 = vadd.f32 %v1225, %v1227
    %v1230 = vmul.f32 %v962, %v1196
    %v1231 = vmul.f32 %v962, %v1199
    %v1232 = vadd.f32 %v1228, %v1230
    %v1233 = vadd.f32 %v1229, %v1231
    %s1234 = scalar_lea.vmem %s3, 80
    %1235 = vst.msk [vmem:[%s1234] sm:$0xff] %vm120, %v1232
    %1236 = vst.msk [vmem:[%s1234 + $0x8] sm:$0xff] %vm120, %v1233
    %v1237 = vld [vmem:[%s501] sm:$0xff]
    %v1238 = vld [vmem:[%s501 + $0x8] sm:$0xff]
    %v1241 = vrot.slane %v1237, 7
    %v1242 = vrot.slane %v1238, 7
    %v1243 = vsel %vm61, %v1241, %v1242
    %v1246 = vsel %vm61, 0.0, %v1241
    %v1247 = vrot.slane %v1237, 1
    %v1248 = vrot.slane %v1238, 1
    %v1249 = vsel %vm68, %v1247, %v1248
    %v1252 = vsel %vm68, %v1248, 0.0
    %v1253 = vmul.f32 %v985, %v1140
    %v1254 = vmul.f32 %v985, %v1137
    %v1255 = vmul.f32 %v988, %v1131
    %v1256 = vmul.f32 %v988, %v1132
    %v1257 = vadd.f32 %v1253, %v1255
    %v1258 = vadd.f32 %v1254, %v1256
    %v1259 = vmul.f32 %v993, %v1143
    %v1260 = vmul.f32 %v993, %v1146
    %v1261 = vadd.f32 %v1257, %v1259
    %v1262 = vadd.f32 %v1258, %v1260
    %v1263 = vmul.f32 %v939, %v1193
    %v1264 = vmul.f32 %v939, %v1190
    %v1265 = vadd.f32 %v1261, %v1263
    %v1266 = vadd.f32 %v1262, %v1264
    %v1267 = vmul.f32 %v942, %v1184
    %v1268 = vmul.f32 %v942, %v1185
    %v1269 = vadd.f32 %v1265, %v1267
    %v1270 = vadd.f32 %v1266, %v1268
    %v1271 = vmul.f32 %v947, %v1196
    %v1272 = vmul.f32 %v947, %v1199
    %v1273 = vadd.f32 %v1269, %v1271
    %v1274 = vadd.f32 %v1270, %v1272
    %v1275 = vmul.f32 %v952, %v1246
    %v1276 = vmul.f32 %v952, %v1243
    %v1277 = vadd.f32 %v1273, %v1275
    %v1278 = vadd.f32 %v1274, %v1276
    %v1279 = vmul.f32 %v957, %v1237
    %v1280 = vmul.f32 %v957, %v1238
    %v1281 = vadd.f32 %v1277, %v1279
    %v1282 = vadd.f32 %v1278, %v1280
    %v1283 = vmul.f32 %v962, %v1249
    %v1284 = vmul.f32 %v962, %v1252
    %v1285 = vadd.f32 %v1281, %v1283
    %v1286 = vadd.f32 %v1282, %v1284
    %s1287 = scalar_lea.vmem %s3, 96
    %1288 = vst.msk [vmem:[%s1287] sm:$0xff] %vm120, %v1285
    %1289 = vst.msk [vmem:[%s1287 + $0x8] sm:$0xff] %vm120, %v1286
    %v1290 = vld [vmem:[%s555] sm:$0xff]
    %v1291 = vld [vmem:[%s555 + $0x8] sm:$0xff]
    %v1294 = vrot.slane %v1290, 7
    %v1295 = vrot.slane %v1291, 7
    %v1296 = vsel %vm61, %v1294, %v1295
    %v1299 = vsel %vm61, 0.0, %v1294
    %v1300 = vrot.slane %v1290, 1
    %v1301 = vrot.slane %v1291, 1
    %v1302 = vsel %vm68, %v1300, %v1301
    %v1305 = vsel %vm68, %v1301, 0.0
    %v1306 = vmul.f32 %v985, %v1193
    %v1307 = vmul.f32 %v985, %v1190
    %v1308 = vmul.f32 %v988, %v1184
    %v1309 = vmul.f32 %v988, %v1185
    %v1310 = vadd.f32 %v1306, %v1308
    %v1311 = vadd.f32 %v1307, %v1309
    %v1312 = vmul.f32 %v993, %v1196
    %v1313 = vmul.f32 %v993, %v1199
    %v1314 = vadd.f32 %v1310, %v1312
    %v1315 = vadd.f32 %v1311, %v1313
    %v1316 = vmul.f32 %v939, %v1246
    %v1317 = vmul.f32 %v939, %v1243
    %v1318 = vadd.f32 %v1314, %v1316
    %v1319 = vadd.f32 %v1315, %v1317
    %v1320 = vmul.f32 %v942, %v1237
    %v1321 = vmul.f32 %v942, %v1238
    %v1322 = vadd.f32 %v1318, %v1320
    %v1323 = vadd.f32 %v1319, %v1321
    %v1324 = vmul.f32 %v947, %v1249
    %v1325 = vmul.f32 %v947, %v1252
    %v1326 = vadd.f32 %v1322, %v1324
    %v1327 = vadd.f32 %v1323, %v1325
    %v1328 = vmul.f32 %v952, %v1299
    %v1329 = vmul.f32 %v952, %v1296
    %v1330 = vadd.f32 %v1326, %v1328
    %v1331 = vadd.f32 %v1327, %v1329
    %v1332 = vmul.f32 %v957, %v1290
    %v1333 = vmul.f32 %v957, %v1291
    %v1334 = vadd.f32 %v1330, %v1332
    %v1335 = vadd.f32 %v1331, %v1333
    %v1336 = vmul.f32 %v962, %v1302
    %v1337 = vmul.f32 %v962, %v1305
    %v1338 = vadd.f32 %v1334, %v1336
    %v1339 = vadd.f32 %v1335, %v1337
    %s1340 = scalar_lea.vmem %s3, 112
    %1341 = vst.msk [vmem:[%s1340] sm:$0xff] %vm120, %v1338
    %1342 = vst.msk [vmem:[%s1340 + $0x8] sm:$0xff] %vm120, %v1339
    %v1343 = vld [vmem:[%s609] sm:$0xff]
    %v1344 = vld [vmem:[%s609 + $0x8] sm:$0xff]
    %v1347 = vrot.slane %v1343, 7
    %v1348 = vrot.slane %v1344, 7
    %v1349 = vsel %vm61, %v1347, %v1348
    %v1352 = vsel %vm61, 0.0, %v1347
    %v1353 = vrot.slane %v1343, 1
    %v1354 = vrot.slane %v1344, 1
    %v1355 = vsel %vm68, %v1353, %v1354
    %v1358 = vsel %vm68, %v1354, 0.0
    %v1359 = vmul.f32 %v985, %v1246
    %v1360 = vmul.f32 %v985, %v1243
    %v1361 = vmul.f32 %v988, %v1237
    %v1362 = vmul.f32 %v988, %v1238
    %v1363 = vadd.f32 %v1359, %v1361
    %v1364 = vadd.f32 %v1360, %v1362
    %v1365 = vmul.f32 %v993, %v1249
    %v1366 = vmul.f32 %v993, %v1252
    %v1367 = vadd.f32 %v1363, %v1365
    %v1368 = vadd.f32 %v1364, %v1366
    %v1369 = vmul.f32 %v939, %v1299
    %v1370 = vmul.f32 %v939, %v1296
    %v1371 = vadd.f32 %v1367, %v1369
    %v1372 = vadd.f32 %v1368, %v1370
    %v1373 = vmul.f32 %v942, %v1290
    %v1374 = vmul.f32 %v942, %v1291
    %v1375 = vadd.f32 %v1371, %v1373
    %v1376 = vadd.f32 %v1372, %v1374
    %v1377 = vmul.f32 %v947, %v1302
    %v1378 = vmul.f32 %v947, %v1305
    %v1379 = vadd.f32 %v1375, %v1377
    %v1380 = vadd.f32 %v1376, %v1378
    %v1381 = vmul.f32 %v952, %v1352
    %v1382 = vmul.f32 %v952, %v1349
    %v1383 = vadd.f32 %v1379, %v1381
    %v1384 = vadd.f32 %v1380, %v1382
    %v1385 = vmul.f32 %v957, %v1343
    %v1386 = vmul.f32 %v957, %v1344
    %v1387 = vadd.f32 %v1383, %v1385
    %v1388 = vadd.f32 %v1384, %v1386
    %v1389 = vmul.f32 %v962, %v1355
    %v1390 = vmul.f32 %v962, %v1358
    %v1391 = vadd.f32 %v1387, %v1389
    %v1392 = vadd.f32 %v1388, %v1390
    %s1393 = scalar_lea.vmem %s3, 128
    %1394 = vst.msk [vmem:[%s1393] sm:$0xff] %vm120, %v1391
    %1395 = vst.msk [vmem:[%s1393 + $0x8] sm:$0xff] %vm120, %v1392
    %v1396 = vld [vmem:[%s663] sm:$0xff]
    %v1397 = vld [vmem:[%s663 + $0x8] sm:$0xff]
    %v1400 = vrot.slane %v1396, 7
    %v1401 = vrot.slane %v1397, 7
    %v1402 = vsel %vm61, %v1400, %v1401
    %v1405 = vsel %vm61, 0.0, %v1400
    %v1406 = vrot.slane %v1396, 1
    %v1407 = vrot.slane %v1397, 1
    %v1408 = vsel %vm68, %v1406, %v1407
    %v1411 = vsel %vm68, %v1407, 0.0
    %v1412 = vmul.f32 %v985, %v1299
    %v1413 = vmul.f32 %v985, %v1296
    %v1414 = vmul.f32 %v988, %v1290
    %v1415 = vmul.f32 %v988, %v1291
    %v1416 = vadd.f32 %v1412, %v1414
    %v1417 = vadd.f32 %v1413, %v1415
    %v1418 = vmul.f32 %v993, %v1302
    %v1419 = vmul.f32 %v993, %v1305
    %v1420 = vadd.f32 %v1416, %v1418
    %v1421 = vadd.f32 %v1417, %v1419
    %v1422 = vmul.f32 %v939, %v1352
    %v1423 = vmul.f32 %v939, %v1349
    %v1424 = vadd.f32 %v1420, %v1422
    %v1425 = vadd.f32 %v1421, %v1423
    %v1426 = vmul.f32 %v942, %v1343
    %v1427 = vmul.f32 %v942, %v1344
    %v1428 = vadd.f32 %v1424, %v1426
    %v1429 = vadd.f32 %v1425, %v1427
    %v1430 = vmul.f32 %v947, %v1355
    %v1431 = vmul.f32 %v947, %v1358
    %v1432 = vadd.f32 %v1428, %v1430
    %v1433 = vadd.f32 %v1429, %v1431
    %v1434 = vmul.f32 %v952, %v1405
    %v1435 = vmul.f32 %v952, %v1402
    %v1436 = vadd.f32 %v1432, %v1434
    %v1437 = vadd.f32 %v1433, %v1435
    %v1438 = vmul.f32 %v957, %v1396
    %v1439 = vmul.f32 %v957, %v1397
    %v1440 = vadd.f32 %v1436, %v1438
    %v1441 = vadd.f32 %v1437, %v1439
    %v1442 = vmul.f32 %v962, %v1408
    %v1443 = vmul.f32 %v962, %v1411
    %v1444 = vadd.f32 %v1440, %v1442
    %v1445 = vadd.f32 %v1441, %v1443
    %s1446 = scalar_lea.vmem %s3, 144
    %1447 = vst.msk [vmem:[%s1446] sm:$0xff] %vm120, %v1444
    %1448 = vst.msk [vmem:[%s1446 + $0x8] sm:$0xff] %vm120, %v1445
    %v1449 = vld [vmem:[%s717] sm:$0xff]
    %v1450 = vld [vmem:[%s717 + $0x8] sm:$0xff]
    %v1453 = vrot.slane %v1449, 7
    %v1454 = vrot.slane %v1450, 7
    %v1455 = vsel %vm61, %v1453, %v1454
    %v1458 = vsel %vm61, 0.0, %v1453
    %v1459 = vrot.slane %v1449, 1
    %v1460 = vrot.slane %v1450, 1
    %v1461 = vsel %vm68, %v1459, %v1460
    %v1464 = vsel %vm68, %v1460, 0.0
    %v1465 = vmul.f32 %v985, %v1352
    %v1466 = vmul.f32 %v985, %v1349
    %v1467 = vmul.f32 %v988, %v1343
    %v1468 = vmul.f32 %v988, %v1344
    %v1469 = vadd.f32 %v1465, %v1467
    %v1470 = vadd.f32 %v1466, %v1468
    %v1471 = vmul.f32 %v993, %v1355
    %v1472 = vmul.f32 %v993, %v1358
    %v1473 = vadd.f32 %v1469, %v1471
    %v1474 = vadd.f32 %v1470, %v1472
    %v1475 = vmul.f32 %v939, %v1405
    %v1476 = vmul.f32 %v939, %v1402
    %v1477 = vadd.f32 %v1473, %v1475
    %v1478 = vadd.f32 %v1474, %v1476
    %v1479 = vmul.f32 %v942, %v1396
    %v1480 = vmul.f32 %v942, %v1397
    %v1481 = vadd.f32 %v1477, %v1479
    %v1482 = vadd.f32 %v1478, %v1480
    %v1483 = vmul.f32 %v947, %v1408
    %v1484 = vmul.f32 %v947, %v1411
    %v1485 = vadd.f32 %v1481, %v1483
    %v1486 = vadd.f32 %v1482, %v1484
    %v1487 = vmul.f32 %v952, %v1458
    %v1488 = vmul.f32 %v952, %v1455
    %v1489 = vadd.f32 %v1485, %v1487
    %v1490 = vadd.f32 %v1486, %v1488
    %v1491 = vmul.f32 %v957, %v1449
    %v1492 = vmul.f32 %v957, %v1450
    %v1493 = vadd.f32 %v1489, %v1491
    %v1494 = vadd.f32 %v1490, %v1492
    %v1495 = vmul.f32 %v962, %v1461
    %v1496 = vmul.f32 %v962, %v1464
    %v1497 = vadd.f32 %v1493, %v1495
    %v1498 = vadd.f32 %v1494, %v1496
    %s1499 = scalar_lea.vmem %s3, 160
    %1500 = vst.msk [vmem:[%s1499] sm:$0xff] %vm120, %v1497
    %1501 = vst.msk [vmem:[%s1499 + $0x8] sm:$0xff] %vm120, %v1498
    %v1502 = vld [vmem:[%s771] sm:$0xff]
    %v1503 = vld [vmem:[%s771 + $0x8] sm:$0xff]
    %v1506 = vrot.slane %v1502, 7
    %v1507 = vrot.slane %v1503, 7
    %v1508 = vsel %vm61, %v1506, %v1507
    %v1511 = vsel %vm61, 0.0, %v1506
    %v1512 = vrot.slane %v1502, 1
    %v1513 = vrot.slane %v1503, 1
    %v1514 = vsel %vm68, %v1512, %v1513
    %v1517 = vsel %vm68, %v1513, 0.0
    %v1518 = vmul.f32 %v985, %v1405
    %v1519 = vmul.f32 %v985, %v1402
    %v1520 = vmul.f32 %v988, %v1396
    %v1521 = vmul.f32 %v988, %v1397
    %v1522 = vadd.f32 %v1518, %v1520
    %v1523 = vadd.f32 %v1519, %v1521
    %v1524 = vmul.f32 %v993, %v1408
    %v1525 = vmul.f32 %v993, %v1411
    %v1526 = vadd.f32 %v1522, %v1524
    %v1527 = vadd.f32 %v1523, %v1525
    %v1528 = vmul.f32 %v939, %v1458
    %v1529 = vmul.f32 %v939, %v1455
    %v1530 = vadd.f32 %v1526, %v1528
    %v1531 = vadd.f32 %v1527, %v1529
    %v1532 = vmul.f32 %v942, %v1449
    %v1533 = vmul.f32 %v942, %v1450
    %v1534 = vadd.f32 %v1530, %v1532
    %v1535 = vadd.f32 %v1531, %v1533
    %v1536 = vmul.f32 %v947, %v1461
    %v1537 = vmul.f32 %v947, %v1464
    %v1538 = vadd.f32 %v1534, %v1536
    %v1539 = vadd.f32 %v1535, %v1537
    %v1540 = vmul.f32 %v952, %v1511
    %v1541 = vmul.f32 %v952, %v1508
    %v1542 = vadd.f32 %v1538, %v1540
    %v1543 = vadd.f32 %v1539, %v1541
    %v1544 = vmul.f32 %v957, %v1502
    %v1545 = vmul.f32 %v957, %v1503
    %v1546 = vadd.f32 %v1542, %v1544
    %v1547 = vadd.f32 %v1543, %v1545
    %v1548 = vmul.f32 %v962, %v1514
    %v1549 = vmul.f32 %v962, %v1517
    %v1550 = vadd.f32 %v1546, %v1548
    %v1551 = vadd.f32 %v1547, %v1549
    %s1552 = scalar_lea.vmem %s3, 176
    %1553 = vst.msk [vmem:[%s1552] sm:$0xff] %vm120, %v1550
    %1554 = vst.msk [vmem:[%s1552 + $0x8] sm:$0xff] %vm120, %v1551
    %v1555 = vld [vmem:[%s825] sm:$0xff]
    %v1556 = vld [vmem:[%s825 + $0x8] sm:$0xff]
    %v1559 = vrot.slane %v1555, 7
    %v1560 = vrot.slane %v1556, 7
    %v1561 = vsel %vm61, %v1559, %v1560
    %v1564 = vsel %vm61, 0.0, %v1559
    %v1565 = vrot.slane %v1555, 1
    %v1566 = vrot.slane %v1556, 1
    %v1567 = vsel %vm68, %v1565, %v1566
    %v1570 = vsel %vm68, %v1566, 0.0
    %v1571 = vmul.f32 %v985, %v1458
    %v1572 = vmul.f32 %v985, %v1455
    %v1573 = vmul.f32 %v988, %v1449
    %v1574 = vmul.f32 %v988, %v1450
    %v1575 = vadd.f32 %v1571, %v1573
    %v1576 = vadd.f32 %v1572, %v1574
    %v1577 = vmul.f32 %v993, %v1461
    %v1578 = vmul.f32 %v993, %v1464
    %v1579 = vadd.f32 %v1575, %v1577
    %v1580 = vadd.f32 %v1576, %v1578
    %v1581 = vmul.f32 %v939, %v1511
    %v1582 = vmul.f32 %v939, %v1508
    %v1583 = vadd.f32 %v1579, %v1581
    %v1584 = vadd.f32 %v1580, %v1582
    %v1585 = vmul.f32 %v942, %v1502
    %v1586 = vmul.f32 %v942, %v1503
    %v1587 = vadd.f32 %v1583, %v1585
    %v1588 = vadd.f32 %v1584, %v1586
    %v1589 = vmul.f32 %v947, %v1514
    %v1590 = vmul.f32 %v947, %v1517
    %v1591 = vadd.f32 %v1587, %v1589
    %v1592 = vadd.f32 %v1588, %v1590
    %v1593 = vmul.f32 %v952, %v1564
    %v1594 = vmul.f32 %v952, %v1561
    %v1595 = vadd.f32 %v1591, %v1593
    %v1596 = vadd.f32 %v1592, %v1594
    %v1597 = vmul.f32 %v957, %v1555
    %v1598 = vmul.f32 %v957, %v1556
    %v1599 = vadd.f32 %v1595, %v1597
    %v1600 = vadd.f32 %v1596, %v1598
    %v1601 = vmul.f32 %v962, %v1567
    %v1602 = vmul.f32 %v962, %v1570
    %v1603 = vadd.f32 %v1599, %v1601
    %v1604 = vadd.f32 %v1600, %v1602
    %s1605 = scalar_lea.vmem %s3, 192
    %1606 = vst.msk [vmem:[%s1605] sm:$0xff] %vm120, %v1603
    %1607 = vst.msk [vmem:[%s1605 + $0x8] sm:$0xff] %vm120, %v1604
    %v1608 = vld [vmem:[%s879] sm:$0xff]
    %v1609 = vld [vmem:[%s879 + $0x8] sm:$0xff]
    %v1612 = vrot.slane %v1608, 7
    %v1613 = vrot.slane %v1609, 7
    %v1614 = vsel %vm61, %v1612, %v1613
    %v1617 = vsel %vm61, 0.0, %v1612
    %v1618 = vrot.slane %v1608, 1
    %v1619 = vrot.slane %v1609, 1
    %v1620 = vsel %vm68, %v1618, %v1619
    %v1623 = vsel %vm68, %v1619, 0.0
    %v1624 = vmul.f32 %v985, %v1511
    %v1625 = vmul.f32 %v985, %v1508
    %v1626 = vmul.f32 %v988, %v1502
    %v1627 = vmul.f32 %v988, %v1503
    %v1628 = vadd.f32 %v1624, %v1626
    %v1629 = vadd.f32 %v1625, %v1627
    %v1630 = vmul.f32 %v993, %v1514
    %v1631 = vmul.f32 %v993, %v1517
    %v1632 = vadd.f32 %v1628, %v1630
    %v1633 = vadd.f32 %v1629, %v1631
    %v1634 = vmul.f32 %v939, %v1564
    %v1635 = vmul.f32 %v939, %v1561
    %v1636 = vadd.f32 %v1632, %v1634
    %v1637 = vadd.f32 %v1633, %v1635
    %v1638 = vmul.f32 %v942, %v1555
    %v1639 = vmul.f32 %v942, %v1556
    %v1640 = vadd.f32 %v1636, %v1638
    %v1641 = vadd.f32 %v1637, %v1639
    %v1642 = vmul.f32 %v947, %v1567
    %v1643 = vmul.f32 %v947, %v1570
    %v1644 = vadd.f32 %v1640, %v1642
    %v1645 = vadd.f32 %v1641, %v1643
    %v1646 = vmul.f32 %v952, %v1617
    %v1647 = vmul.f32 %v952, %v1614
    %v1648 = vadd.f32 %v1644, %v1646
    %v1649 = vadd.f32 %v1645, %v1647
    %v1650 = vmul.f32 %v957, %v1608
    %v1651 = vmul.f32 %v957, %v1609
    %v1652 = vadd.f32 %v1648, %v1650
    %v1653 = vadd.f32 %v1649, %v1651
    %v1654 = vmul.f32 %v962, %v1620
    %v1655 = vmul.f32 %v962, %v1623
    %v1656 = vadd.f32 %v1652, %v1654
    %v1657 = vadd.f32 %v1653, %v1655
    %s1658 = scalar_lea.vmem %s3, 208
    %1659 = vst.msk [vmem:[%s1658] sm:$0xff] %vm120, %v1656
    %1660 = vst.msk [vmem:[%s1658 + $0x8] sm:$0xff] %vm120, %v1657
    %v1661 = vld [vmem:[%s904] sm:$0xff]
    %v1662 = vld [vmem:[%s904 + $0x8] sm:$0xff]
    %v1665 = vrot.slane %v1661, 7
    %v1666 = vrot.slane %v1662, 7
    %v1667 = vsel %vm61, %v1665, %v1666
    %v1670 = vsel %vm61, 0.0, %v1665
    %v1671 = vrot.slane %v1661, 1
    %v1672 = vrot.slane %v1662, 1
    %v1673 = vsel %vm68, %v1671, %v1672
    %v1676 = vsel %vm68, %v1672, 0.0
    %v1677 = vmul.f32 %v985, %v1564
    %v1678 = vmul.f32 %v985, %v1561
    %v1679 = vmul.f32 %v988, %v1555
    %v1680 = vmul.f32 %v988, %v1556
    %v1681 = vadd.f32 %v1677, %v1679
    %v1682 = vadd.f32 %v1678, %v1680
    %v1683 = vmul.f32 %v993, %v1567
    %v1684 = vmul.f32 %v993, %v1570
    %v1685 = vadd.f32 %v1681, %v1683
    %v1686 = vadd.f32 %v1682, %v1684
    %v1687 = vmul.f32 %v939, %v1617
    %v1688 = vmul.f32 %v939, %v1614
    %v1689 = vadd.f32 %v1685, %v1687
    %v1690 = vadd.f32 %v1686, %v1688
    %v1691 = vmul.f32 %v942, %v1608
    %v1692 = vmul.f32 %v942, %v1609
    %v1693 = vadd.f32 %v1689, %v1691
    %v1694 = vadd.f32 %v1690, %v1692
    %v1695 = vmul.f32 %v947, %v1620
    %v1696 = vmul.f32 %v947, %v1623
    %v1697 = vadd.f32 %v1693, %v1695
    %v1698 = vadd.f32 %v1694, %v1696
    %v1699 = vmul.f32 %v952, %v1670
    %v1700 = vmul.f32 %v952, %v1667
    %v1701 = vadd.f32 %v1697, %v1699
    %v1702 = vadd.f32 %v1698, %v1700
    %v1703 = vmul.f32 %v957, %v1661
    %v1704 = vmul.f32 %v957, %v1662
    %v1705 = vadd.f32 %v1701, %v1703
    %v1706 = vadd.f32 %v1702, %v1704
    %v1707 = vmul.f32 %v962, %v1673
    %v1708 = vmul.f32 %v962, %v1676
    %v1709 = vadd.f32 %v1705, %v1707
    %v1710 = vadd.f32 %v1706, %v1708
    %s1711 = scalar_lea.vmem %s3, 224
    %1712 = vst.msk [vmem:[%s1711] sm:$0xff] %vm120, %v1709
    %1713 = vst.msk [vmem:[%s1711 + $0x8] sm:$0xff] %vm120, %v1710
    %v1714 = vmul.f32 %v985, %v1617
    %v1715 = vmul.f32 %v985, %v1614
    %v1716 = vmul.f32 %v988, %v1608
    %v1717 = vmul.f32 %v988, %v1609
    %v1718 = vadd.f32 %v1714, %v1716
    %v1719 = vadd.f32 %v1715, %v1717
    %v1720 = vmul.f32 %v993, %v1620
    %v1721 = vmul.f32 %v993, %v1623
    %v1722 = vadd.f32 %v1718, %v1720
    %v1723 = vadd.f32 %v1719, %v1721
    %v1724 = vmul.f32 %v939, %v1670
    %v1725 = vmul.f32 %v939, %v1667
    %v1726 = vadd.f32 %v1722, %v1724
    %v1727 = vadd.f32 %v1723, %v1725
    %v1728 = vmul.f32 %v942, %v1661
    %v1729 = vmul.f32 %v942, %v1662
    %v1730 = vadd.f32 %v1726, %v1728
    %v1731 = vadd.f32 %v1727, %v1729
    %v1732 = vmul.f32 %v947, %v1673
    %v1733 = vmul.f32 %v947, %v1676
    %v1734 = vadd.f32 %v1730, %v1732
    %v1735 = vadd.f32 %v1731, %v1733
    %s1736 = scalar_lea.vmem %s3, 240
    %1737 = vst.msk [vmem:[%s1736] sm:$0xff] %vm120, %v1734
    %1738 = vst.msk [vmem:[%s1736 + $0x8] sm:$0xff] %vm120, %v1735
    // Predicated region
    $region22: #{basenet_forward.1} parent=1 // pred_check
      _
    $region23: #{basenet_forward.1} parent=1 // pred_check_branch
      %1740 = sbr.rel (0) target = $region25
    $region24: #{basenet_forward.1} parent=1 // pred_region
      _
    $region25: #{basenet_forward.1} parent=1 // pred_fallthru
      _
    // Predicated region
    $region26: #{basenet_forward.1} parent=1 // pred_check
      _
    $region27: #{basenet_forward.1} parent=1 // pred_check_branch
      %1742 = sbr.rel (0) target = $region29
    $region28: #{basenet_forward.1} parent=1 // pred_region
      _
    $region29: #{basenet_forward.1} parent=1 // pred_fallthru
      _
    %1743 = vsyncpa [#allocation4], 1
    %1744 = vsyncpa [#allocation6], 1

</llo_original>
